<compile_context>
chip_gen: v7x
topology: tpu7x:2x2x1
jax: 0.10.0
libtpu: 0.0.40
codegen_flags: <defaults>
</compile_context>

<pallas_src>
import functools

import jax
import jax.numpy as jnp
from jax import lax
from jax.experimental import pallas as pl
from jax.experimental.pallas import tpu as pltpu

F32 = jnp.float32
BF16 = jnp.bfloat16
LANE_PAD = 128          # lane-dense width of the final output slab


def _round_up(x, m):
    return ((x + m - 1) // m) * m


# ----------------------------- in-kernel helpers ------------------------------

def _elu(x, alpha):
    return jnp.where(x > 0, x, alpha * (jnp.exp(x) - 1.0))


def _silu(x):
    return x * jax.nn.sigmoid(x)


def _batchnorm(x, gamma, beta, eps=1e-5):
    # Two-pass statistics (mean, then centered second moment): avoids the
    # catastrophic cancellation of E[x^2]-E[x]^2.  Training-mode BN.
    inv_n = 1.0 / x.shape[0]
    mean = jnp.sum(x, axis=0, keepdims=True) * inv_n
    d = x - mean
    var = jnp.sum(d * d, axis=0, keepdims=True) * inv_n
    return d * lax.rsqrt(var + eps) * gamma + beta


def _mm(a_bf16, b_bf16):
    # bf16 x bf16 -> f32 accumulation on the MXU (operands pre-cast by callers).
    return jnp.dot(a_bf16, b_bf16, preferred_element_type=F32)


# ------------------------------ fused forward kernel --------------------------

def egnn_fused_kernel(
        # data
        h_ref, coord_ref, g0_ref,
        # graph structure (index vectors + precomputed statics)
        rowc_ref, rowr_ref, colc_ref, colr_ref, batchc_ref, batchr_ref,
        invdeg_ref, invcnt_ref,
        # stacked Mastered_EGCL params [L, ...] (weights bf16, biases/BN f32)
        we1_ref, be1_ref, we2_ref, be2_ref,
        wn1_ref, bn1_ref, wn2_ref, bn2_ref,
        wc1_ref, bc1_ref, wc2_ref, egamma_ref, ebeta_ref, wm_ref, bm_ref,
        # stacked GIN params [L, ...]
        gw1_ref, gb1_ref, ggamma_ref, gbeta_ref, gw2_ref, gb2_ref,
        # classifier params (fused first linear, lane-padded last linear)
        cw1_ref, cb1_ref, cgamma_ref, cbeta_ref, cw2_ref, cb2_ref,
        # SMEM scalars: MasterNode Conv1d(2->1,k=1) [w_max, w_mean, bias] / layer
        conv_ref,
        # output
        out_ref,
        # VMEM scratch
        x_ref, et_ref, em_ref, nm_ref, cls_ref,
        *, num_equiv, num_gin, residual_flags):
    N, H = h_ref.shape
    E = rowc_ref.shape[0]
    G = invcnt_ref.shape[0]
    NGF = g0_ref.shape[1]

    inv_deg = invdeg_ref[...]                 # [N, 1] f32
    inv_cnt = invcnt_ref[...]                 # [G, 1] f32
    batch_col = batchc_ref[...]               # [N, 1] int32

    def onehot(eq):
        return jnp.where(eq, 1.0, 0.0).astype(BF16)

    # Gather-orientation one-hots stay resident (needed every layer); the
    # transposed (scatter) orientations are rebuilt lazily right before use so
    # they never stay live across a layer (VMEM residency, review item).
    lane_n = lax.broadcasted_iota(jnp.int32, (E, N), 1)
    sub_n = lax.broadcasted_iota(jnp.int32, (N, E), 0)
    Srow = onehot(lane_n == rowc_ref[...])                                   # [E,N]
    Scol = onehot(lane_n == colc_ref[...])                                   # [E,N]
    Bmat = onehot(lax.broadcasted_iota(jnp.int32, (G, N), 0) == batchr_ref[...])  # [G,N]
    BT = onehot(lax.broadcasted_iota(jnp.int32, (N, G), 1) == batch_col)          # [N,G]
    g_iota = lax.broadcasted_iota(jnp.int32, (G, 1), 0)

    def seg_max(x):
        # Per-graph max pool WITHOUT the [G,N,H] broadcast: fori over graphs,
        # each a masked [N,Hx] reduce accumulated via a one-hot row product.
        def body(g, acc):
            sel = jnp.where(batch_col == g, x, -3.0e38)
            mg = jnp.max(sel, axis=0, keepdims=True)          # [1, Hx]
            row = jnp.where(g_iota == g, 1.0, 0.0)            # [G, 1]
            return acc + row * mg
        return lax.fori_loop(0, G, body, jnp.zeros((G, x.shape[1]), F32))

    # Zero scratches once: pad lanes must stay zero/finite so the zero-padded
    # weight rows never multiply garbage.
    x_ref[...] = jnp.zeros_like(x_ref)
    et_ref[...] = jnp.zeros_like(et_ref)
    em_ref[...] = jnp.zeros_like(em_ref)
    cls_ref[...] = jnp.zeros_like(cls_ref)
    # Persistent node state slab: [ h (H) | coord (3) | 0-pad ].
    x_ref[:, 0:H] = h_ref[...]
    x_ref[:, H:H + 3] = coord_ref[...]

    # ------------------------- Mastered_EGCL stack ----------------------------
    # TODO(synk): convert to lax.fori_loop over the stacked [L,...] weights if
    # num_equiv grows (live-range control); 2 layers unrolled is fine.
    for l in range(num_equiv):
        h = x_ref[:, 0:H]                       # f32
        coord = x_ref[:, H:H + 3]               # f32
        x_bf = x_ref[...].astype(BF16)          # single hoisted cast per layer

        # Fused gather of [h | coord] (one one-hot matmul per endpoint).
        gr = _mm(Srow, x_bf)                    # [E, HC]
        gc = _mm(Scol, x_bf)
        hr, cr = gr[:, 0:H], gr[:, H:H + 3]
        hcol, cc = gc[:, 0:H], gc[:, H:H + 3]
        diff = cr - cc
        radial = jnp.sum(diff * diff, axis=1, keepdims=True)   # [E, 1]

        # Edge MLP on the fused [h_row | h_col | radial] slab (unsplit weight,
        # layer-0 rows zero-padded on the host).
        em_ref[:, 0:H] = hr.astype(BF16)
        em_ref[:, H:2 * H] = hcol.astype(BF16)
        em_ref[:, 2 * H:2 * H + 1] = radial.astype(BF16)
        m = _silu(_mm(em_ref[...], we1_ref[l]) + be1_ref[l])
        edge_feat = _silu(_mm(m.astype(BF16), we2_ref[l]) + be2_ref[l])

        # Coord MLP (coords_agg='mean').
        ef_bf = edge_feat.astype(BF16)
        cm = _silu(_mm(ef_bf, wc1_ref[l]) + bc1_ref[l])
        trans = diff * _mm(cm.astype(BF16), wc2_ref[l])         # [E, 3]

        # Fused scatter-add of [edge_feat | trans] at `row` (one pass).
        et_ref[:, 0:H] = ef_bf
        et_ref[:, H:H + 3] = trans.astype(BF16)
        SrowT = onehot(sub_n == rowr_ref[...])                  # [N,E], short-lived
        sc = _mm(SrowT, et_ref[...])                            # [N, HC]
        agg = sc[:, 0:H]
        coord_new = coord + sc[:, H:H + 3] * inv_deg

        # Node MLP on the fused [h | agg] slab.
        nm_ref[:, 0:H] = h.astype(BF16)
        nm_ref[:, H:2 * H] = agg.astype(BF16)
        nmid = _silu(_mm(nm_ref[...], wn1_ref[l]) + bn1_ref[l])
        h_new = _mm(nmid.astype(BF16), wn2_ref[l]) + bn2_ref[l]
        if residual_flags[l]:
            h_new = h + h_new

        # ELU(1.0) + BatchNorm1d (batch statistics, see TODO).
        h_bn = _batchnorm(_elu(h_new, 1.0), egamma_ref[l], ebeta_ref[l])

        # MasterNode.
        xm = _elu(_mm(h_bn.astype(BF16), wm_ref[l]) + bm_ref[l], 1.0)   # [N, H]
        maxp = seg_max(xm)                                              # [G, H]
        meanp = _mm(Bmat, xm.astype(BF16)) * inv_cnt                    # [G, H]
        w_max = conv_ref[3 * l + 0]
        w_mean = conv_ref[3 * l + 1]
        c_bias = conv_ref[3 * l + 2]
        pert = _elu(w_max * maxp + w_mean * meanp + c_bias, 1.0)        # [G, H]
        h_out = h_bn + _mm(BT, pert.astype(BF16))        # index_select(pert, batch)

        x_ref[:, 0:H] = h_out
        x_ref[:, H:H + 3] = coord_new

    # ------------------------------ GIN stack ---------------------------------
    # Dense [N,N] adjacency built once: agg = A @ h replaces the two [E,N]
    # one-hot passes per GIN layer.
    ScolT = onehot(sub_n == colr_ref[...])                   # [N,E], short-lived
    A = _mm(ScolT, Srow).astype(BF16)                        # [N, N]
    h = x_ref[:, 0:H]
    for l in range(num_gin):
        agg = _mm(A, h.astype(BF16))
        y = h + agg                                          # (1+eps)*x, eps=0
        t = _mm(y.astype(BF16), gw1_ref[l]) + gb1_ref[l]
        t = jnp.maximum(_batchnorm(t, ggamma_ref[l], gbeta_ref[l]), 0.0)   # ReLU
        t = _mm(t.astype(BF16), gw2_ref[l]) + gb2_ref[l]
        h = _elu(t, 0.1)

    # ----------------------- pooling + classifier -----------------------------
    meanp = _mm(Bmat, h.astype(BF16)) * inv_cnt              # global_mean_pool
    maxp = seg_max(h)                                        # global_max_pool
    cls_ref[:, 0:H] = meanp.astype(BF16)
    cls_ref[:, H:2 * H] = maxp.astype(BF16)
    cls_ref[:, 2 * H:2 * H + NGF] = g0_ref[...].astype(BF16)
    x = _mm(cls_ref[...], cw1_ref[...]) + cb1_ref[...]
    x = _batchnorm(_elu(x, 0.1), cgamma_ref[...], cbeta_ref[...])
    # Dropout(p=0.1): identity (see TODO).
    logits = _mm(x.astype(BF16), cw2_ref[...]) + cb2_ref[...]            # [G, 128]
    shifted = jnp.maximum(logits - jnp.max(logits, axis=1, keepdims=True), -80.0)
    e = jnp.exp(shifted)                                     # padded cols -> ~0
    out_ref[...] = e * pl.reciprocal(jnp.sum(e, axis=1, keepdims=True), approx=True)


# --------------------------------- wrapper -------------------------------------

def egnn_forward(h0, coord0, g0, edge_index, batch, egcl_p, gin_p, cls_p, *,
                 num_equiv, num_gin, residual_flags, n_graphs, n_classes, hid):
    N = h0.shape[0]
    G = n_graphs
    E = edge_index.shape[1]
    H = hid
    NGF = g0.shape[1]
    HC = H + _round_up(3, 8)            # node state width  [h | coord | pad]
    EM_W = 2 * H + _round_up(1, 8)      # edge-MLP input    [hr | hc | radial | pad]
    NM_W = 2 * H                        # node-MLP input    [h | agg]
    CLS_W = 2 * H + _round_up(NGF, 8)   # classifier input  [mean | max | g0 | pad]

    # Pad node features once to the hidden width (layer-0 weight rows are
    # zero-padded to match, so results are unchanged).
    if h0.shape[1] < H:
        h0 = jnp.pad(h0, ((0, 0), (0, H - h0.shape[1])))

    rows = edge_index[0].astype(jnp.int32)
    cols = edge_index[1].astype(jnp.int32)
    batch32 = batch.astype(jnp.int32)

    member = batch32[None, :] == jnp.arange(G, dtype=jnp.int32)[:, None]   # [G, N]
    deg = jnp.sum(jax.nn.one_hot(rows, N, dtype=F32), axis=0)[:, None]     # [N, 1]
    inv_deg = 1.0 / jnp.maximum(deg, 1.0)
    cnt = jnp.sum(member.astype(F32), axis=1, keepdims=True)               # [G, 1]
    inv_cnt = 1.0 / jnp.maximum(cnt, 1.0)

    kernel = functools.partial(egnn_fused_kernel, num_equiv=num_equiv,
                               num_gin=num_gin, residual_flags=residual_flags)

    vmem_args = [
        h0, coord0, g0,
        rows[:, None], rows[None, :], cols[:, None], cols[None, :],
        batch32[:, None], batch32[None, :],
        inv_deg, inv_cnt,
        egcl_p["we1"], egcl_p["be1"], egcl_p["we2"], egcl_p["be2"],
        egcl_p["wn1"], egcl_p["bn1"], egcl_p["wn2"], egcl_p["bn2"],
        egcl_p["wc1"], egcl_p["bc1"], egcl_p["wc2"],
        egcl_p["gamma"], egcl_p["beta"], egcl_p["wm"], egcl_p["bm"],
        gin_p["w1"], gin_p["b1"], gin_p["gamma"], gin_p["beta"],
        gin_p["w2"], gin_p["b2"],
        cls_p["w1"], cls_p["b1"], cls_p["gamma"], cls_p["beta"],
        cls_p["w2p"], cls_p["b2p"],
    ]

    # VMEM budget from the actual footprint (default scoped limit is 16/32 MiB)
    # plus an advisory cost estimate for the XLA scheduler.
    def nbytes(a):
        return int(a.size) * a.dtype.itemsize
    arg_bytes = sum(nbytes(a) for a in vmem_args) + int(egcl_p["conv"].size) * 4
    scratch_bytes = (N * HC * 4 + E * HC * 2 + E * EM_W * 2 + N * NM_W * 2
                     + G * CLS_W * 2)
    onehot_bytes = (3 * E * N + G * N + N * G + N * N) * 2
    vmem_limit = int(min(64 * 2 ** 20,
                         max(16 * 2 ** 20,
                             4 * (arg_bytes + scratch_bytes + onehot_bytes))))

    flops = 2 * (num_equiv * (3 * E * N * HC + E * EM_W * H + 3 * E * H * H + E * H
                              + 2 * N * NM_W * H + G * N * H + N * G * H + N * H * H)
                 + N * E * N
                 + num_gin * (N * N * H + 2 * N * H * H)
                 + G * CLS_W * H + G * H * LANE_PAD)
    transcendentals = (num_equiv * (3 * E * H + 3 * N * H + 2 * G * H)
                       + num_gin * N * H + G * H + G * LANE_PAD)
    cost = pl.CostEstimate(flops=int(flops), transcendentals=int(transcendentals),
                           bytes_accessed=int(arg_bytes + G * LANE_PAD * 4))

    vmem = pl.BlockSpec(memory_space=pltpu.MemorySpace.VMEM)
    smem = pl.BlockSpec(memory_space=pltpu.MemorySpace.SMEM)
    out = pl.pallas_call(
        kernel,
        out_shape=jax.ShapeDtypeStruct((G, LANE_PAD), F32),
        in_specs=[vmem] * len(vmem_args) + [smem],
        out_specs=vmem,
        scratch_shapes=[
            pltpu.VMEM((N, HC), F32),       # node state [h | coord]
            pltpu.VMEM((E, HC), BF16),      # [edge_feat | trans]
            pltpu.VMEM((E, EM_W), BF16),    # [h_row | h_col | radial]
            pltpu.VMEM((N, NM_W), BF16),    # [h | agg]
            pltpu.VMEM((G, CLS_W), BF16),   # [mean | max | g0]
        ],
        compiler_params=pltpu.CompilerParams(vmem_limit_bytes=vmem_limit),
        cost_estimate=cost,
    )(*vmem_args, egcl_p["conv"])
    return out[:, :n_classes]


# ------------------------------ parameter init ---------------------------------

def _init_linear(key, din, dout, scale=0.1):
    kw, kb = jax.random.split(key)
    w = scale * jax.random.normal(kw, (din, dout), F32)
    b = scale * jax.random.normal(kb, (1, dout), F32)
    return w, b


def init_mastered_egcl_params(key, din, hid, dout):
    ks = jax.random.split(key, 8)
    p = {"din": din}
    p["we1"], p["be1"] = _init_linear(ks[0], 2 * din + 1, hid)   # edge MLP layer 1
    p["we2"], p["be2"] = _init_linear(ks[1], hid, hid)           # edge MLP layer 2
    p["wn1"], p["bn1"] = _init_linear(ks[2], din + hid, hid)     # node MLP layer 1
    p["wn2"], p["bn2"] = _init_linear(ks[3], hid, dout)          # node MLP layer 2
    p["wc1"], p["bc1"] = _init_linear(ks[4], hid, hid)           # coord MLP layer 1
    p["wc2"] = 0.001 * jax.random.normal(ks[5], (hid, 1), F32)   # coord head, no bias
    p["gamma"] = jnp.ones((1, dout), F32)
    p["beta"] = jnp.zeros((1, dout), F32)
    p["wm"], p["bm"] = _init_linear(ks[6], dout, hid)            # MasterNode.nodes_to_master
    p["conv"] = 0.5 * jax.random.normal(ks[7], (3,), F32)        # [w_max, w_mean, bias]
    return p


def stack_egcl_params(plist, H):
    # Fused / zero-row-padded layout (unsplit weights -> deeper MXU K):
    #   we1: rows [0:H]=h_row block, [H:2H]=h_col block, [2H]=radial, rest 0
    #   wn1: rows [0:H]=h block, [H:2H]=agg block
    EM_W = 2 * H + _round_up(1, 8)
    NM_W = 2 * H
    bf_keys = {"we1", "we2", "wn1", "wn2", "wc1", "wc2", "wm"}
    cols = {k: [] for k in ["we1", "be1", "we2", "be2", "wn1", "bn1", "wn2",
                            "bn2", "wc1", "bc1", "wc2", "gamma", "beta",
                            "wm", "bm"]}
    convs = []
    for p in plist:
        din = p["din"]
        hid = p["wn1"].shape[1]
        we1 = jnp.zeros((EM_W, p["we1"].shape[1]), F32)
        we1 = we1.at[0:din].set(p["we1"][0:din])
        we1 = we1.at[H:H + din].set(p["we1"][din:2 * din])
        we1 = we1.at[2 * H:2 * H + 1].set(p["we1"][2 * din:2 * din + 1])
        wn1 = jnp.zeros((NM_W, hid), F32)
        wn1 = wn1.at[0:din].set(p["wn1"][0:din])
        wn1 = wn1.at[H:H + hid].set(p["wn1"][din:din + hid])
        cols["we1"].append(we1)
        cols["wn1"].append(wn1)
        for k in cols:
            if k not in ("we1", "wn1"):
                cols[k].append(p[k])
        convs.append(p["conv"])
    out = {}
    for k, vs in cols.items():
        arr = jnp.stack(vs, 0)
        out[k] = arr.astype(BF16) if k in bf_keys else arr
    out["conv"] = jnp.concatenate(convs, 0)
    return out


def init_gin_params(key, din, hid, dout):
    ks = jax.random.split(key, 2)
    p = {}
    p["w1"], p["b1"] = _init_linear(ks[0], din, hid)
    p["gamma"] = jnp.ones((1, hid), F32)
    p["beta"] = jnp.zeros((1, hid), F32)
    p["w2"], p["b2"] = _init_linear(ks[1], hid, dout)
    return p


def stack_gin_params(plist):
    out = {k: jnp.stack([p[k] for p in plist], 0) for k in plist[0]}
    out["w1"] = out["w1"].astype(BF16)
    out["w2"] = out["w2"].astype(BF16)
    return out


def init_classifier_params(key, H, ngf, n_classes):
    CLS_W = 2 * H + _round_up(ngf, 8)
    ks = jax.random.split(key, 2)
    w1, b1 = _init_linear(ks[0], 2 * H + ngf, H)
    w1f = jnp.zeros((CLS_W, H), F32).at[0:2 * H + ngf].set(w1)   # rows [mean|max|g0|0]
    w2, b2 = _init_linear(ks[1], H, n_classes)
    # Lane-dense final projection: pad the class dim to 128; padded logits get a
    # large negative bias so their softmax mass is ~0 (sliced off outside).
    w2p = jnp.pad(w2, ((0, 0), (0, LANE_PAD - n_classes)))
    b2p = jnp.concatenate([b2, jnp.full((1, LANE_PAD - n_classes), -1e4, F32)], 1)
    return {"w1": w1f.astype(BF16), "b1": b1,
            "gamma": jnp.ones((1, H), F32), "beta": jnp.zeros((1, H), F32),
            "w2p": w2p.astype(BF16), "b2p": b2p}


# ------------------------------------ main --------------------------------------

if __name__ == "__main__":
    key = jax.random.PRNGKey(0)

    G = 2                 # graphs in the batch
    NODES_PER_G = 8
    N = G * NODES_PER_G   # total nodes
    D_NODE = 8            # num_node_features
    HID = 32              # num_hidden_dim
    NGF = 4               # num_graph_features
    NCLS = 3              # num_classes
    NUM_EQUIV = 2
    NUM_GIN = 2

    # bidirectional ring inside each graph
    src, dst = [], []
    for g in range(G):
        off = g * NODES_PER_G
        for i in range(NODES_PER_G):
            j = (i + 1) % NODES_PER_G
            src += [off + i, off + j]
            dst += [off + j, off + i]
    edge_index = jnp.array([src, dst], dtype=jnp.int32)   # [2, E]
    batch = jnp.array(sum(([g] * NODES_PER_G for g in range(G)), []), dtype=jnp.int32)

    k_in, k_p = jax.random.split(key)
    k_h, k_c, k_g = jax.random.split(k_in, 3)
    h0 = jax.random.normal(k_h, (N, D_NODE), F32)
    coord0 = jax.random.normal(k_c, (N, 3), F32)
    g0 = jax.random.normal(k_g, (G, NGF), F32)

    k_eq, k_gin, k_cls = jax.random.split(k_p, 3)
    egcl_dims = [(D_NODE, HID, HID)] + [(HID, HID, HID)] * (NUM_EQUIV - 1)
    egcl_list = [init_mastered_egcl_params(k, di, hi, do)
                 for k, (di, hi, do) in zip(jax.random.split(k_eq, NUM_EQUIV), egcl_dims)]
    egcl_p = stack_egcl_params(egcl_list, HID)
    gin_p = stack_gin_params([init_gin_params(k, HID, HID, HID)
                              for k in jax.random.split(k_gin, NUM_GIN)])
    cls_p = init_classifier_params(k_cls, HID, NGF, NCLS)
    residual_flags = tuple(di == do for (di, _, do) in egcl_dims)

    fwd = jax.jit(functools.partial(
        egnn_forward, num_equiv=NUM_EQUIV, num_gin=NUM_GIN,
        residual_flags=residual_flags, n_graphs=G, n_classes=NCLS, hid=HID))
    probs = jax.block_until_ready(fwd(h0, coord0, g0, edge_index, batch,
                                      egcl_p, gin_p, cls_p))

    assert probs.shape == (G, NCLS)
    assert bool(jnp.all(jnp.isfinite(probs)))
    # approx=True reciprocal in the softmax -> allow a slightly looser sum check
    assert bool(jnp.allclose(jnp.sum(probs, axis=1), 1.0, atol=5e-3))
    print("KERNEL_OK")
</pallas_src>

<mosaic_0001>
module attributes {stable_mosaic.version = 11 : i64} {
  func.func @egnn_fused_kernel(%arg0: memref<16x32xf32, #tpu.memory_space<vmem>>, %arg1: memref<16x3xf32, #tpu.memory_space<vmem>>, %arg2: memref<2x4xf32, #tpu.memory_space<vmem>>, %arg3: memref<32x1xi32, #tpu.memory_space<vmem>>, %arg4: memref<1x32xi32, #tpu.memory_space<vmem>>, %arg5: memref<32x1xi32, #tpu.memory_space<vmem>>, %arg6: memref<1x32xi32, #tpu.memory_space<vmem>>, %arg7: memref<16x1xi32, #tpu.memory_space<vmem>>, %arg8: memref<1x16xi32, #tpu.memory_space<vmem>>, %arg9: memref<16x1xf32, #tpu.memory_space<vmem>>, %arg10: memref<2x1xf32, #tpu.memory_space<vmem>>, %arg11: memref<2x72x32xbf16, #tpu.memory_space<vmem>>, %arg12: memref<2x1x32xf32, #tpu.memory_space<vmem>>, %arg13: memref<2x32x32xbf16, #tpu.memory_space<vmem>>, %arg14: memref<2x1x32xf32, #tpu.memory_space<vmem>>, %arg15: memref<2x64x32xbf16, #tpu.memory_space<vmem>>, %arg16: memref<2x1x32xf32, #tpu.memory_space<vmem>>, %arg17: memref<2x32x32xbf16, #tpu.memory_space<vmem>>, %arg18: memref<2x1x32xf32, #tpu.memory_space<vmem>>, %arg19: memref<2x32x32xbf16, #tpu.memory_space<vmem>>, %arg20: memref<2x1x32xf32, #tpu.memory_space<vmem>>, %arg21: memref<2x32x1xbf16, #tpu.memory_space<vmem>>, %arg22: memref<2x1x32xf32, #tpu.memory_space<vmem>>, %arg23: memref<2x1x32xf32, #tpu.memory_space<vmem>>, %arg24: memref<2x32x32xbf16, #tpu.memory_space<vmem>>, %arg25: memref<2x1x32xf32, #tpu.memory_space<vmem>>, %arg26: memref<2x32x32xbf16, #tpu.memory_space<vmem>>, %arg27: memref<2x1x32xf32, #tpu.memory_space<vmem>>, %arg28: memref<2x1x32xf32, #tpu.memory_space<vmem>>, %arg29: memref<2x1x32xf32, #tpu.memory_space<vmem>>, %arg30: memref<2x32x32xbf16, #tpu.memory_space<vmem>>, %arg31: memref<2x1x32xf32, #tpu.memory_space<vmem>>, %arg32: memref<72x32xbf16, #tpu.memory_space<vmem>>, %arg33: memref<1x32xf32, #tpu.memory_space<vmem>>, %arg34: memref<1x32xf32, #tpu.memory_space<vmem>>, %arg35: memref<1x32xf32, #tpu.memory_space<vmem>>, %arg36: memref<32x128xbf16, #tpu.memory_space<vmem>>, %arg37: memref<1x128xf32, #tpu.memory_space<vmem>>, %arg38: memref<6xf32, #tpu.memory_space<smem>>, %arg39: memref<2x128xf32, #tpu.memory_space<vmem>>, %arg40: memref<16x40xf32, #tpu.memory_space<vmem>>, %arg41: memref<32x40xbf16, #tpu.memory_space<vmem>>, %arg42: memref<32x72xbf16, #tpu.memory_space<vmem>>, %arg43: memref<16x64xbf16, #tpu.memory_space<vmem>>, %arg44: memref<2x72xbf16, #tpu.memory_space<vmem>>) attributes {dimension_semantics = [], scalar_prefetch = 0 : i64, scratch_operands = 5 : i64, tpu.core_type = #tpu.core_type<tc>} {
    %c0 = arith.constant 0 : index
    %c0_0 = arith.constant 0 : index
    %0 = vector.load %arg9[%c0, %c0_0] : memref<16x1xf32, #tpu.memory_space<vmem>>, vector<16x1xf32>
    %c0_1 = arith.constant 0 : index
    %c0_2 = arith.constant 0 : index
    %1 = vector.load %arg10[%c0_1, %c0_2] : memref<2x1xf32, #tpu.memory_space<vmem>>, vector<2x1xf32>
    %c0_3 = arith.constant 0 : index
    %c0_4 = arith.constant 0 : index
    %2 = vector.load %arg7[%c0_3, %c0_4] : memref<16x1xi32, #tpu.memory_space<vmem>>, vector<16x1xi32>
    %3 = tpu.iota {dimensions = array<i32: 1>} : vector<32x16xi32>
    %4 = tpu.iota {dimensions = array<i32: 0>} : vector<16x32xi32>
    %c0_5 = arith.constant 0 : index
    %c0_6 = arith.constant 0 : index
    %5 = vector.load %arg3[%c0_5, %c0_6] : memref<32x1xi32, #tpu.memory_space<vmem>>, vector<32x1xi32>
    %6 = vector.broadcast %5 : vector<32x1xi32> to vector<32x16xi32>
    %7 = arith.cmpi eq, %3, %6 : vector<32x16xi32>
    %cst = arith.constant 1.000000e+00 : f32
    %cst_7 = arith.constant 0.000000e+00 : f32
    %8 = vector.broadcast %cst : f32 to vector<32x16xf32>
    %9 = vector.broadcast %cst_7 : f32 to vector<32x16xf32>
    %10 = arith.select %7, %8, %9 : vector<32x16xi1>, vector<32x16xf32>
    %11 = arith.truncf %10 : vector<32x16xf32> to vector<32x16xbf16>
    %c0_8 = arith.constant 0 : index
    %c0_9 = arith.constant 0 : index
    %12 = vector.load %arg5[%c0_8, %c0_9] : memref<32x1xi32, #tpu.memory_space<vmem>>, vector<32x1xi32>
    %13 = vector.broadcast %12 : vector<32x1xi32> to vector<32x16xi32>
    %14 = arith.cmpi eq, %3, %13 : vector<32x16xi32>
    %cst_10 = arith.constant 1.000000e+00 : f32
    %cst_11 = arith.constant 0.000000e+00 : f32
    %15 = vector.broadcast %cst_10 : f32 to vector<32x16xf32>
    %16 = vector.broadcast %cst_11 : f32 to vector<32x16xf32>
    %17 = arith.select %14, %15, %16 : vector<32x16xi1>, vector<32x16xf32>
    %18 = arith.truncf %17 : vector<32x16xf32> to vector<32x16xbf16>
    %19 = tpu.iota {dimensions = array<i32: 0>} : vector<2x16xi32>
    %c0_12 = arith.constant 0 : index
    %c0_13 = arith.constant 0 : index
    %20 = vector.load %arg8[%c0_12, %c0_13] : memref<1x16xi32, #tpu.memory_space<vmem>>, vector<1x16xi32>
    %21 = vector.broadcast %20 : vector<1x16xi32> to vector<2x16xi32>
    %22 = arith.cmpi eq, %19, %21 : vector<2x16xi32>
    %cst_14 = arith.constant 1.000000e+00 : f32
    %cst_15 = arith.constant 0.000000e+00 : f32
    %23 = vector.broadcast %cst_14 : f32 to vector<2x16xf32>
    %24 = vector.broadcast %cst_15 : f32 to vector<2x16xf32>
    %25 = arith.select %22, %23, %24 : vector<2x16xi1>, vector<2x16xf32>
    %26 = arith.truncf %25 : vector<2x16xf32> to vector<2x16xbf16>
    %27 = tpu.iota {dimensions = array<i32: 1>} : vector<16x2xi32>
    %28 = vector.broadcast %2 : vector<16x1xi32> to vector<16x2xi32>
    %29 = arith.cmpi eq, %27, %28 : vector<16x2xi32>
    %cst_16 = arith.constant 1.000000e+00 : f32
    %cst_17 = arith.constant 0.000000e+00 : f32
    %30 = vector.broadcast %cst_16 : f32 to vector<16x2xf32>
    %31 = vector.broadcast %cst_17 : f32 to vector<16x2xf32>
    %32 = arith.select %29, %30, %31 : vector<16x2xi1>, vector<16x2xf32>
    %33 = arith.truncf %32 : vector<16x2xf32> to vector<16x2xbf16>
    %34 = tpu.iota {dimensions = array<i32: 0>} : vector<2x1xi32>
    %cst_18 = arith.constant 0.000000e+00 : f32
    %35 = vector.broadcast %cst_18 : f32 to vector<16x40xf32>
    %c0_19 = arith.constant 0 : index
    %c0_20 = arith.constant 0 : index
    %36 = vector.load %arg40[%c0_19, %c0_20] : memref<16x40xf32, #tpu.memory_space<vmem>>, vector<16x40xf32>
    tpu.vector_store %arg40[%c0_19, %c0_20], %35 {strides = array<i32>} : memref<16x40xf32, #tpu.memory_space<vmem>>, vector<16x40xf32>,
    %cst_21 = arith.constant 0.000000e+00 : bf16
    %37 = vector.broadcast %cst_21 : bf16 to vector<32x40xbf16>
    %c0_22 = arith.constant 0 : index
    %c0_23 = arith.constant 0 : index
    %38 = vector.load %arg41[%c0_22, %c0_23] : memref<32x40xbf16, #tpu.memory_space<vmem>>, vector<32x40xbf16>
    tpu.vector_store %arg41[%c0_22, %c0_23], %37 {strides = array<i32>} : memref<32x40xbf16, #tpu.memory_space<vmem>>, vector<32x40xbf16>,
    %cst_24 = arith.constant 0.000000e+00 : bf16
    %39 = vector.broadcast %cst_24 : bf16 to vector<32x72xbf16>
    %c0_25 = arith.constant 0 : index
    %c0_26 = arith.constant 0 : index
    %40 = vector.load %arg42[%c0_25, %c0_26] : memref<32x72xbf16, #tpu.memory_space<vmem>>, vector<32x72xbf16>
    tpu.vector_store %arg42[%c0_25, %c0_26], %39 {strides = array<i32>} : memref<32x72xbf16, #tpu.memory_space<vmem>>, vector<32x72xbf16>,
    %cst_27 = arith.constant 0.000000e+00 : bf16
    %41 = vector.broadcast %cst_27 : bf16 to vector<2x72xbf16>
    %c0_28 = arith.constant 0 : index
    %c0_29 = arith.constant 0 : index
    %42 = vector.load %arg44[%c0_28, %c0_29] : memref<2x72xbf16, #tpu.memory_space<vmem>>, vector<2x72xbf16>
    tpu.vector_store %arg44[%c0_28, %c0_29], %41 {strides = array<i32>} : memref<2x72xbf16, #tpu.memory_space<vmem>>, vector<2x72xbf16>,
    %c0_30 = arith.constant 0 : index
    %c0_31 = arith.constant 0 : index
    %43 = vector.load %arg0[%c0_30, %c0_31] : memref<16x32xf32, #tpu.memory_space<vmem>>, vector<16x32xf32>
    %c0_32 = arith.constant 0 : index
    %c0_33 = arith.constant 0 : index
    %44 = vector.load %arg40[%c0_32, %c0_33] : memref<16x40xf32, #tpu.memory_space<vmem>>, vector<16x32xf32>
    tpu.vector_store %arg40[%c0_32, %c0_33], %43 {strides = array<i32>} : memref<16x40xf32, #tpu.memory_space<vmem>>, vector<16x32xf32>,
    %c0_34 = arith.constant 0 : index
    %c0_35 = arith.constant 0 : index
    %45 = vector.load %arg1[%c0_34, %c0_35] : memref<16x3xf32, #tpu.memory_space<vmem>>, vector<16x3xf32>
    %c0_36 = arith.constant 0 : index
    %c32 = arith.constant 32 : index
    %46 = vector.load %arg40[%c0_36, %c32] : memref<16x40xf32, #tpu.memory_space<vmem>>, vector<16x3xf32>
    tpu.vector_store %arg40[%c0_36, %c32], %45 {strides = array<i32>} : memref<16x40xf32, #tpu.memory_space<vmem>>, vector<16x3xf32>,
    %c0_37 = arith.constant 0 : index
    %c0_38 = arith.constant 0 : index
    %47 = vector.load %arg40[%c0_37, %c0_38] : memref<16x40xf32, #tpu.memory_space<vmem>>, vector<16x32xf32>
    %c0_39 = arith.constant 0 : index
    %c32_40 = arith.constant 32 : index
    %48 = vector.load %arg40[%c0_39, %c32_40] : memref<16x40xf32, #tpu.memory_space<vmem>>, vector<16x3xf32>
    %c0_41 = arith.constant 0 : index
    %c0_42 = arith.constant 0 : index
    %49 = vector.load %arg40[%c0_41, %c0_42] : memref<16x40xf32, #tpu.memory_space<vmem>>, vector<16x40xf32>
    %50 = arith.truncf %49 : vector<16x40xf32> to vector<16x40xbf16>
    %cst_43 = arith.constant dense<0.000000e+00> : vector<32x40xf32>
    %51 = tpu.matmul %11, %50, %cst_43 {dimension_numbers = #tpu.dot_dimension_numbers<[1], [0], [0], [1], [0, 0, 1, 1], [], []>} : vector<32x16xbf16>, vector<16x40xbf16>, vector<32x40xf32> -> vector<32x40xf32>
    %cst_44 = arith.constant dense<0.000000e+00> : vector<32x40xf32>
    %52 = tpu.matmul %18, %50, %cst_44 {dimension_numbers = #tpu.dot_dimension_numbers<[1], [0], [0], [1], [0, 0, 1, 1], [], []>} : vector<32x16xbf16>, vector<16x40xbf16>, vector<32x40xf32> -> vector<32x40xf32>
    %53 = vector.extract_strided_slice %51 {offsets = [0, 0], sizes = [32, 32], strides = [1, 1]} : vector<32x40xf32> to vector<32x32xf32>
    %54 = vector.extract_strided_slice %51 {offsets = [0, 32], sizes = [32, 3], strides = [1, 1]} : vector<32x40xf32> to vector<32x3xf32>
    %55 = vector.extract_strided_slice %52 {offsets = [0, 0], sizes = [32, 32], strides = [1, 1]} : vector<32x40xf32> to vector<32x32xf32>
    %56 = vector.extract_strided_slice %52 {offsets = [0, 32], sizes = [32, 3], strides = [1, 1]} : vector<32x40xf32> to vector<32x3xf32>
    %57 = arith.subf %54, %56 : vector<32x3xf32>
    %58 = arith.mulf %57, %57 : vector<32x3xf32>
    %cst_45 = arith.constant dense<0.000000e+00> : vector<32xf32>
    %59 = vector.multi_reduction <add>, %58, %cst_45 [1] : vector<32x3xf32> to vector<32xf32>
    %60 = vector.shape_cast %59 : vector<32xf32> to vector<32x1xf32>
    %61 = arith.truncf %53 : vector<32x32xf32> to vector<32x32xbf16>
    %c0_46 = arith.constant 0 : index
    %c0_47 = arith.constant 0 : index
    %62 = vector.load %arg42[%c0_46, %c0_47] : memref<32x72xbf16, #tpu.memory_space<vmem>>, vector<32x32xbf16>
    tpu.vector_store %arg42[%c0_46, %c0_47], %61 {strides = array<i32>} : memref<32x72xbf16, #tpu.memory_space<vmem>>, vector<32x32xbf16>,
    %63 = arith.truncf %55 : vector<32x32xf32> to vector<32x32xbf16>
    %c0_48 = arith.constant 0 : index
    %c32_49 = arith.constant 32 : index
    %64 = vector.load %arg42[%c0_48, %c32_49] : memref<32x72xbf16, #tpu.memory_space<vmem>>, vector<32x32xbf16>
    tpu.vector_store %arg42[%c0_48, %c32_49], %63 {strides = array<i32>} : memref<32x72xbf16, #tpu.memory_space<vmem>>, vector<32x32xbf16>,
    %65 = arith.truncf %60 : vector<32x1xf32> to vector<32x1xbf16>
    %c0_50 = arith.constant 0 : index
    %c64 = arith.constant 64 : index
    %66 = vector.load %arg42[%c0_50, %c64] : memref<32x72xbf16, #tpu.memory_space<vmem>>, vector<32x1xbf16>
    tpu.vector_store %arg42[%c0_50, %c64], %65 {strides = array<i32>} : memref<32x72xbf16, #tpu.memory_space<vmem>>, vector<32x1xbf16>,
    %c0_51 = arith.constant 0 : index
    %c0_52 = arith.constant 0 : index
    %67 = vector.load %arg42[%c0_51, %c0_52] : memref<32x72xbf16, #tpu.memory_space<vmem>>, vector<32x72xbf16>
    %c0_53 = arith.constant 0 : index
    %c0_54 = arith.constant 0 : index
    %c0_55 = arith.constant 0 : index
    %68 = vector.load %arg11[%c0_53, %c0_54, %c0_55] : memref<2x72x32xbf16, #tpu.memory_space<vmem>>, vector<1x72x32xbf16>
    %69 = vector.shape_cast %68 : vector<1x72x32xbf16> to vector<72x32xbf16>
    %cst_56 = arith.constant dense<0.000000e+00> : vector<32x32xf32>
    %70 = tpu.matmul %67, %69, %cst_56 {dimension_numbers = #tpu.dot_dimension_numbers<[1], [0], [0], [1], [0, 0, 1, 1], [], []>} : vector<32x72xbf16>, vector<72x32xbf16>, vector<32x32xf32> -> vector<32x32xf32>
    %c0_57 = arith.constant 0 : index
    %c0_58 = arith.constant 0 : index
    %c0_59 = arith.constant 0 : index
    %71 = vector.load %arg12[%c0_57, %c0_58, %c0_59] : memref<2x1x32xf32, #tpu.memory_space<vmem>>, vector<1x1x32xf32>
    %72 = vector.shape_cast %71 : vector<1x1x32xf32> to vector<1x32xf32>
    %73 = vector.broadcast %72 : vector<1x32xf32> to vector<32x32xf32>
    %74 = arith.addf %70, %73 : vector<32x32xf32>
    %75 = arith.negf %74 : vector<32x32xf32>
    %76 = math.exp %75 : vector<32x32xf32>
    %cst_60 = arith.constant 1.000000e+00 : f32
    %77 = vector.broadcast %cst_60 : f32 to vector<32x32xf32>
    %78 = arith.addf %77, %76 : vector<32x32xf32>
    %79 = arith.divf %77, %78 : vector<32x32xf32>
    %80 = arith.mulf %74, %79 : vector<32x32xf32>
    %81 = arith.truncf %80 : vector<32x32xf32> to vector<32x32xbf16>
    %c0_61 = arith.constant 0 : index
    %c0_62 = arith.constant 0 : index
    %c0_63 = arith.constant 0 : index
    %82 = vector.load %arg13[%c0_61, %c0_62, %c0_63] : memref<2x32x32xbf16, #tpu.memory_space<vmem>>, vector<1x32x32xbf16>
    %83 = vector.shape_cast %82 : vector<1x32x32xbf16> to vector<32x32xbf16>
    %cst_64 = arith.constant dense<0.000000e+00> : vector<32x32xf32>
    %84 = tpu.matmul %81, %83, %cst_64 {dimension_numbers = #tpu.dot_dimension_numbers<[1], [0], [0], [1], [0, 0, 1, 1], [], []>} : vector<32x32xbf16>, vector<32x32xbf16>, vector<32x32xf32> -> vector<32x32xf32>
    %c0_65 = arith.constant 0 : index
    %c0_66 = arith.constant 0 : index
    %c0_67 = arith.constant 0 : index
    %85 = vector.load %arg14[%c0_65, %c0_66, %c0_67] : memref<2x1x32xf32, #tpu.memory_space<vmem>>, vector<1x1x32xf32>
    %86 = vector.shape_cast %85 : vector<1x1x32xf32> to vector<1x32xf32>
    %87 = vector.broadcast %86 : vector<1x32xf32> to vector<32x32xf32>
    %88 = arith.addf %84, %87 : vector<32x32xf32>
    %89 = arith.negf %88 : vector<32x32xf32>
    %90 = math.exp %89 : vector<32x32xf32>
    %cst_68 = arith.constant 1.000000e+00 : f32
    %91 = vector.broadcast %cst_68 : f32 to vector<32x32xf32>
    %92 = arith.addf %91, %90 : vector<32x32xf32>
    %93 = arith.divf %91, %92 : vector<32x32xf32>
    %94 = arith.mulf %88, %93 : vector<32x32xf32>
    %95 = arith.truncf %94 : vector<32x32xf32> to vector<32x32xbf16>
    %c0_69 = arith.constant 0 : index
    %c0_70 = arith.constant 0 : index
    %c0_71 = arith.constant 0 : index
    %96 = vector.load %arg19[%c0_69, %c0_70, %c0_71] : memref<2x32x32xbf16, #tpu.memory_space<vmem>>, vector<1x32x32xbf16>
    %97 = vector.shape_cast %96 : vector<1x32x32xbf16> to vector<32x32xbf16>
    %cst_72 = arith.constant dense<0.000000e+00> : vector<32x32xf32>
    %98 = tpu.matmul %95, %97, %cst_72 {dimension_numbers = #tpu.dot_dimension_numbers<[1], [0], [0], [1], [0, 0, 1, 1], [], []>} : vector<32x32xbf16>, vector<32x32xbf16>, vector<32x32xf32> -> vector<32x32xf32>
    %c0_73 = arith.constant 0 : index
    %c0_74 = arith.constant 0 : index
    %c0_75 = arith.constant 0 : index
    %99 = vector.load %arg20[%c0_73, %c0_74, %c0_75] : memref<2x1x32xf32, #tpu.memory_space<vmem>>, vector<1x1x32xf32>
    %100 = vector.shape_cast %99 : vector<1x1x32xf32> to vector<1x32xf32>
    %101 = vector.broadcast %100 : vector<1x32xf32> to vector<32x32xf32>
    %102 = arith.addf %98, %101 : vector<32x32xf32>
    %103 = arith.negf %102 : vector<32x32xf32>
    %104 = math.exp %103 : vector<32x32xf32>
    %cst_76 = arith.constant 1.000000e+00 : f32
    %105 = vector.broadcast %cst_76 : f32 to vector<32x32xf32>
    %106 = arith.addf %105, %104 : vector<32x32xf32>
    %107 = arith.divf %105, %106 : vector<32x32xf32>
    %108 = arith.mulf %102, %107 : vector<32x32xf32>
    %109 = arith.truncf %108 : vector<32x32xf32> to vector<32x32xbf16>
    %c0_77 = arith.constant 0 : index
    %c0_78 = arith.constant 0 : index
    %c0_79 = arith.constant 0 : index
    %110 = vector.load %arg21[%c0_77, %c0_78, %c0_79] : memref<2x32x1xbf16, #tpu.memory_space<vmem>>, vector<1x32x1xbf16>
    %111 = vector.shape_cast %110 : vector<1x32x1xbf16> to vector<32x1xbf16>
    %cst_80 = arith.constant dense<0.000000e+00> : vector<32x1xf32>
    %112 = tpu.matmul %109, %111, %cst_80 {dimension_numbers = #tpu.dot_dimension_numbers<[1], [0], [0], [1], [0, 0, 1, 1], [], []>} : vector<32x32xbf16>, vector<32x1xbf16>, vector<32x1xf32> -> vector<32x1xf32>
    %113 = vector.broadcast %112 : vector<32x1xf32> to vector<32x3xf32>
    %114 = arith.mulf %57, %113 : vector<32x3xf32>
    %c0_81 = arith.constant 0 : index
    %c0_82 = arith.constant 0 : index
    %115 = vector.load %arg41[%c0_81, %c0_82] : memref<32x40xbf16, #tpu.memory_space<vmem>>, vector<32x32xbf16>
    tpu.vector_store %arg41[%c0_81, %c0_82], %95 {strides = array<i32>} : memref<32x40xbf16, #tpu.memory_space<vmem>>, vector<32x32xbf16>,
    %116 = arith.truncf %114 : vector<32x3xf32> to vector<32x3xbf16>
    %c0_83 = arith.constant 0 : index
    %c32_84 = arith.constant 32 : index
    %117 = vector.load %arg41[%c0_83, %c32_84] : memref<32x40xbf16, #tpu.memory_space<vmem>>, vector<32x3xbf16>
    tpu.vector_store %arg41[%c0_83, %c32_84], %116 {strides = array<i32>} : memref<32x40xbf16, #tpu.memory_space<vmem>>, vector<32x3xbf16>,
    %c0_85 = arith.constant 0 : index
    %c0_86 = arith.constant 0 : index
    %118 = vector.load %arg4[%c0_85, %c0_86] : memref<1x32xi32, #tpu.memory_space<vmem>>, vector<1x32xi32>
    %119 = vector.broadcast %118 : vector<1x32xi32> to vector<16x32xi32>
    %120 = arith.cmpi eq, %4, %119 : vector<16x32xi32>
    %cst_87 = arith.constant 1.000000e+00 : f32
    %cst_88 = arith.constant 0.000000e+00 : f32
    %121 = vector.broadcast %cst_87 : f32 to vector<16x32xf32>
    %122 = vector.broadcast %cst_88 : f32 to vector<16x32xf32>
    %123 = arith.select %120, %121, %122 : vector<16x32xi1>, vector<16x32xf32>
    %124 = arith.truncf %123 : vector<16x32xf32> to vector<16x32xbf16>
    %c0_89 = arith.constant 0 : index
    %c0_90 = arith.constant 0 : index
    %125 = vector.load %arg41[%c0_89, %c0_90] : memref<32x40xbf16, #tpu.memory_space<vmem>>, vector<32x40xbf16>
    %cst_91 = arith.constant dense<0.000000e+00> : vector<16x40xf32>
    %126 = tpu.matmul %124, %125, %cst_91 {dimension_numbers = #tpu.dot_dimension_numbers<[1], [0], [0], [1], [0, 0, 1, 1], [], []>} : vector<16x32xbf16>, vector<32x40xbf16>, vector<16x40xf32> -> vector<16x40xf32>
    %127 = vector.extract_strided_slice %126 {offsets = [0, 0], sizes = [16, 32], strides = [1, 1]} : vector<16x40xf32> to vector<16x32xf32>
    %128 = vector.extract_strided_slice %126 {offsets = [0, 32], sizes = [16, 3], strides = [1, 1]} : vector<16x40xf32> to vector<16x3xf32>
    %129 = vector.broadcast %0 : vector<16x1xf32> to vector<16x3xf32>
    %130 = arith.mulf %128, %129 : vector<16x3xf32>
    %131 = arith.addf %48, %130 : vector<16x3xf32>
    %132 = arith.truncf %47 : vector<16x32xf32> to vector<16x32xbf16>
    %c0_92 = arith.constant 0 : index
    %c0_93 = arith.constant 0 : index
    %133 = vector.load %arg43[%c0_92, %c0_93] : memref<16x64xbf16, #tpu.memory_space<vmem>>, vector<16x32xbf16>
    tpu.vector_store %arg43[%c0_92, %c0_93], %132 {strides = array<i32>} : memref<16x64xbf16, #tpu.memory_space<vmem>>, vector<16x32xbf16>,
    %134 = arith.truncf %127 : vector<16x32xf32> to vector<16x32xbf16>
    %c0_94 = arith.constant 0 : index
    %c32_95 = arith.constant 32 : index
    %135 = vector.load %arg43[%c0_94, %c32_95] : memref<16x64xbf16, #tpu.memory_space<vmem>>, vector<16x32xbf16>
    tpu.vector_store %arg43[%c0_94, %c32_95], %134 {strides = array<i32>} : memref<16x64xbf16, #tpu.memory_space<vmem>>, vector<16x32xbf16>,
    %c0_96 = arith.constant 0 : index
    %c0_97 = arith.constant 0 : index
    %136 = vector.load %arg43[%c0_96, %c0_97] : memref<16x64xbf16, #tpu.memory_space<vmem>>, vector<16x64xbf16>
    %c0_98 = arith.constant 0 : index
    %c0_99 = arith.constant 0 : index
    %c0_100 = arith.constant 0 : index
    %137 = vector.load %arg15[%c0_98, %c0_99, %c0_100] : memref<2x64x32xbf16, #tpu.memory_space<vmem>>, vector<1x64x32xbf16>
    %138 = vector.shape_cast %137 : vector<1x64x32xbf16> to vector<64x32xbf16>
    %cst_101 = arith.constant dense<0.000000e+00> : vector<16x32xf32>
    %139 = tpu.matmul %136, %138, %cst_101 {dimension_numbers = #tpu.dot_dimension_numbers<[1], [0], [0], [1], [0, 0, 1, 1], [], []>} : vector<16x64xbf16>, vector<64x32xbf16>, vector<16x32xf32> -> vector<16x32xf32>
    %c0_102 = arith.constant 0 : index
    %c0_103 = arith.constant 0 : index
    %c0_104 = arith.constant 0 : index
    %140 = vector.load %arg16[%c0_102, %c0_103, %c0_104] : memref<2x1x32xf32, #tpu.memory_space<vmem>>, vector<1x1x32xf32>
    %141 = vector.shape_cast %140 : vector<1x1x32xf32> to vector<1x32xf32>
    %142 = vector.broadcast %141 : vector<1x32xf32> to vector<16x32xf32>
    %143 = arith.addf %139, %142 : vector<16x32xf32>
    %144 = arith.negf %143 : vector<16x32xf32>
    %145 = math.exp %144 : vector<16x32xf32>
    %cst_105 = arith.constant 1.000000e+00 : f32
    %146 = vector.broadcast %cst_105 : f32 to vector<16x32xf32>
    %147 = arith.addf %146, %145 : vector<16x32xf32>
    %148 = arith.divf %146, %147 : vector<16x32xf32>
    %149 = arith.mulf %143, %148 : vector<16x32xf32>
    %150 = arith.truncf %149 : vector<16x32xf32> to vector<16x32xbf16>
    %c0_106 = arith.constant 0 : index
    %c0_107 = arith.constant 0 : index
    %c0_108 = arith.constant 0 : index
    %151 = vector.load %arg17[%c0_106, %c0_107, %c0_108] : memref<2x32x32xbf16, #tpu.memory_space<vmem>>, vector<1x32x32xbf16>
    %152 = vector.shape_cast %151 : vector<1x32x32xbf16> to vector<32x32xbf16>
    %cst_109 = arith.constant dense<0.000000e+00> : vector<16x32xf32>
    %153 = tpu.matmul %150, %152, %cst_109 {dimension_numbers = #tpu.dot_dimension_numbers<[1], [0], [0], [1], [0, 0, 1, 1], [], []>} : vector<16x32xbf16>, vector<32x32xbf16>, vector<16x32xf32> -> vector<16x32xf32>
    %c0_110 = arith.constant 0 : index
    %c0_111 = arith.constant 0 : index
    %c0_112 = arith.constant 0 : index
    %154 = vector.load %arg18[%c0_110, %c0_111, %c0_112] : memref<2x1x32xf32, #tpu.memory_space<vmem>>, vector<1x1x32xf32>
    %155 = vector.shape_cast %154 : vector<1x1x32xf32> to vector<1x32xf32>
    %156 = vector.broadcast %155 : vector<1x32xf32> to vector<16x32xf32>
    %157 = arith.addf %153, %156 : vector<16x32xf32>
    %cst_113 = arith.constant 0.000000e+00 : f32
    %158 = vector.broadcast %cst_113 : f32 to vector<16x32xf32>
    %159 = arith.cmpf ogt, %157, %158 : vector<16x32xf32>
    %160 = math.exp %157 : vector<16x32xf32>
    %cst_114 = arith.constant 1.000000e+00 : f32
    %161 = vector.broadcast %cst_114 : f32 to vector<16x32xf32>
    %162 = arith.subf %160, %161 : vector<16x32xf32>
    %cst_115 = arith.constant 1.000000e+00 : f32
    %163 = vector.broadcast %cst_115 : f32 to vector<16x32xf32>
    %164 = arith.mulf %163, %162 : vector<16x32xf32>
    %165 = arith.select %159, %157, %164 : vector<16x32xi1>, vector<16x32xf32>
    %c0_116 = arith.constant 0 : index
    %c0_117 = arith.constant 0 : index
    %c0_118 = arith.constant 0 : index
    %166 = vector.load %arg22[%c0_116, %c0_117, %c0_118] : memref<2x1x32xf32, #tpu.memory_space<vmem>>, vector<1x1x32xf32>
    %167 = vector.shape_cast %166 : vector<1x1x32xf32> to vector<1x32xf32>
    %c0_119 = arith.constant 0 : index
    %c0_120 = arith.constant 0 : index
    %c0_121 = arith.constant 0 : index
    %168 = vector.load %arg23[%c0_119, %c0_120, %c0_121] : memref<2x1x32xf32, #tpu.memory_space<vmem>>, vector<1x1x32xf32>
    %169 = vector.shape_cast %168 : vector<1x1x32xf32> to vector<1x32xf32>
    %cst_122 = arith.constant dense<0.000000e+00> : vector<32xf32>
    %170 = vector.multi_reduction <add>, %165, %cst_122 [0] : vector<16x32xf32> to vector<32xf32>
    %171 = vector.shape_cast %170 : vector<32xf32> to vector<1x32xf32>
    %cst_123 = arith.constant 6.250000e-02 : f32
    %172 = vector.broadcast %cst_123 : f32 to vector<1x32xf32>
    %173 = arith.mulf %171, %172 : vector<1x32xf32>
    %174 = vector.broadcast %173 : vector<1x32xf32> to vector<16x32xf32>
    %175 = arith.subf %165, %174 : vector<16x32xf32>
    %176 = arith.mulf %175, %175 : vector<16x32xf32>
    %cst_124 = arith.constant dense<0.000000e+00> : vector<32xf32>
    %177 = vector.multi_reduction <add>, %176, %cst_124 [0] : vector<16x32xf32> to vector<32xf32>
    %178 = vector.shape_cast %177 : vector<32xf32> to vector<1x32xf32>
    %cst_125 = arith.constant 6.250000e-02 : f32
    %179 = vector.broadcast %cst_125 : f32 to vector<1x32xf32>
    %180 = arith.mulf %178, %179 : vector<1x32xf32>
    %cst_126 = arith.constant 9.99999974E-6 : f32
    %181 = vector.broadcast %cst_126 : f32 to vector<1x32xf32>
    %182 = arith.addf %180, %181 : vector<1x32xf32>
    %183 = math.rsqrt %182 : vector<1x32xf32>
    %184 = vector.broadcast %183 : vector<1x32xf32> to vector<16x32xf32>
    %185 = arith.mulf %175, %184 : vector<16x32xf32>
    %186 = vector.broadcast %167 : vector<1x32xf32> to vector<16x32xf32>
    %187 = arith.mulf %185, %186 : vector<16x32xf32>
    %188 = vector.broadcast %169 : vector<1x32xf32> to vector<16x32xf32>
    %189 = arith.addf %187, %188 : vector<16x32xf32>
    %190 = arith.truncf %189 : vector<16x32xf32> to vector<16x32xbf16>
    %c0_127 = arith.constant 0 : index
    %c0_128 = arith.constant 0 : index
    %c0_129 = arith.constant 0 : index
    %191 = vector.load %arg24[%c0_127, %c0_128, %c0_129] : memref<2x32x32xbf16, #tpu.memory_space<vmem>>, vector<1x32x32xbf16>
    %192 = vector.shape_cast %191 : vector<1x32x32xbf16> to vector<32x32xbf16>
    %cst_130 = arith.constant dense<0.000000e+00> : vector<16x32xf32>
    %193 = tpu.matmul %190, %192, %cst_130 {dimension_numbers = #tpu.dot_dimension_numbers<[1], [0], [0], [1], [0, 0, 1, 1], [], []>} : vector<16x32xbf16>, vector<32x32xbf16>, vector<16x32xf32> -> vector<16x32xf32>
    %c0_131 = arith.constant 0 : index
    %c0_132 = arith.constant 0 : index
    %c0_133 = arith.constant 0 : index
    %194 = vector.load %arg25[%c0_131, %c0_132, %c0_133] : memref<2x1x32xf32, #tpu.memory_space<vmem>>, vector<1x1x32xf32>
    %195 = vector.shape_cast %194 : vector<1x1x32xf32> to vector<1x32xf32>
    %196 = vector.broadcast %195 : vector<1x32xf32> to vector<16x32xf32>
    %197 = arith.addf %193, %196 : vector<16x32xf32>
    %cst_134 = arith.constant 0.000000e+00 : f32
    %198 = vector.broadcast %cst_134 : f32 to vector<16x32xf32>
    %199 = arith.cmpf ogt, %197, %198 : vector<16x32xf32>
    %200 = math.exp %197 : vector<16x32xf32>
    %cst_135 = arith.constant 1.000000e+00 : f32
    %201 = vector.broadcast %cst_135 : f32 to vector<16x32xf32>
    %202 = arith.subf %200, %201 : vector<16x32xf32>
    %cst_136 = arith.constant 1.000000e+00 : f32
    %203 = vector.broadcast %cst_136 : f32 to vector<16x32xf32>
    %204 = arith.mulf %203, %202 : vector<16x32xf32>
    %205 = arith.select %199, %197, %204 : vector<16x32xi1>, vector<16x32xf32>
    %cst_137 = arith.constant 0.000000e+00 : f32
    %206 = vector.broadcast %cst_137 : f32 to vector<2x32xf32>
    %c0_i32 = arith.constant 0 : i32
    %c2_i32 = arith.constant 2 : i32
    %207 = arith.addi %c0_i32, %c2_i32 : i32
    %c1_i32 = arith.constant 1 : i32
    %208 = scf.for %arg45 = %c0_i32 to %207 step %c1_i32 iter_args(%arg46 = %206) -> (vector<2x32xf32>)  : i32 {
      %611 = vector.broadcast %arg45 : i32 to vector<16x1xi32>
      %612 = arith.cmpi eq, %2, %611 : vector<16x1xi32>
      %cst_374 = arith.constant -3.000000e+38 : f32
      %613 = vector.shape_cast %612 : vector<16x1xi1> to vector<16x1xi1>
      %614 = vector.broadcast %613 : vector<16x1xi1> to vector<16x32xi1>
      %615 = vector.broadcast %cst_374 : f32 to vector<16x32xf32>
      %616 = arith.select %614, %205, %615 : vector<16x32xi1>, vector<16x32xf32>
      %cst_375 = arith.constant dense<0xFF800000> : vector<32xf32>
      %617 = vector.multi_reduction <maximumf>, %616, %cst_375 [0] : vector<16x32xf32> to vector<32xf32>
      %618 = vector.shape_cast %617 : vector<32xf32> to vector<1x32xf32>
      %619 = vector.broadcast %arg45 : i32 to vector<2x1xi32>
      %620 = arith.cmpi eq, %34, %619 : vector<2x1xi32>
      %cst_376 = arith.constant 1.000000e+00 : f32
      %cst_377 = arith.constant 0.000000e+00 : f32
      %621 = vector.broadcast %cst_376 : f32 to vector<2x1xf32>
      %622 = vector.broadcast %cst_377 : f32 to vector<2x1xf32>
      %623 = arith.select %620, %621, %622 : vector<2x1xi1>, vector<2x1xf32>
      %624 = vector.broadcast %623 : vector<2x1xf32> to vector<2x32xf32>
      %625 = vector.broadcast %618 : vector<1x32xf32> to vector<2x32xf32>
      %626 = arith.mulf %624, %625 : vector<2x32xf32>
      %627 = arith.addf %arg46, %626 : vector<2x32xf32>
      scf.yield %627 : vector<2x32xf32>
    }
    %c2_i32_138 = arith.constant 2 : i32
    %209 = arith.truncf %205 : vector<16x32xf32> to vector<16x32xbf16>
    %cst_139 = arith.constant dense<0.000000e+00> : vector<2x32xf32>
    %210 = tpu.matmul %26, %209, %cst_139 {dimension_numbers = #tpu.dot_dimension_numbers<[1], [0], [0], [1], [0, 0, 1, 1], [], []>} : vector<2x16xbf16>, vector<16x32xbf16>, vector<2x32xf32> -> vector<2x32xf32>
    %211 = vector.broadcast %1 : vector<2x1xf32> to vector<2x32xf32>
    %212 = arith.mulf %210, %211 : vector<2x32xf32>
    %c0_140 = arith.constant 0 : index
    %213 = memref.load %arg38[%c0_140] : memref<6xf32, #tpu.memory_space<smem>>
    %c1 = arith.constant 1 : index
    %214 = memref.load %arg38[%c1] : memref<6xf32, #tpu.memory_space<smem>>
    %c2 = arith.constant 2 : index
    %215 = memref.load %arg38[%c2] : memref<6xf32, #tpu.memory_space<smem>>
    %216 = vector.broadcast %213 : f32 to vector<2x32xf32>
    %217 = arith.mulf %216, %208 : vector<2x32xf32>
    %218 = vector.broadcast %214 : f32 to vector<2x32xf32>
    %219 = arith.mulf %218, %212 : vector<2x32xf32>
    %220 = arith.addf %217, %219 : vector<2x32xf32>
    %221 = vector.broadcast %215 : f32 to vector<2x32xf32>
    %222 = arith.addf %220, %221 : vector<2x32xf32>
    %cst_141 = arith.constant 0.000000e+00 : f32
    %223 = vector.broadcast %cst_141 : f32 to vector<2x32xf32>
    %224 = arith.cmpf ogt, %222, %223 : vector<2x32xf32>
    %225 = math.exp %222 : vector<2x32xf32>
    %cst_142 = arith.constant 1.000000e+00 : f32
    %226 = vector.broadcast %cst_142 : f32 to vector<2x32xf32>
    %227 = arith.subf %225, %226 : vector<2x32xf32>
    %cst_143 = arith.constant 1.000000e+00 : f32
    %228 = vector.broadcast %cst_143 : f32 to vector<2x32xf32>
    %229 = arith.mulf %228, %227 : vector<2x32xf32>
    %230 = arith.select %224, %222, %229 : vector<2x32xi1>, vector<2x32xf32>
    %231 = arith.truncf %230 : vector<2x32xf32> to vector<2x32xbf16>
    %cst_144 = arith.constant dense<0.000000e+00> : vector<16x32xf32>
    %232 = tpu.matmul %33, %231, %cst_144 {dimension_numbers = #tpu.dot_dimension_numbers<[1], [0], [0], [1], [0, 0, 1, 1], [], []>} : vector<16x2xbf16>, vector<2x32xbf16>, vector<16x32xf32> -> vector<16x32xf32>
    %233 = arith.addf %189, %232 : vector<16x32xf32>
    %c0_145 = arith.constant 0 : index
    %c0_146 = arith.constant 0 : index
    %234 = vector.load %arg40[%c0_145, %c0_146] : memref<16x40xf32, #tpu.memory_space<vmem>>, vector<16x32xf32>
    tpu.vector_store %arg40[%c0_145, %c0_146], %233 {strides = array<i32>} : memref<16x40xf32, #tpu.memory_space<vmem>>, vector<16x32xf32>,
    %c0_147 = arith.constant 0 : index
    %c32_148 = arith.constant 32 : index
    %235 = vector.load %arg40[%c0_147, %c32_148] : memref<16x40xf32, #tpu.memory_space<vmem>>, vector<16x3xf32>
    tpu.vector_store %arg40[%c0_147, %c32_148], %131 {strides = array<i32>} : memref<16x40xf32, #tpu.memory_space<vmem>>, vector<16x3xf32>,
    %c0_149 = arith.constant 0 : index
    %c0_150 = arith.constant 0 : index
    %236 = vector.load %arg40[%c0_149, %c0_150] : memref<16x40xf32, #tpu.memory_space<vmem>>, vector<16x32xf32>
    %c0_151 = arith.constant 0 : index
    %c32_152 = arith.constant 32 : index
    %237 = vector.load %arg40[%c0_151, %c32_152] : memref<16x40xf32, #tpu.memory_space<vmem>>, vector<16x3xf32>
    %c0_153 = arith.constant 0 : index
    %c0_154 = arith.constant 0 : index
    %238 = vector.load %arg40[%c0_153, %c0_154] : memref<16x40xf32, #tpu.memory_space<vmem>>, vector<16x40xf32>
    %239 = arith.truncf %238 : vector<16x40xf32> to vector<16x40xbf16>
    %cst_155 = arith.constant dense<0.000000e+00> : vector<32x40xf32>
    %240 = tpu.matmul %11, %239, %cst_155 {dimension_numbers = #tpu.dot_dimension_numbers<[1], [0], [0], [1], [0, 0, 1, 1], [], []>} : vector<32x16xbf16>, vector<16x40xbf16>, vector<32x40xf32> -> vector<32x40xf32>
    %cst_156 = arith.constant dense<0.000000e+00> : vector<32x40xf32>
    %241 = tpu.matmul %18, %239, %cst_156 {dimension_numbers = #tpu.dot_dimension_numbers<[1], [0], [0], [1], [0, 0, 1, 1], [], []>} : vector<32x16xbf16>, vector<16x40xbf16>, vector<32x40xf32> -> vector<32x40xf32>
    %242 = vector.extract_strided_slice %240 {offsets = [0, 0], sizes = [32, 32], strides = [1, 1]} : vector<32x40xf32> to vector<32x32xf32>
    %243 = vector.extract_strided_slice %240 {offsets = [0, 32], sizes = [32, 3], strides = [1, 1]} : vector<32x40xf32> to vector<32x3xf32>
    %244 = vector.extract_strided_slice %241 {offsets = [0, 0], sizes = [32, 32], strides = [1, 1]} : vector<32x40xf32> to vector<32x32xf32>
    %245 = vector.extract_strided_slice %241 {offsets = [0, 32], sizes = [32, 3], strides = [1, 1]} : vector<32x40xf32> to vector<32x3xf32>
    %246 = arith.subf %243, %245 : vector<32x3xf32>
    %247 = arith.mulf %246, %246 : vector<32x3xf32>
    %cst_157 = arith.constant dense<0.000000e+00> : vector<32xf32>
    %248 = vector.multi_reduction <add>, %247, %cst_157 [1] : vector<32x3xf32> to vector<32xf32>
    %249 = vector.shape_cast %248 : vector<32xf32> to vector<32x1xf32>
    %250 = arith.truncf %242 : vector<32x32xf32> to vector<32x32xbf16>
    %c0_158 = arith.constant 0 : index
    %c0_159 = arith.constant 0 : index
    %251 = vector.load %arg42[%c0_158, %c0_159] : memref<32x72xbf16, #tpu.memory_space<vmem>>, vector<32x32xbf16>
    tpu.vector_store %arg42[%c0_158, %c0_159], %250 {strides = array<i32>} : memref<32x72xbf16, #tpu.memory_space<vmem>>, vector<32x32xbf16>,
    %252 = arith.truncf %244 : vector<32x32xf32> to vector<32x32xbf16>
    %c0_160 = arith.constant 0 : index
    %c32_161 = arith.constant 32 : index
    %253 = vector.load %arg42[%c0_160, %c32_161] : memref<32x72xbf16, #tpu.memory_space<vmem>>, vector<32x32xbf16>
    tpu.vector_store %arg42[%c0_160, %c32_161], %252 {strides = array<i32>} : memref<32x72xbf16, #tpu.memory_space<vmem>>, vector<32x32xbf16>,
    %254 = arith.truncf %249 : vector<32x1xf32> to vector<32x1xbf16>
    %c0_162 = arith.constant 0 : index
    %c64_163 = arith.constant 64 : index
    %255 = vector.load %arg42[%c0_162, %c64_163] : memref<32x72xbf16, #tpu.memory_space<vmem>>, vector<32x1xbf16>
    tpu.vector_store %arg42[%c0_162, %c64_163], %254 {strides = array<i32>} : memref<32x72xbf16, #tpu.memory_space<vmem>>, vector<32x1xbf16>,
    %c0_164 = arith.constant 0 : index
    %c0_165 = arith.constant 0 : index
    %256 = vector.load %arg42[%c0_164, %c0_165] : memref<32x72xbf16, #tpu.memory_space<vmem>>, vector<32x72xbf16>
    %c1_166 = arith.constant 1 : index
    %c0_167 = arith.constant 0 : index
    %c0_168 = arith.constant 0 : index
    %257 = vector.load %arg11[%c1_166, %c0_167, %c0_168] : memref<2x72x32xbf16, #tpu.memory_space<vmem>>, vector<1x72x32xbf16>
    %258 = vector.shape_cast %257 : vector<1x72x32xbf16> to vector<72x32xbf16>
    %cst_169 = arith.constant dense<0.000000e+00> : vector<32x32xf32>
    %259 = tpu.matmul %256, %258, %cst_169 {dimension_numbers = #tpu.dot_dimension_numbers<[1], [0], [0], [1], [0, 0, 1, 1], [], []>} : vector<32x72xbf16>, vector<72x32xbf16>, vector<32x32xf32> -> vector<32x32xf32>
    %c1_170 = arith.constant 1 : index
    %c0_171 = arith.constant 0 : index
    %c0_172 = arith.constant 0 : index
    %260 = vector.load %arg12[%c1_170, %c0_171, %c0_172] : memref<2x1x32xf32, #tpu.memory_space<vmem>>, vector<1x1x32xf32>
    %261 = vector.shape_cast %260 : vector<1x1x32xf32> to vector<1x32xf32>
    %262 = vector.broadcast %261 : vector<1x32xf32> to vector<32x32xf32>
    %263 = arith.addf %259, %262 : vector<32x32xf32>
    %264 = arith.negf %263 : vector<32x32xf32>
    %265 = math.exp %264 : vector<32x32xf32>
    %cst_173 = arith.constant 1.000000e+00 : f32
    %266 = vector.broadcast %cst_173 : f32 to vector<32x32xf32>
    %267 = arith.addf %266, %265 : vector<32x32xf32>
    %268 = arith.divf %266, %267 : vector<32x32xf32>
    %269 = arith.mulf %263, %268 : vector<32x32xf32>
    %270 = arith.truncf %269 : vector<32x32xf32> to vector<32x32xbf16>
    %c1_174 = arith.constant 1 : index
    %c0_175 = arith.constant 0 : index
    %c0_176 = arith.constant 0 : index
    %271 = vector.load %arg13[%c1_174, %c0_175, %c0_176] : memref<2x32x32xbf16, #tpu.memory_space<vmem>>, vector<1x32x32xbf16>
    %272 = vector.shape_cast %271 : vector<1x32x32xbf16> to vector<32x32xbf16>
    %cst_177 = arith.constant dense<0.000000e+00> : vector<32x32xf32>
    %273 = tpu.matmul %270, %272, %cst_177 {dimension_numbers = #tpu.dot_dimension_numbers<[1], [0], [0], [1], [0, 0, 1, 1], [], []>} : vector<32x32xbf16>, vector<32x32xbf16>, vector<32x32xf32> -> vector<32x32xf32>
    %c1_178 = arith.constant 1 : index
    %c0_179 = arith.constant 0 : index
    %c0_180 = arith.constant 0 : index
    %274 = vector.load %arg14[%c1_178, %c0_179, %c0_180] : memref<2x1x32xf32, #tpu.memory_space<vmem>>, vector<1x1x32xf32>
    %275 = vector.shape_cast %274 : vector<1x1x32xf32> to vector<1x32xf32>
    %276 = vector.broadcast %275 : vector<1x32xf32> to vector<32x32xf32>
    %277 = arith.addf %273, %276 : vector<32x32xf32>
    %278 = arith.negf %277 : vector<32x32xf32>
    %279 = math.exp %278 : vector<32x32xf32>
    %cst_181 = arith.constant 1.000000e+00 : f32
    %280 = vector.broadcast %cst_181 : f32 to vector<32x32xf32>
    %281 = arith.addf %280, %279 : vector<32x32xf32>
    %282 = arith.divf %280, %281 : vector<32x32xf32>
    %283 = arith.mulf %277, %282 : vector<32x32xf32>
    %284 = arith.truncf %283 : vector<32x32xf32> to vector<32x32xbf16>
    %c1_182 = arith.constant 1 : index
    %c0_183 = arith.constant 0 : index
    %c0_184 = arith.constant 0 : index
    %285 = vector.load %arg19[%c1_182, %c0_183, %c0_184] : memref<2x32x32xbf16, #tpu.memory_space<vmem>>, vector<1x32x32xbf16>
    %286 = vector.shape_cast %285 : vector<1x32x32xbf16> to vector<32x32xbf16>
    %cst_185 = arith.constant dense<0.000000e+00> : vector<32x32xf32>
    %287 = tpu.matmul %284, %286, %cst_185 {dimension_numbers = #tpu.dot_dimension_numbers<[1], [0], [0], [1], [0, 0, 1, 1], [], []>} : vector<32x32xbf16>, vector<32x32xbf16>, vector<32x32xf32> -> vector<32x32xf32>
    %c1_186 = arith.constant 1 : index
    %c0_187 = arith.constant 0 : index
    %c0_188 = arith.constant 0 : index
    %288 = vector.load %arg20[%c1_186, %c0_187, %c0_188] : memref<2x1x32xf32, #tpu.memory_space<vmem>>, vector<1x1x32xf32>
    %289 = vector.shape_cast %288 : vector<1x1x32xf32> to vector<1x32xf32>
    %290 = vector.broadcast %289 : vector<1x32xf32> to vector<32x32xf32>
    %291 = arith.addf %287, %290 : vector<32x32xf32>
    %292 = arith.negf %291 : vector<32x32xf32>
    %293 = math.exp %292 : vector<32x32xf32>
    %cst_189 = arith.constant 1.000000e+00 : f32
    %294 = vector.broadcast %cst_189 : f32 to vector<32x32xf32>
    %295 = arith.addf %294, %293 : vector<32x32xf32>
    %296 = arith.divf %294, %295 : vector<32x32xf32>
    %297 = arith.mulf %291, %296 : vector<32x32xf32>
    %298 = arith.truncf %297 : vector<32x32xf32> to vector<32x32xbf16>
    %c1_190 = arith.constant 1 : index
    %c0_191 = arith.constant 0 : index
    %c0_192 = arith.constant 0 : index
    %299 = vector.load %arg21[%c1_190, %c0_191, %c0_192] : memref<2x32x1xbf16, #tpu.memory_space<vmem>>, vector<1x32x1xbf16>
    %300 = vector.shape_cast %299 : vector<1x32x1xbf16> to vector<32x1xbf16>
    %cst_193 = arith.constant dense<0.000000e+00> : vector<32x1xf32>
    %301 = tpu.matmul %298, %300, %cst_193 {dimension_numbers = #tpu.dot_dimension_numbers<[1], [0], [0], [1], [0, 0, 1, 1], [], []>} : vector<32x32xbf16>, vector<32x1xbf16>, vector<32x1xf32> -> vector<32x1xf32>
    %302 = vector.broadcast %301 : vector<32x1xf32> to vector<32x3xf32>
    %303 = arith.mulf %246, %302 : vector<32x3xf32>
    %c0_194 = arith.constant 0 : index
    %c0_195 = arith.constant 0 : index
    %304 = vector.load %arg41[%c0_194, %c0_195] : memref<32x40xbf16, #tpu.memory_space<vmem>>, vector<32x32xbf16>
    tpu.vector_store %arg41[%c0_194, %c0_195], %284 {strides = array<i32>} : memref<32x40xbf16, #tpu.memory_space<vmem>>, vector<32x32xbf16>,
    %305 = arith.truncf %303 : vector<32x3xf32> to vector<32x3xbf16>
    %c0_196 = arith.constant 0 : index
    %c32_197 = arith.constant 32 : index
    %306 = vector.load %arg41[%c0_196, %c32_197] : memref<32x40xbf16, #tpu.memory_space<vmem>>, vector<32x3xbf16>
    tpu.vector_store %arg41[%c0_196, %c32_197], %305 {strides = array<i32>} : memref<32x40xbf16, #tpu.memory_space<vmem>>, vector<32x3xbf16>,
    %c0_198 = arith.constant 0 : index
    %c0_199 = arith.constant 0 : index
    %307 = vector.load %arg4[%c0_198, %c0_199] : memref<1x32xi32, #tpu.memory_space<vmem>>, vector<1x32xi32>
    %308 = vector.broadcast %307 : vector<1x32xi32> to vector<16x32xi32>
    %309 = arith.cmpi eq, %4, %308 : vector<16x32xi32>
    %cst_200 = arith.constant 1.000000e+00 : f32
    %cst_201 = arith.constant 0.000000e+00 : f32
    %310 = vector.broadcast %cst_200 : f32 to vector<16x32xf32>
    %311 = vector.broadcast %cst_201 : f32 to vector<16x32xf32>
    %312 = arith.select %309, %310, %311 : vector<16x32xi1>, vector<16x32xf32>
    %313 = arith.truncf %312 : vector<16x32xf32> to vector<16x32xbf16>
    %c0_202 = arith.constant 0 : index
    %c0_203 = arith.constant 0 : index
    %314 = vector.load %arg41[%c0_202, %c0_203] : memref<32x40xbf16, #tpu.memory_space<vmem>>, vector<32x40xbf16>
    %cst_204 = arith.constant dense<0.000000e+00> : vector<16x40xf32>
    %315 = tpu.matmul %313, %314, %cst_204 {dimension_numbers = #tpu.dot_dimension_numbers<[1], [0], [0], [1], [0, 0, 1, 1], [], []>} : vector<16x32xbf16>, vector<32x40xbf16>, vector<16x40xf32> -> vector<16x40xf32>
    %316 = vector.extract_strided_slice %315 {offsets = [0, 0], sizes = [16, 32], strides = [1, 1]} : vector<16x40xf32> to vector<16x32xf32>
    %317 = vector.extract_strided_slice %315 {offsets = [0, 32], sizes = [16, 3], strides = [1, 1]} : vector<16x40xf32> to vector<16x3xf32>
    %318 = vector.broadcast %0 : vector<16x1xf32> to vector<16x3xf32>
    %319 = arith.mulf %317, %318 : vector<16x3xf32>
    %320 = arith.addf %237, %319 : vector<16x3xf32>
    %321 = arith.truncf %236 : vector<16x32xf32> to vector<16x32xbf16>
    %c0_205 = arith.constant 0 : index
    %c0_206 = arith.constant 0 : index
    %322 = vector.load %arg43[%c0_205, %c0_206] : memref<16x64xbf16, #tpu.memory_space<vmem>>, vector<16x32xbf16>
    tpu.vector_store %arg43[%c0_205, %c0_206], %321 {strides = array<i32>} : memref<16x64xbf16, #tpu.memory_space<vmem>>, vector<16x32xbf16>,
    %323 = arith.truncf %316 : vector<16x32xf32> to vector<16x32xbf16>
    %c0_207 = arith.constant 0 : index
    %c32_208 = arith.constant 32 : index
    %324 = vector.load %arg43[%c0_207, %c32_208] : memref<16x64xbf16, #tpu.memory_space<vmem>>, vector<16x32xbf16>
    tpu.vector_store %arg43[%c0_207, %c32_208], %323 {strides = array<i32>} : memref<16x64xbf16, #tpu.memory_space<vmem>>, vector<16x32xbf16>,
    %c0_209 = arith.constant 0 : index
    %c0_210 = arith.constant 0 : index
    %325 = vector.load %arg43[%c0_209, %c0_210] : memref<16x64xbf16, #tpu.memory_space<vmem>>, vector<16x64xbf16>
    %c1_211 = arith.constant 1 : index
    %c0_212 = arith.constant 0 : index
    %c0_213 = arith.constant 0 : index
    %326 = vector.load %arg15[%c1_211, %c0_212, %c0_213] : memref<2x64x32xbf16, #tpu.memory_space<vmem>>, vector<1x64x32xbf16>
    %327 = vector.shape_cast %326 : vector<1x64x32xbf16> to vector<64x32xbf16>
    %cst_214 = arith.constant dense<0.000000e+00> : vector<16x32xf32>
    %328 = tpu.matmul %325, %327, %cst_214 {dimension_numbers = #tpu.dot_dimension_numbers<[1], [0], [0], [1], [0, 0, 1, 1], [], []>} : vector<16x64xbf16>, vector<64x32xbf16>, vector<16x32xf32> -> vector<16x32xf32>
    %c1_215 = arith.constant 1 : index
    %c0_216 = arith.constant 0 : index
    %c0_217 = arith.constant 0 : index
    %329 = vector.load %arg16[%c1_215, %c0_216, %c0_217] : memref<2x1x32xf32, #tpu.memory_space<vmem>>, vector<1x1x32xf32>
    %330 = vector.shape_cast %329 : vector<1x1x32xf32> to vector<1x32xf32>
    %331 = vector.broadcast %330 : vector<1x32xf32> to vector<16x32xf32>
    %332 = arith.addf %328, %331 : vector<16x32xf32>
    %333 = arith.negf %332 : vector<16x32xf32>
    %334 = math.exp %333 : vector<16x32xf32>
    %cst_218 = arith.constant 1.000000e+00 : f32
    %335 = vector.broadcast %cst_218 : f32 to vector<16x32xf32>
    %336 = arith.addf %335, %334 : vector<16x32xf32>
    %337 = arith.divf %335, %336 : vector<16x32xf32>
    %338 = arith.mulf %332, %337 : vector<16x32xf32>
    %339 = arith.truncf %338 : vector<16x32xf32> to vector<16x32xbf16>
    %c1_219 = arith.constant 1 : index
    %c0_220 = arith.constant 0 : index
    %c0_221 = arith.constant 0 : index
    %340 = vector.load %arg17[%c1_219, %c0_220, %c0_221] : memref<2x32x32xbf16, #tpu.memory_space<vmem>>, vector<1x32x32xbf16>
    %341 = vector.shape_cast %340 : vector<1x32x32xbf16> to vector<32x32xbf16>
    %cst_222 = arith.constant dense<0.000000e+00> : vector<16x32xf32>
    %342 = tpu.matmul %339, %341, %cst_222 {dimension_numbers = #tpu.dot_dimension_numbers<[1], [0], [0], [1], [0, 0, 1, 1], [], []>} : vector<16x32xbf16>, vector<32x32xbf16>, vector<16x32xf32> -> vector<16x32xf32>
    %c1_223 = arith.constant 1 : index
    %c0_224 = arith.constant 0 : index
    %c0_225 = arith.constant 0 : index
    %343 = vector.load %arg18[%c1_223, %c0_224, %c0_225] : memref<2x1x32xf32, #tpu.memory_space<vmem>>, vector<1x1x32xf32>
    %344 = vector.shape_cast %343 : vector<1x1x32xf32> to vector<1x32xf32>
    %345 = vector.broadcast %344 : vector<1x32xf32> to vector<16x32xf32>
    %346 = arith.addf %342, %345 : vector<16x32xf32>
    %347 = arith.addf %236, %346 : vector<16x32xf32>
    %cst_226 = arith.constant 0.000000e+00 : f32
    %348 = vector.broadcast %cst_226 : f32 to vector<16x32xf32>
    %349 = arith.cmpf ogt, %347, %348 : vector<16x32xf32>
    %350 = math.exp %347 : vector<16x32xf32>
    %cst_227 = arith.constant 1.000000e+00 : f32
    %351 = vector.broadcast %cst_227 : f32 to vector<16x32xf32>
    %352 = arith.subf %350, %351 : vector<16x32xf32>
    %cst_228 = arith.constant 1.000000e+00 : f32
    %353 = vector.broadcast %cst_228 : f32 to vector<16x32xf32>
    %354 = arith.mulf %353, %352 : vector<16x32xf32>
    %355 = arith.select %349, %347, %354 : vector<16x32xi1>, vector<16x32xf32>
    %c1_229 = arith.constant 1 : index
    %c0_230 = arith.constant 0 : index
    %c0_231 = arith.constant 0 : index
    %356 = vector.load %arg22[%c1_229, %c0_230, %c0_231] : memref<2x1x32xf32, #tpu.memory_space<vmem>>, vector<1x1x32xf32>
    %357 = vector.shape_cast %356 : vector<1x1x32xf32> to vector<1x32xf32>
    %c1_232 = arith.constant 1 : index
    %c0_233 = arith.constant 0 : index
    %c0_234 = arith.constant 0 : index
    %358 = vector.load %arg23[%c1_232, %c0_233, %c0_234] : memref<2x1x32xf32, #tpu.memory_space<vmem>>, vector<1x1x32xf32>
    %359 = vector.shape_cast %358 : vector<1x1x32xf32> to vector<1x32xf32>
    %cst_235 = arith.constant dense<0.000000e+00> : vector<32xf32>
    %360 = vector.multi_reduction <add>, %355, %cst_235 [0] : vector<16x32xf32> to vector<32xf32>
    %361 = vector.shape_cast %360 : vector<32xf32> to vector<1x32xf32>
    %cst_236 = arith.constant 6.250000e-02 : f32
    %362 = vector.broadcast %cst_236 : f32 to vector<1x32xf32>
    %363 = arith.mulf %361, %362 : vector<1x32xf32>
    %364 = vector.broadcast %363 : vector<1x32xf32> to vector<16x32xf32>
    %365 = arith.subf %355, %364 : vector<16x32xf32>
    %366 = arith.mulf %365, %365 : vector<16x32xf32>
    %cst_237 = arith.constant dense<0.000000e+00> : vector<32xf32>
    %367 = vector.multi_reduction <add>, %366, %cst_237 [0] : vector<16x32xf32> to vector<32xf32>
    %368 = vector.shape_cast %367 : vector<32xf32> to vector<1x32xf32>
    %cst_238 = arith.constant 6.250000e-02 : f32
    %369 = vector.broadcast %cst_238 : f32 to vector<1x32xf32>
    %370 = arith.mulf %368, %369 : vector<1x32xf32>
    %cst_239 = arith.constant 9.99999974E-6 : f32
    %371 = vector.broadcast %cst_239 : f32 to vector<1x32xf32>
    %372 = arith.addf %370, %371 : vector<1x32xf32>
    %373 = math.rsqrt %372 : vector<1x32xf32>
    %374 = vector.broadcast %373 : vector<1x32xf32> to vector<16x32xf32>
    %375 = arith.mulf %365, %374 : vector<16x32xf32>
    %376 = vector.broadcast %357 : vector<1x32xf32> to vector<16x32xf32>
    %377 = arith.mulf %375, %376 : vector<16x32xf32>
    %378 = vector.broadcast %359 : vector<1x32xf32> to vector<16x32xf32>
    %379 = arith.addf %377, %378 : vector<16x32xf32>
    %380 = arith.truncf %379 : vector<16x32xf32> to vector<16x32xbf16>
    %c1_240 = arith.constant 1 : index
    %c0_241 = arith.constant 0 : index
    %c0_242 = arith.constant 0 : index
    %381 = vector.load %arg24[%c1_240, %c0_241, %c0_242] : memref<2x32x32xbf16, #tpu.memory_space<vmem>>, vector<1x32x32xbf16>
    %382 = vector.shape_cast %381 : vector<1x32x32xbf16> to vector<32x32xbf16>
    %cst_243 = arith.constant dense<0.000000e+00> : vector<16x32xf32>
    %383 = tpu.matmul %380, %382, %cst_243 {dimension_numbers = #tpu.dot_dimension_numbers<[1], [0], [0], [1], [0, 0, 1, 1], [], []>} : vector<16x32xbf16>, vector<32x32xbf16>, vector<16x32xf32> -> vector<16x32xf32>
    %c1_244 = arith.constant 1 : index
    %c0_245 = arith.constant 0 : index
    %c0_246 = arith.constant 0 : index
    %384 = vector.load %arg25[%c1_244, %c0_245, %c0_246] : memref<2x1x32xf32, #tpu.memory_space<vmem>>, vector<1x1x32xf32>
    %385 = vector.shape_cast %384 : vector<1x1x32xf32> to vector<1x32xf32>
    %386 = vector.broadcast %385 : vector<1x32xf32> to vector<16x32xf32>
    %387 = arith.addf %383, %386 : vector<16x32xf32>
    %cst_247 = arith.constant 0.000000e+00 : f32
    %388 = vector.broadcast %cst_247 : f32 to vector<16x32xf32>
    %389 = arith.cmpf ogt, %387, %388 : vector<16x32xf32>
    %390 = math.exp %387 : vector<16x32xf32>
    %cst_248 = arith.constant 1.000000e+00 : f32
    %391 = vector.broadcast %cst_248 : f32 to vector<16x32xf32>
    %392 = arith.subf %390, %391 : vector<16x32xf32>
    %cst_249 = arith.constant 1.000000e+00 : f32
    %393 = vector.broadcast %cst_249 : f32 to vector<16x32xf32>
    %394 = arith.mulf %393, %392 : vector<16x32xf32>
    %395 = arith.select %389, %387, %394 : vector<16x32xi1>, vector<16x32xf32>
    %cst_250 = arith.constant 0.000000e+00 : f32
    %396 = vector.broadcast %cst_250 : f32 to vector<2x32xf32>
    %c0_i32_251 = arith.constant 0 : i32
    %c2_i32_252 = arith.constant 2 : i32
    %397 = arith.addi %c0_i32_251, %c2_i32_252 : i32
    %c1_i32_253 = arith.constant 1 : i32
    %398 = scf.for %arg45 = %c0_i32_251 to %397 step %c1_i32_253 iter_args(%arg46 = %396) -> (vector<2x32xf32>)  : i32 {
      %611 = vector.broadcast %arg45 : i32 to vector<16x1xi32>
      %612 = arith.cmpi eq, %2, %611 : vector<16x1xi32>
      %cst_374 = arith.constant -3.000000e+38 : f32
      %613 = vector.shape_cast %612 : vector<16x1xi1> to vector<16x1xi1>
      %614 = vector.broadcast %613 : vector<16x1xi1> to vector<16x32xi1>
      %615 = vector.broadcast %cst_374 : f32 to vector<16x32xf32>
      %616 = arith.select %614, %395, %615 : vector<16x32xi1>, vector<16x32xf32>
      %cst_375 = arith.constant dense<0xFF800000> : vector<32xf32>
      %617 = vector.multi_reduction <maximumf>, %616, %cst_375 [0] : vector<16x32xf32> to vector<32xf32>
      %618 = vector.shape_cast %617 : vector<32xf32> to vector<1x32xf32>
      %619 = vector.broadcast %arg45 : i32 to vector<2x1xi32>
      %620 = arith.cmpi eq, %34, %619 : vector<2x1xi32>
      %cst_376 = arith.constant 1.000000e+00 : f32
      %cst_377 = arith.constant 0.000000e+00 : f32
      %621 = vector.broadcast %cst_376 : f32 to vector<2x1xf32>
      %622 = vector.broadcast %cst_377 : f32 to vector<2x1xf32>
      %623 = arith.select %620, %621, %622 : vector<2x1xi1>, vector<2x1xf32>
      %624 = vector.broadcast %623 : vector<2x1xf32> to vector<2x32xf32>
      %625 = vector.broadcast %618 : vector<1x32xf32> to vector<2x32xf32>
      %626 = arith.mulf %624, %625 : vector<2x32xf32>
      %627 = arith.addf %arg46, %626 : vector<2x32xf32>
      scf.yield %627 : vector<2x32xf32>
    }
    %c2_i32_254 = arith.constant 2 : i32
    %399 = arith.truncf %395 : vector<16x32xf32> to vector<16x32xbf16>
    %cst_255 = arith.constant dense<0.000000e+00> : vector<2x32xf32>
    %400 = tpu.matmul %26, %399, %cst_255 {dimension_numbers = #tpu.dot_dimension_numbers<[1], [0], [0], [1], [0, 0, 1, 1], [], []>} : vector<2x16xbf16>, vector<16x32xbf16>, vector<2x32xf32> -> vector<2x32xf32>
    %401 = vector.broadcast %1 : vector<2x1xf32> to vector<2x32xf32>
    %402 = arith.mulf %400, %401 : vector<2x32xf32>
    %c3 = arith.constant 3 : index
    %403 = memref.load %arg38[%c3] : memref<6xf32, #tpu.memory_space<smem>>
    %c4 = arith.constant 4 : index
    %404 = memref.load %arg38[%c4] : memref<6xf32, #tpu.memory_space<smem>>
    %c5 = arith.constant 5 : index
    %405 = memref.load %arg38[%c5] : memref<6xf32, #tpu.memory_space<smem>>
    %406 = vector.broadcast %403 : f32 to vector<2x32xf32>
    %407 = arith.mulf %406, %398 : vector<2x32xf32>
    %408 = vector.broadcast %404 : f32 to vector<2x32xf32>
    %409 = arith.mulf %408, %402 : vector<2x32xf32>
    %410 = arith.addf %407, %409 : vector<2x32xf32>
    %411 = vector.broadcast %405 : f32 to vector<2x32xf32>
    %412 = arith.addf %410, %411 : vector<2x32xf32>
    %cst_256 = arith.constant 0.000000e+00 : f32
    %413 = vector.broadcast %cst_256 : f32 to vector<2x32xf32>
    %414 = arith.cmpf ogt, %412, %413 : vector<2x32xf32>
    %415 = math.exp %412 : vector<2x32xf32>
    %cst_257 = arith.constant 1.000000e+00 : f32
    %416 = vector.broadcast %cst_257 : f32 to vector<2x32xf32>
    %417 = arith.subf %415, %416 : vector<2x32xf32>
    %cst_258 = arith.constant 1.000000e+00 : f32
    %418 = vector.broadcast %cst_258 : f32 to vector<2x32xf32>
    %419 = arith.mulf %418, %417 : vector<2x32xf32>
    %420 = arith.select %414, %412, %419 : vector<2x32xi1>, vector<2x32xf32>
    %421 = arith.truncf %420 : vector<2x32xf32> to vector<2x32xbf16>
    %cst_259 = arith.constant dense<0.000000e+00> : vector<16x32xf32>
    %422 = tpu.matmul %33, %421, %cst_259 {dimension_numbers = #tpu.dot_dimension_numbers<[1], [0], [0], [1], [0, 0, 1, 1], [], []>} : vector<16x2xbf16>, vector<2x32xbf16>, vector<16x32xf32> -> vector<16x32xf32>
    %423 = arith.addf %379, %422 : vector<16x32xf32>
    %c0_260 = arith.constant 0 : index
    %c0_261 = arith.constant 0 : index
    %424 = vector.load %arg40[%c0_260, %c0_261] : memref<16x40xf32, #tpu.memory_space<vmem>>, vector<16x32xf32>
    tpu.vector_store %arg40[%c0_260, %c0_261], %423 {strides = array<i32>} : memref<16x40xf32, #tpu.memory_space<vmem>>, vector<16x32xf32>,
    %c0_262 = arith.constant 0 : index
    %c32_263 = arith.constant 32 : index
    %425 = vector.load %arg40[%c0_262, %c32_263] : memref<16x40xf32, #tpu.memory_space<vmem>>, vector<16x3xf32>
    tpu.vector_store %arg40[%c0_262, %c32_263], %320 {strides = array<i32>} : memref<16x40xf32, #tpu.memory_space<vmem>>, vector<16x3xf32>,
    %c0_264 = arith.constant 0 : index
    %c0_265 = arith.constant 0 : index
    %426 = vector.load %arg6[%c0_264, %c0_265] : memref<1x32xi32, #tpu.memory_space<vmem>>, vector<1x32xi32>
    %427 = vector.broadcast %426 : vector<1x32xi32> to vector<16x32xi32>
    %428 = arith.cmpi eq, %4, %427 : vector<16x32xi32>
    %cst_266 = arith.constant 1.000000e+00 : f32
    %cst_267 = arith.constant 0.000000e+00 : f32
    %429 = vector.broadcast %cst_266 : f32 to vector<16x32xf32>
    %430 = vector.broadcast %cst_267 : f32 to vector<16x32xf32>
    %431 = arith.select %428, %429, %430 : vector<16x32xi1>, vector<16x32xf32>
    %432 = arith.truncf %431 : vector<16x32xf32> to vector<16x32xbf16>
    %cst_268 = arith.constant dense<0.000000e+00> : vector<16x16xf32>
    %433 = tpu.matmul %432, %11, %cst_268 {dimension_numbers = #tpu.dot_dimension_numbers<[1], [0], [0], [1], [0, 0, 1, 1], [], []>} : vector<16x32xbf16>, vector<32x16xbf16>, vector<16x16xf32> -> vector<16x16xf32>
    %434 = arith.truncf %433 : vector<16x16xf32> to vector<16x16xbf16>
    %c0_269 = arith.constant 0 : index
    %c0_270 = arith.constant 0 : index
    %435 = vector.load %arg40[%c0_269, %c0_270] : memref<16x40xf32, #tpu.memory_space<vmem>>, vector<16x32xf32>
    %436 = arith.truncf %435 : vector<16x32xf32> to vector<16x32xbf16>
    %cst_271 = arith.constant dense<0.000000e+00> : vector<16x32xf32>
    %437 = tpu.matmul %434, %436, %cst_271 {dimension_numbers = #tpu.dot_dimension_numbers<[1], [0], [0], [1], [0, 0, 1, 1], [], []>} : vector<16x16xbf16>, vector<16x32xbf16>, vector<16x32xf32> -> vector<16x32xf32>
    %438 = arith.addf %435, %437 : vector<16x32xf32>
    %439 = arith.truncf %438 : vector<16x32xf32> to vector<16x32xbf16>
    %c0_272 = arith.constant 0 : index
    %c0_273 = arith.constant 0 : index
    %c0_274 = arith.constant 0 : index
    %440 = vector.load %arg26[%c0_272, %c0_273, %c0_274] : memref<2x32x32xbf16, #tpu.memory_space<vmem>>, vector<1x32x32xbf16>
    %441 = vector.shape_cast %440 : vector<1x32x32xbf16> to vector<32x32xbf16>
    %cst_275 = arith.constant dense<0.000000e+00> : vector<16x32xf32>
    %442 = tpu.matmul %439, %441, %cst_275 {dimension_numbers = #tpu.dot_dimension_numbers<[1], [0], [0], [1], [0, 0, 1, 1], [], []>} : vector<16x32xbf16>, vector<32x32xbf16>, vector<16x32xf32> -> vector<16x32xf32>
    %c0_276 = arith.constant 0 : index
    %c0_277 = arith.constant 0 : index
    %c0_278 = arith.constant 0 : index
    %443 = vector.load %arg27[%c0_276, %c0_277, %c0_278] : memref<2x1x32xf32, #tpu.memory_space<vmem>>, vector<1x1x32xf32>
    %444 = vector.shape_cast %443 : vector<1x1x32xf32> to vector<1x32xf32>
    %445 = vector.broadcast %444 : vector<1x32xf32> to vector<16x32xf32>
    %446 = arith.addf %442, %445 : vector<16x32xf32>
    %c0_279 = arith.constant 0 : index
    %c0_280 = arith.constant 0 : index
    %c0_281 = arith.constant 0 : index
    %447 = vector.load %arg28[%c0_279, %c0_280, %c0_281] : memref<2x1x32xf32, #tpu.memory_space<vmem>>, vector<1x1x32xf32>
    %448 = vector.shape_cast %447 : vector<1x1x32xf32> to vector<1x32xf32>
    %c0_282 = arith.constant 0 : index
    %c0_283 = arith.constant 0 : index
    %c0_284 = arith.constant 0 : index
    %449 = vector.load %arg29[%c0_282, %c0_283, %c0_284] : memref<2x1x32xf32, #tpu.memory_space<vmem>>, vector<1x1x32xf32>
    %450 = vector.shape_cast %449 : vector<1x1x32xf32> to vector<1x32xf32>
    %cst_285 = arith.constant dense<0.000000e+00> : vector<32xf32>
    %451 = vector.multi_reduction <add>, %446, %cst_285 [0] : vector<16x32xf32> to vector<32xf32>
    %452 = vector.shape_cast %451 : vector<32xf32> to vector<1x32xf32>
    %cst_286 = arith.constant 6.250000e-02 : f32
    %453 = vector.broadcast %cst_286 : f32 to vector<1x32xf32>
    %454 = arith.mulf %452, %453 : vector<1x32xf32>
    %455 = vector.broadcast %454 : vector<1x32xf32> to vector<16x32xf32>
    %456 = arith.subf %446, %455 : vector<16x32xf32>
    %457 = arith.mulf %456, %456 : vector<16x32xf32>
    %cst_287 = arith.constant dense<0.000000e+00> : vector<32xf32>
    %458 = vector.multi_reduction <add>, %457, %cst_287 [0] : vector<16x32xf32> to vector<32xf32>
    %459 = vector.shape_cast %458 : vector<32xf32> to vector<1x32xf32>
    %cst_288 = arith.constant 6.250000e-02 : f32
    %460 = vector.broadcast %cst_288 : f32 to vector<1x32xf32>
    %461 = arith.mulf %459, %460 : vector<1x32xf32>
    %cst_289 = arith.constant 9.99999974E-6 : f32
    %462 = vector.broadcast %cst_289 : f32 to vector<1x32xf32>
    %463 = arith.addf %461, %462 : vector<1x32xf32>
    %464 = math.rsqrt %463 : vector<1x32xf32>
    %465 = vector.broadcast %464 : vector<1x32xf32> to vector<16x32xf32>
    %466 = arith.mulf %456, %465 : vector<16x32xf32>
    %467 = vector.broadcast %448 : vector<1x32xf32> to vector<16x32xf32>
    %468 = arith.mulf %466, %467 : vector<16x32xf32>
    %469 = vector.broadcast %450 : vector<1x32xf32> to vector<16x32xf32>
    %470 = arith.addf %468, %469 : vector<16x32xf32>
    %cst_290 = arith.constant 0.000000e+00 : f32
    %471 = vector.broadcast %cst_290 : f32 to vector<16x32xf32>
    %472 = arith.maximumf %470, %471 : vector<16x32xf32>
    %473 = arith.truncf %472 : vector<16x32xf32> to vector<16x32xbf16>
    %c0_291 = arith.constant 0 : index
    %c0_292 = arith.constant 0 : index
    %c0_293 = arith.constant 0 : index
    %474 = vector.load %arg30[%c0_291, %c0_292, %c0_293] : memref<2x32x32xbf16, #tpu.memory_space<vmem>>, vector<1x32x32xbf16>
    %475 = vector.shape_cast %474 : vector<1x32x32xbf16> to vector<32x32xbf16>
    %cst_294 = arith.constant dense<0.000000e+00> : vector<16x32xf32>
    %476 = tpu.matmul %473, %475, %cst_294 {dimension_numbers = #tpu.dot_dimension_numbers<[1], [0], [0], [1], [0, 0, 1, 1], [], []>} : vector<16x32xbf16>, vector<32x32xbf16>, vector<16x32xf32> -> vector<16x32xf32>
    %c0_295 = arith.constant 0 : index
    %c0_296 = arith.constant 0 : index
    %c0_297 = arith.constant 0 : index
    %477 = vector.load %arg31[%c0_295, %c0_296, %c0_297] : memref<2x1x32xf32, #tpu.memory_space<vmem>>, vector<1x1x32xf32>
    %478 = vector.shape_cast %477 : vector<1x1x32xf32> to vector<1x32xf32>
    %479 = vector.broadcast %478 : vector<1x32xf32> to vector<16x32xf32>
    %480 = arith.addf %476, %479 : vector<16x32xf32>
    %cst_298 = arith.constant 0.000000e+00 : f32
    %481 = vector.broadcast %cst_298 : f32 to vector<16x32xf32>
    %482 = arith.cmpf ogt, %480, %481 : vector<16x32xf32>
    %483 = math.exp %480 : vector<16x32xf32>
    %cst_299 = arith.constant 1.000000e+00 : f32
    %484 = vector.broadcast %cst_299 : f32 to vector<16x32xf32>
    %485 = arith.subf %483, %484 : vector<16x32xf32>
    %cst_300 = arith.constant 1.000000e-01 : f32
    %486 = vector.broadcast %cst_300 : f32 to vector<16x32xf32>
    %487 = arith.mulf %486, %485 : vector<16x32xf32>
    %488 = arith.select %482, %480, %487 : vector<16x32xi1>, vector<16x32xf32>
    %489 = arith.truncf %488 : vector<16x32xf32> to vector<16x32xbf16>
    %cst_301 = arith.constant dense<0.000000e+00> : vector<16x32xf32>
    %490 = tpu.matmul %434, %489, %cst_301 {dimension_numbers = #tpu.dot_dimension_numbers<[1], [0], [0], [1], [0, 0, 1, 1], [], []>} : vector<16x16xbf16>, vector<16x32xbf16>, vector<16x32xf32> -> vector<16x32xf32>
    %491 = arith.addf %488, %490 : vector<16x32xf32>
    %492 = arith.truncf %491 : vector<16x32xf32> to vector<16x32xbf16>
    %c1_302 = arith.constant 1 : index
    %c0_303 = arith.constant 0 : index
    %c0_304 = arith.constant 0 : index
    %493 = vector.load %arg26[%c1_302, %c0_303, %c0_304] : memref<2x32x32xbf16, #tpu.memory_space<vmem>>, vector<1x32x32xbf16>
    %494 = vector.shape_cast %493 : vector<1x32x32xbf16> to vector<32x32xbf16>
    %cst_305 = arith.constant dense<0.000000e+00> : vector<16x32xf32>
    %495 = tpu.matmul %492, %494, %cst_305 {dimension_numbers = #tpu.dot_dimension_numbers<[1], [0], [0], [1], [0, 0, 1, 1], [], []>} : vector<16x32xbf16>, vector<32x32xbf16>, vector<16x32xf32> -> vector<16x32xf32>
    %c1_306 = arith.constant 1 : index
    %c0_307 = arith.constant 0 : index
    %c0_308 = arith.constant 0 : index
    %496 = vector.load %arg27[%c1_306, %c0_307, %c0_308] : memref<2x1x32xf32, #tpu.memory_space<vmem>>, vector<1x1x32xf32>
    %497 = vector.shape_cast %496 : vector<1x1x32xf32> to vector<1x32xf32>
    %498 = vector.broadcast %497 : vector<1x32xf32> to vector<16x32xf32>
    %499 = arith.addf %495, %498 : vector<16x32xf32>
    %c1_309 = arith.constant 1 : index
    %c0_310 = arith.constant 0 : index
    %c0_311 = arith.constant 0 : index
    %500 = vector.load %arg28[%c1_309, %c0_310, %c0_311] : memref<2x1x32xf32, #tpu.memory_space<vmem>>, vector<1x1x32xf32>
    %501 = vector.shape_cast %500 : vector<1x1x32xf32> to vector<1x32xf32>
    %c1_312 = arith.constant 1 : index
    %c0_313 = arith.constant 0 : index
    %c0_314 = arith.constant 0 : index
    %502 = vector.load %arg29[%c1_312, %c0_313, %c0_314] : memref<2x1x32xf32, #tpu.memory_space<vmem>>, vector<1x1x32xf32>
    %503 = vector.shape_cast %502 : vector<1x1x32xf32> to vector<1x32xf32>
    %cst_315 = arith.constant dense<0.000000e+00> : vector<32xf32>
    %504 = vector.multi_reduction <add>, %499, %cst_315 [0] : vector<16x32xf32> to vector<32xf32>
    %505 = vector.shape_cast %504 : vector<32xf32> to vector<1x32xf32>
    %cst_316 = arith.constant 6.250000e-02 : f32
    %506 = vector.broadcast %cst_316 : f32 to vector<1x32xf32>
    %507 = arith.mulf %505, %506 : vector<1x32xf32>
    %508 = vector.broadcast %507 : vector<1x32xf32> to vector<16x32xf32>
    %509 = arith.subf %499, %508 : vector<16x32xf32>
    %510 = arith.mulf %509, %509 : vector<16x32xf32>
    %cst_317 = arith.constant dense<0.000000e+00> : vector<32xf32>
    %511 = vector.multi_reduction <add>, %510, %cst_317 [0] : vector<16x32xf32> to vector<32xf32>
    %512 = vector.shape_cast %511 : vector<32xf32> to vector<1x32xf32>
    %cst_318 = arith.constant 6.250000e-02 : f32
    %513 = vector.broadcast %cst_318 : f32 to vector<1x32xf32>
    %514 = arith.mulf %512, %513 : vector<1x32xf32>
    %cst_319 = arith.constant 9.99999974E-6 : f32
    %515 = vector.broadcast %cst_319 : f32 to vector<1x32xf32>
    %516 = arith.addf %514, %515 : vector<1x32xf32>
    %517 = math.rsqrt %516 : vector<1x32xf32>
    %518 = vector.broadcast %517 : vector<1x32xf32> to vector<16x32xf32>
    %519 = arith.mulf %509, %518 : vector<16x32xf32>
    %520 = vector.broadcast %501 : vector<1x32xf32> to vector<16x32xf32>
    %521 = arith.mulf %519, %520 : vector<16x32xf32>
    %522 = vector.broadcast %503 : vector<1x32xf32> to vector<16x32xf32>
    %523 = arith.addf %521, %522 : vector<16x32xf32>
    %cst_320 = arith.constant 0.000000e+00 : f32
    %524 = vector.broadcast %cst_320 : f32 to vector<16x32xf32>
    %525 = arith.maximumf %523, %524 : vector<16x32xf32>
    %526 = arith.truncf %525 : vector<16x32xf32> to vector<16x32xbf16>
    %c1_321 = arith.constant 1 : index
    %c0_322 = arith.constant 0 : index
    %c0_323 = arith.constant 0 : index
    %527 = vector.load %arg30[%c1_321, %c0_322, %c0_323] : memref<2x32x32xbf16, #tpu.memory_space<vmem>>, vector<1x32x32xbf16>
    %528 = vector.shape_cast %527 : vector<1x32x32xbf16> to vector<32x32xbf16>
    %cst_324 = arith.constant dense<0.000000e+00> : vector<16x32xf32>
    %529 = tpu.matmul %526, %528, %cst_324 {dimension_numbers = #tpu.dot_dimension_numbers<[1], [0], [0], [1], [0, 0, 1, 1], [], []>} : vector<16x32xbf16>, vector<32x32xbf16>, vector<16x32xf32> -> vector<16x32xf32>
    %c1_325 = arith.constant 1 : index
    %c0_326 = arith.constant 0 : index
    %c0_327 = arith.constant 0 : index
    %530 = vector.load %arg31[%c1_325, %c0_326, %c0_327] : memref<2x1x32xf32, #tpu.memory_space<vmem>>, vector<1x1x32xf32>
    %531 = vector.shape_cast %530 : vector<1x1x32xf32> to vector<1x32xf32>
    %532 = vector.broadcast %531 : vector<1x32xf32> to vector<16x32xf32>
    %533 = arith.addf %529, %532 : vector<16x32xf32>
    %cst_328 = arith.constant 0.000000e+00 : f32
    %534 = vector.broadcast %cst_328 : f32 to vector<16x32xf32>
    %535 = arith.cmpf ogt, %533, %534 : vector<16x32xf32>
    %536 = math.exp %533 : vector<16x32xf32>
    %cst_329 = arith.constant 1.000000e+00 : f32
    %537 = vector.broadcast %cst_329 : f32 to vector<16x32xf32>
    %538 = arith.subf %536, %537 : vector<16x32xf32>
    %cst_330 = arith.constant 1.000000e-01 : f32
    %539 = vector.broadcast %cst_330 : f32 to vector<16x32xf32>
    %540 = arith.mulf %539, %538 : vector<16x32xf32>
    %541 = arith.select %535, %533, %540 : vector<16x32xi1>, vector<16x32xf32>
    %542 = arith.truncf %541 : vector<16x32xf32> to vector<16x32xbf16>
    %cst_331 = arith.constant dense<0.000000e+00> : vector<2x32xf32>
    %543 = tpu.matmul %26, %542, %cst_331 {dimension_numbers = #tpu.dot_dimension_numbers<[1], [0], [0], [1], [0, 0, 1, 1], [], []>} : vector<2x16xbf16>, vector<16x32xbf16>, vector<2x32xf32> -> vector<2x32xf32>
    %544 = vector.broadcast %1 : vector<2x1xf32> to vector<2x32xf32>
    %545 = arith.mulf %543, %544 : vector<2x32xf32>
    %cst_332 = arith.constant 0.000000e+00 : f32
    %546 = vector.broadcast %cst_332 : f32 to vector<2x32xf32>
    %c0_i32_333 = arith.constant 0 : i32
    %c2_i32_334 = arith.constant 2 : i32
    %547 = arith.addi %c0_i32_333, %c2_i32_334 : i32
    %c1_i32_335 = arith.constant 1 : i32
    %548 = scf.for %arg45 = %c0_i32_333 to %547 step %c1_i32_335 iter_args(%arg46 = %546) -> (vector<2x32xf32>)  : i32 {
      %611 = vector.broadcast %arg45 : i32 to vector<16x1xi32>
      %612 = arith.cmpi eq, %2, %611 : vector<16x1xi32>
      %cst_374 = arith.constant -3.000000e+38 : f32
      %613 = vector.shape_cast %612 : vector<16x1xi1> to vector<16x1xi1>
      %614 = vector.broadcast %613 : vector<16x1xi1> to vector<16x32xi1>
      %615 = vector.broadcast %cst_374 : f32 to vector<16x32xf32>
      %616 = arith.select %614, %541, %615 : vector<16x32xi1>, vector<16x32xf32>
      %cst_375 = arith.constant dense<0xFF800000> : vector<32xf32>
      %617 = vector.multi_reduction <maximumf>, %616, %cst_375 [0] : vector<16x32xf32> to vector<32xf32>
      %618 = vector.shape_cast %617 : vector<32xf32> to vector<1x32xf32>
      %619 = vector.broadcast %arg45 : i32 to vector<2x1xi32>
      %620 = arith.cmpi eq, %34, %619 : vector<2x1xi32>
      %cst_376 = arith.constant 1.000000e+00 : f32
      %cst_377 = arith.constant 0.000000e+00 : f32
      %621 = vector.broadcast %cst_376 : f32 to vector<2x1xf32>
      %622 = vector.broadcast %cst_377 : f32 to vector<2x1xf32>
      %623 = arith.select %620, %621, %622 : vector<2x1xi1>, vector<2x1xf32>
      %624 = vector.broadcast %623 : vector<2x1xf32> to vector<2x32xf32>
      %625 = vector.broadcast %618 : vector<1x32xf32> to vector<2x32xf32>
      %626 = arith.mulf %624, %625 : vector<2x32xf32>
      %627 = arith.addf %arg46, %626 : vector<2x32xf32>
      scf.yield %627 : vector<2x32xf32>
    }
    %c2_i32_336 = arith.constant 2 : i32
    %549 = arith.truncf %545 : vector<2x32xf32> to vector<2x32xbf16>
    %c0_337 = arith.constant 0 : index
    %c0_338 = arith.constant 0 : index
    %550 = vector.load %arg44[%c0_337, %c0_338] : memref<2x72xbf16, #tpu.memory_space<vmem>>, vector<2x32xbf16>
    tpu.vector_store %arg44[%c0_337, %c0_338], %549 {strides = array<i32>} : memref<2x72xbf16, #tpu.memory_space<vmem>>, vector<2x32xbf16>,
    %551 = arith.truncf %548 : vector<2x32xf32> to vector<2x32xbf16>
    %c0_339 = arith.constant 0 : index
    %c32_340 = arith.constant 32 : index
    %552 = vector.load %arg44[%c0_339, %c32_340] : memref<2x72xbf16, #tpu.memory_space<vmem>>, vector<2x32xbf16>
    tpu.vector_store %arg44[%c0_339, %c32_340], %551 {strides = array<i32>} : memref<2x72xbf16, #tpu.memory_space<vmem>>, vector<2x32xbf16>,
    %c0_341 = arith.constant 0 : index
    %c0_342 = arith.constant 0 : index
    %553 = vector.load %arg2[%c0_341, %c0_342] : memref<2x4xf32, #tpu.memory_space<vmem>>, vector<2x4xf32>
    %554 = arith.truncf %553 : vector<2x4xf32> to vector<2x4xbf16>
    %c0_343 = arith.constant 0 : index
    %c64_344 = arith.constant 64 : index
    %555 = vector.load %arg44[%c0_343, %c64_344] : memref<2x72xbf16, #tpu.memory_space<vmem>>, vector<2x4xbf16>
    tpu.vector_store %arg44[%c0_343, %c64_344], %554 {strides = array<i32>} : memref<2x72xbf16, #tpu.memory_space<vmem>>, vector<2x4xbf16>,
    %c0_345 = arith.constant 0 : index
    %c0_346 = arith.constant 0 : index
    %556 = vector.load %arg44[%c0_345, %c0_346] : memref<2x72xbf16, #tpu.memory_space<vmem>>, vector<2x72xbf16>
    %c0_347 = arith.constant 0 : index
    %c0_348 = arith.constant 0 : index
    %557 = vector.load %arg32[%c0_347, %c0_348] : memref<72x32xbf16, #tpu.memory_space<vmem>>, vector<72x32xbf16>
    %cst_349 = arith.constant dense<0.000000e+00> : vector<2x32xf32>
    %558 = tpu.matmul %556, %557, %cst_349 {dimension_numbers = #tpu.dot_dimension_numbers<[1], [0], [0], [1], [0, 0, 1, 1], [], []>} : vector<2x72xbf16>, vector<72x32xbf16>, vector<2x32xf32> -> vector<2x32xf32>
    %c0_350 = arith.constant 0 : index
    %c0_351 = arith.constant 0 : index
    %559 = vector.load %arg33[%c0_350, %c0_351] : memref<1x32xf32, #tpu.memory_space<vmem>>, vector<1x32xf32>
    %560 = vector.broadcast %559 : vector<1x32xf32> to vector<2x32xf32>
    %561 = arith.addf %558, %560 : vector<2x32xf32>
    %cst_352 = arith.constant 0.000000e+00 : f32
    %562 = vector.broadcast %cst_352 : f32 to vector<2x32xf32>
    %563 = arith.cmpf ogt, %561, %562 : vector<2x32xf32>
    %564 = math.exp %561 : vector<2x32xf32>
    %cst_353 = arith.constant 1.000000e+00 : f32
    %565 = vector.broadcast %cst_353 : f32 to vector<2x32xf32>
    %566 = arith.subf %564, %565 : vector<2x32xf32>
    %cst_354 = arith.constant 1.000000e-01 : f32
    %567 = vector.broadcast %cst_354 : f32 to vector<2x32xf32>
    %568 = arith.mulf %567, %566 : vector<2x32xf32>
    %569 = arith.select %563, %561, %568 : vector<2x32xi1>, vector<2x32xf32>
    %c0_355 = arith.constant 0 : index
    %c0_356 = arith.constant 0 : index
    %570 = vector.load %arg34[%c0_355, %c0_356] : memref<1x32xf32, #tpu.memory_space<vmem>>, vector<1x32xf32>
    %c0_357 = arith.constant 0 : index
    %c0_358 = arith.constant 0 : index
    %571 = vector.load %arg35[%c0_357, %c0_358] : memref<1x32xf32, #tpu.memory_space<vmem>>, vector<1x32xf32>
    %cst_359 = arith.constant dense<0.000000e+00> : vector<32xf32>
    %572 = vector.multi_reduction <add>, %569, %cst_359 [0] : vector<2x32xf32> to vector<32xf32>
    %573 = vector.shape_cast %572 : vector<32xf32> to vector<1x32xf32>
    %cst_360 = arith.constant 5.000000e-01 : f32
    %574 = vector.broadcast %cst_360 : f32 to vector<1x32xf32>
    %575 = arith.mulf %573, %574 : vector<1x32xf32>
    %576 = vector.broadcast %575 : vector<1x32xf32> to vector<2x32xf32>
    %577 = arith.subf %569, %576 : vector<2x32xf32>
    %578 = arith.mulf %577, %577 : vector<2x32xf32>
    %cst_361 = arith.constant dense<0.000000e+00> : vector<32xf32>
    %579 = vector.multi_reduction <add>, %578, %cst_361 [0] : vector<2x32xf32> to vector<32xf32>
    %580 = vector.shape_cast %579 : vector<32xf32> to vector<1x32xf32>
    %cst_362 = arith.constant 5.000000e-01 : f32
    %581 = vector.broadcast %cst_362 : f32 to vector<1x32xf32>
    %582 = arith.mulf %580, %581 : vector<1x32xf32>
    %cst_363 = arith.constant 9.99999974E-6 : f32
    %583 = vector.broadcast %cst_363 : f32 to vector<1x32xf32>
    %584 = arith.addf %582, %583 : vector<1x32xf32>
    %585 = math.rsqrt %584 : vector<1x32xf32>
    %586 = vector.broadcast %585 : vector<1x32xf32> to vector<2x32xf32>
    %587 = arith.mulf %577, %586 : vector<2x32xf32>
    %588 = vector.broadcast %570 : vector<1x32xf32> to vector<2x32xf32>
    %589 = arith.mulf %587, %588 : vector<2x32xf32>
    %590 = vector.broadcast %571 : vector<1x32xf32> to vector<2x32xf32>
    %591 = arith.addf %589, %590 : vector<2x32xf32>
    %592 = arith.truncf %591 : vector<2x32xf32> to vector<2x32xbf16>
    %c0_364 = arith.constant 0 : index
    %c0_365 = arith.constant 0 : index
    %593 = vector.load %arg36[%c0_364, %c0_365] : memref<32x128xbf16, #tpu.memory_space<vmem>>, vector<32x128xbf16>
    %cst_366 = arith.constant dense<0.000000e+00> : vector<2x128xf32>
    %594 = tpu.matmul %592, %593, %cst_366 {dimension_numbers = #tpu.dot_dimension_numbers<[1], [0], [0], [1], [0, 0, 1, 1], [], []>} : vector<2x32xbf16>, vector<32x128xbf16>, vector<2x128xf32> -> vector<2x128xf32>
    %c0_367 = arith.constant 0 : index
    %c0_368 = arith.constant 0 : index
    %595 = vector.load %arg37[%c0_367, %c0_368] : memref<1x128xf32, #tpu.memory_space<vmem>>, vector<1x128xf32>
    %596 = vector.broadcast %595 : vector<1x128xf32> to vector<2x128xf32>
    %597 = arith.addf %594, %596 : vector<2x128xf32>
    %cst_369 = arith.constant dense<0xFF800000> : vector<2xf32>
    %598 = vector.multi_reduction <maximumf>, %597, %cst_369 [1] : vector<2x128xf32> to vector<2xf32>
    %599 = vector.shape_cast %598 : vector<2xf32> to vector<2x1xf32>
    %600 = vector.broadcast %599 : vector<2x1xf32> to vector<2x128xf32>
    %601 = arith.subf %597, %600 : vector<2x128xf32>
    %cst_370 = arith.constant -8.000000e+01 : f32
    %602 = vector.broadcast %cst_370 : f32 to vector<2x128xf32>
    %603 = arith.maximumf %601, %602 : vector<2x128xf32>
    %604 = math.exp %603 : vector<2x128xf32>
    %cst_371 = arith.constant dense<0.000000e+00> : vector<2xf32>
    %605 = vector.multi_reduction <add>, %604, %cst_371 [1] : vector<2x128xf32> to vector<2xf32>
    %606 = vector.shape_cast %605 : vector<2xf32> to vector<2x1xf32>
    %607 = tpu.reciprocal %606 {approx = true} : vector<2x1xf32> -> vector<2x1xf32>
    %608 = vector.broadcast %607 : vector<2x1xf32> to vector<2x128xf32>
    %609 = arith.mulf %604, %608 : vector<2x128xf32>
    %c0_372 = arith.constant 0 : index
    %c0_373 = arith.constant 0 : index
    %610 = vector.load %arg39[%c0_372, %c0_373] : memref<2x128xf32, #tpu.memory_space<vmem>>, vector<2x128xf32>
    tpu.vector_store %arg39[%c0_372, %c0_373], %609 {strides = array<i32>} : memref<2x128xf32, #tpu.memory_space<vmem>>, vector<2x128xf32>,
    return
  }
}

</mosaic_0001>

<llo_original>
// kernel: egnn_forward.1
$region0: #{egnn_forward.1}
  #allocation0 [shape = 'u32[]', space=smem, size = 0x4, offset = 0x4, fixed_abs, tag = 'smem constant byte address 0x4 - core index']
  #allocation1 [shape = 'u32[144,128]{1,0:T(1,128)}', space=vmem, size = 0x12000, scoped, tag = 'internal scratch']
  #allocation2 [shape = 'f32[16,40]{1,0:T(8,128)}', space=vmem, size = 0x2000, scoped, tag = 'scratch operand']
  #allocation3 [shape = 'bf16[32,40]{1,0:T(16,128)(2,1)}', space=vmem, size = 0x2000, scoped, tag = 'scratch operand']
  #allocation4 [shape = 'bf16[32,72]{1,0:T(16,128)(2,1)}', space=vmem, size = 0x2000, scoped, tag = 'scratch operand']
  #allocation5 [shape = 'bf16[16,64]{1,0:T(16,128)(2,1)}', space=vmem, size = 0x1000, scoped, tag = 'scratch operand']
  #allocation6 [shape = 'bf16[2,72]{1,0:T(2,128)(2,1)}', space=vmem, size = 0x200, scoped, tag = 'scratch operand']
  %s0 = inlined_call_operand.smem [shape: u32[40], index: -1, kind: input, shape index: {}]
  %s1 = sld [smem:[%s0]]
  %s2 = scalar_lea.smem %s0, 1
  %s3 = sld [smem:[%s2]]
  %s4 = scalar_lea.smem %s0, 2
  %s5 = sld [smem:[%s4]]
  %s6 = scalar_lea.smem %s0, 3
  %s7 = sld [smem:[%s6]]
  %s8 = scalar_lea.smem %s0, 4
  %s9 = sld [smem:[%s8]]
  %s10 = scalar_lea.smem %s0, 5
  %s11 = sld [smem:[%s10]]
  %s12 = scalar_lea.smem %s0, 6
  %s13 = sld [smem:[%s12]]
  %s14 = scalar_lea.smem %s0, 7
  %s15 = sld [smem:[%s14]]
  %s16 = scalar_lea.smem %s0, 8
  %s17 = sld [smem:[%s16]]
  %s18 = scalar_lea.smem %s0, 9
  %s19 = sld [smem:[%s18]]
  %s20 = scalar_lea.smem %s0, 10
  %s21 = sld [smem:[%s20]]
  %s22 = scalar_lea.smem %s0, 11
  %s23 = sld [smem:[%s22]]
  %s24 = scalar_lea.smem %s0, 12
  %s25 = sld [smem:[%s24]]
  %s26 = scalar_lea.smem %s0, 13
  %s27 = sld [smem:[%s26]]
  %s28 = scalar_lea.smem %s0, 14
  %s29 = sld [smem:[%s28]]
  %s30 = scalar_lea.smem %s0, 15
  %s31 = sld [smem:[%s30]]
  %s32 = scalar_lea.smem %s0, 16
  %s33 = sld [smem:[%s32]]
  %s34 = scalar_lea.smem %s0, 17
  %s35 = sld [smem:[%s34]]
  %s36 = scalar_lea.smem %s0, 18
  %s37 = sld [smem:[%s36]]
  %s38 = scalar_lea.smem %s0, 19
  %s39 = sld [smem:[%s38]]
  %s40 = scalar_lea.smem %s0, 20
  %s41 = sld [smem:[%s40]]
  %s42 = scalar_lea.smem %s0, 21
  %s43 = sld [smem:[%s42]]
  %s44 = scalar_lea.smem %s0, 22
  %s45 = sld [smem:[%s44]]
  %s46 = scalar_lea.smem %s0, 23
  %s47 = sld [smem:[%s46]]
  %s48 = scalar_lea.smem %s0, 24
  %s49 = sld [smem:[%s48]]
  %s50 = scalar_lea.smem %s0, 25
  %s51 = sld [smem:[%s50]]
  %s52 = scalar_lea.smem %s0, 26
  %s53 = sld [smem:[%s52]]
  %s54 = scalar_lea.smem %s0, 27
  %s55 = sld [smem:[%s54]]
  %s56 = scalar_lea.smem %s0, 28
  %s57 = sld [smem:[%s56]]
  %s58 = scalar_lea.smem %s0, 29
  %s59 = sld [smem:[%s58]]
  %s60 = scalar_lea.smem %s0, 30
  %s61 = sld [smem:[%s60]]
  %s62 = scalar_lea.smem %s0, 31
  %s63 = sld [smem:[%s62]]
  %s64 = scalar_lea.smem %s0, 32
  %s65 = sld [smem:[%s64]]
  %s66 = scalar_lea.smem %s0, 33
  %s67 = sld [smem:[%s66]]
  %s68 = scalar_lea.smem %s0, 34
  %s69 = sld [smem:[%s68]]
  %s70 = scalar_lea.smem %s0, 35
  %s71 = sld [smem:[%s70]]
  %s72 = scalar_lea.smem %s0, 36
  %s73 = sld [smem:[%s72]]
  %s74 = scalar_lea.smem %s0, 37
  %s75 = sld [smem:[%s74]]
  %s76 = scalar_lea.smem %s0, 38
  %s77 = sld [smem:[%s76]]
  %s78 = scalar_lea.smem %s0, 39
  %s79 = sld [smem:[%s78]]
  %s80 = sld [smem:[#allocation0]]
  $region191: #{egnn_forward.1} parent=0
    _
  %s82 = ssub.s32 1, %s80
  %s83 = scalar_select 0, %s82, %s80
  $region1: #{egnn_forward.1} parent=0
    #allocation7 [shape = 'u8[512]{0}', space=smem, size = 0x200, scoped, tag = 'input window, operand 38, single buffered']
    #allocation8 [shape = 's32[1]{0}', space=sflag, size = 0x4, scoped, tag = 'scoped memory for egnn_forward.1']
    #allocation9 [shape = 's32[1]{0}', space=sflag, size = 0x4, scoped, tag = 'scoped memory for egnn_forward.1']
    #allocation10 [shape = 'u8[1024]{0}', space=vmem, size = 0x400, scoped, tag = 'output window, operand 0, single buffered']
    %84 = vsyncpa [#allocation9], 0
    %85 = vsyncpa [#allocation8], 0
    // Predicated region
    $region2: #{egnn_forward.1} parent=1 // pred_check
      _
    $region3: #{egnn_forward.1} parent=1 // pred_check_branch
      %87 = sbr.rel (0) target = $region5
    $region4: #{egnn_forward.1} parent=1 // pred_region
      _
    $region5: #{egnn_forward.1} parent=1 // pred_fallthru
      _
    // Predicated region
    $region6: #{egnn_forward.1} parent=1 // pred_check
      _
    $region7: #{egnn_forward.1} parent=1 // pred_check_branch
      %89 = sbr.rel (0) target = $region9
    $region8: #{egnn_forward.1} parent=1 // pred_region
      _
    $region9: #{egnn_forward.1} parent=1 // pred_fallthru
      _
    // Predicated region
    $region10: #{egnn_forward.1} parent=1 // pred_check
      _
    $region11: #{egnn_forward.1} parent=1 // pred_check_branch
      %91 = sbr.rel (0) target = $region13
    $region12: #{egnn_forward.1} parent=1 // pred_region
      _
    $region13: #{egnn_forward.1} parent=1 // pred_fallthru
      _
    // Predicated region
    $region14: #{egnn_forward.1} parent=1 // pred_check
      _
    $region15: #{egnn_forward.1} parent=1 // pred_check_branch
      %93 = sbr.rel (0) target = $region17
    $region16: #{egnn_forward.1} parent=1 // pred_region
      _
    $region17: #{egnn_forward.1} parent=1 // pred_fallthru
      _
    // Predicated region
    $region18: #{egnn_forward.1} parent=1 // pred_check
      _
    $region19: #{egnn_forward.1} parent=1 // pred_check_branch
      %95 = sbr.rel (0) target = $region21
    $region20: #{egnn_forward.1} parent=1 // pred_region
      _
    $region21: #{egnn_forward.1} parent=1 // pred_fallthru
      _
    // Predicated region
    $region22: #{egnn_forward.1} parent=1 // pred_check
      _
    $region23: #{egnn_forward.1} parent=1 // pred_check_branch
      %97 = sbr.rel (0) target = $region25
    $region24: #{egnn_forward.1} parent=1 // pred_region
      _
    $region25: #{egnn_forward.1} parent=1 // pred_fallthru
      _
    // Predicated region
    $region26: #{egnn_forward.1} parent=1 // pred_check
      _
    $region27: #{egnn_forward.1} parent=1 // pred_check_branch
      %99 = sbr.rel (0) target = $region29
    $region28: #{egnn_forward.1} parent=1 // pred_region
      _
    $region29: #{egnn_forward.1} parent=1 // pred_fallthru
      _
    // Predicated region
    $region30: #{egnn_forward.1} parent=1 // pred_check
      _
    $region31: #{egnn_forward.1} parent=1 // pred_check_branch
      %101 = sbr.rel (0) target = $region33
    $region32: #{egnn_forward.1} parent=1 // pred_region
      _
    $region33: #{egnn_forward.1} parent=1 // pred_fallthru
      _
    // Predicated region
    $region34: #{egnn_forward.1} parent=1 // pred_check
      _
    $region35: #{egnn_forward.1} parent=1 // pred_check_branch
      %103 = sbr.rel (0) target = $region37
    $region36: #{egnn_forward.1} parent=1 // pred_region
      _
    $region37: #{egnn_forward.1} parent=1 // pred_fallthru
      _
    // Predicated region
    $region38: #{egnn_forward.1} parent=1 // pred_check
      _
    $region39: #{egnn_forward.1} parent=1 // pred_check_branch
      %105 = sbr.rel (0) target = $region41
    $region40: #{egnn_forward.1} parent=1 // pred_region
      _
    $region41: #{egnn_forward.1} parent=1 // pred_fallthru
      _
    // Predicated region
    $region42: #{egnn_forward.1} parent=1 // pred_check
      _
    $region43: #{egnn_forward.1} parent=1 // pred_check_branch
      %107 = sbr.rel (0) target = $region45
    $region44: #{egnn_forward.1} parent=1 // pred_region
      _
    $region45: #{egnn_forward.1} parent=1 // pred_fallthru
      _
    // Predicated region
    $region46: #{egnn_forward.1} parent=1 // pred_check
      _
    $region47: #{egnn_forward.1} parent=1 // pred_check_branch
      %109 = sbr.rel (0) target = $region49
    $region48: #{egnn_forward.1} parent=1 // pred_region
      _
    $region49: #{egnn_forward.1} parent=1 // pred_fallthru
      _
    // Predicated region
    $region50: #{egnn_forward.1} parent=1 // pred_check
      _
    $region51: #{egnn_forward.1} parent=1 // pred_check_branch
      %111 = sbr.rel (0) target = $region53
    $region52: #{egnn_forward.1} parent=1 // pred_region
      _
    $region53: #{egnn_forward.1} parent=1 // pred_fallthru
      _
    // Predicated region
    $region54: #{egnn_forward.1} parent=1 // pred_check
      _
    $region55: #{egnn_forward.1} parent=1 // pred_check_branch
      %113 = sbr.rel (0) target = $region57
    $region56: #{egnn_forward.1} parent=1 // pred_region
      _
    $region57: #{egnn_forward.1} parent=1 // pred_fallthru
      _
    // Predicated region
    $region58: #{egnn_forward.1} parent=1 // pred_check
      _
    $region59: #{egnn_forward.1} parent=1 // pred_check_branch
      %115 = sbr.rel (0) target = $region61
    $region60: #{egnn_forward.1} parent=1 // pred_region
      _
    $region61: #{egnn_forward.1} parent=1 // pred_fallthru
      _
    // Predicated region
    $region62: #{egnn_forward.1} parent=1 // pred_check
      _
    $region63: #{egnn_forward.1} parent=1 // pred_check_branch
      %117 = sbr.rel (0) target = $region65
    $region64: #{egnn_forward.1} parent=1 // pred_region
      _
    $region65: #{egnn_forward.1} parent=1 // pred_fallthru
      _
    // Predicated region
    $region66: #{egnn_forward.1} parent=1 // pred_check
      _
    $region67: #{egnn_forward.1} parent=1 // pred_check_branch
      %119 = sbr.rel (0) target = $region69
    $region68: #{egnn_forward.1} parent=1 // pred_region
      _
    $region69: #{egnn_forward.1} parent=1 // pred_fallthru
      _
    // Predicated region
    $region70: #{egnn_forward.1} parent=1 // pred_check
      _
    $region71: #{egnn_forward.1} parent=1 // pred_check_branch
      %121 = sbr.rel (0) target = $region73
    $region72: #{egnn_forward.1} parent=1 // pred_region
      _
    $region73: #{egnn_forward.1} parent=1 // pred_fallthru
      _
    // Predicated region
    $region74: #{egnn_forward.1} parent=1 // pred_check
      _
    $region75: #{egnn_forward.1} parent=1 // pred_check_branch
      %123 = sbr.rel (0) target = $region77
    $region76: #{egnn_forward.1} parent=1 // pred_region
      _
    $region77: #{egnn_forward.1} parent=1 // pred_fallthru
      _
    // Predicated region
    $region78: #{egnn_forward.1} parent=1 // pred_check
      _
    $region79: #{egnn_forward.1} parent=1 // pred_check_branch
      %125 = sbr.rel (0) target = $region81
    $region80: #{egnn_forward.1} parent=1 // pred_region
      _
    $region81: #{egnn_forward.1} parent=1 // pred_fallthru
      _
    // Predicated region
    $region82: #{egnn_forward.1} parent=1 // pred_check
      _
    $region83: #{egnn_forward.1} parent=1 // pred_check_branch
      %127 = sbr.rel (0) target = $region85
    $region84: #{egnn_forward.1} parent=1 // pred_region
      _
    $region85: #{egnn_forward.1} parent=1 // pred_fallthru
      _
    // Predicated region
    $region86: #{egnn_forward.1} parent=1 // pred_check
      _
    $region87: #{egnn_forward.1} parent=1 // pred_check_branch
      %129 = sbr.rel (0) target = $region89
    $region88: #{egnn_forward.1} parent=1 // pred_region
      _
    $region89: #{egnn_forward.1} parent=1 // pred_fallthru
      _
    // Predicated region
    $region90: #{egnn_forward.1} parent=1 // pred_check
      _
    $region91: #{egnn_forward.1} parent=1 // pred_check_branch
      %131 = sbr.rel (0) target = $region93
    $region92: #{egnn_forward.1} parent=1 // pred_region
      _
    $region93: #{egnn_forward.1} parent=1 // pred_fallthru
      _
    // Predicated region
    $region94: #{egnn_forward.1} parent=1 // pred_check
      _
    $region95: #{egnn_forward.1} parent=1 // pred_check_branch
      %133 = sbr.rel (0) target = $region97
    $region96: #{egnn_forward.1} parent=1 // pred_region
      _
    $region97: #{egnn_forward.1} parent=1 // pred_fallthru
      _
    // Predicated region
    $region98: #{egnn_forward.1} parent=1 // pred_check
      _
    $region99: #{egnn_forward.1} parent=1 // pred_check_branch
      %135 = sbr.rel (0) target = $region101
    $region100: #{egnn_forward.1} parent=1 // pred_region
      _
    $region101: #{egnn_forward.1} parent=1 // pred_fallthru
      _
    // Predicated region
    $region102: #{egnn_forward.1} parent=1 // pred_check
      _
    $region103: #{egnn_forward.1} parent=1 // pred_check_branch
      %137 = sbr.rel (0) target = $region105
    $region104: #{egnn_forward.1} parent=1 // pred_region
      _
    $region105: #{egnn_forward.1} parent=1 // pred_fallthru
      _
    // Predicated region
    $region106: #{egnn_forward.1} parent=1 // pred_check
      _
    $region107: #{egnn_forward.1} parent=1 // pred_check_branch
      %139 = sbr.rel (0) target = $region109
    $region108: #{egnn_forward.1} parent=1 // pred_region
      _
    $region109: #{egnn_forward.1} parent=1 // pred_fallthru
      _
    // Predicated region
    $region110: #{egnn_forward.1} parent=1 // pred_check
      _
    $region111: #{egnn_forward.1} parent=1 // pred_check_branch
      %141 = sbr.rel (0) target = $region113
    $region112: #{egnn_forward.1} parent=1 // pred_region
      _
    $region113: #{egnn_forward.1} parent=1 // pred_fallthru
      _
    // Predicated region
    $region114: #{egnn_forward.1} parent=1 // pred_check
      _
    $region115: #{egnn_forward.1} parent=1 // pred_check_branch
      %143 = sbr.rel (0) target = $region117
    $region116: #{egnn_forward.1} parent=1 // pred_region
      _
    $region117: #{egnn_forward.1} parent=1 // pred_fallthru
      _
    // Predicated region
    $region118: #{egnn_forward.1} parent=1 // pred_check
      _
    $region119: #{egnn_forward.1} parent=1 // pred_check_branch
      %145 = sbr.rel (0) target = $region121
    $region120: #{egnn_forward.1} parent=1 // pred_region
      _
    $region121: #{egnn_forward.1} parent=1 // pred_fallthru
      _
    // Predicated region
    $region122: #{egnn_forward.1} parent=1 // pred_check
      _
    $region123: #{egnn_forward.1} parent=1 // pred_check_branch
      %147 = sbr.rel (0) target = $region125
    $region124: #{egnn_forward.1} parent=1 // pred_region
      _
    $region125: #{egnn_forward.1} parent=1 // pred_fallthru
      _
    // Predicated region
    $region126: #{egnn_forward.1} parent=1 // pred_check
      _
    $region127: #{egnn_forward.1} parent=1 // pred_check_branch
      %149 = sbr.rel (0) target = $region129
    $region128: #{egnn_forward.1} parent=1 // pred_region
      _
    $region129: #{egnn_forward.1} parent=1 // pred_fallthru
      _
    // Predicated region
    $region130: #{egnn_forward.1} parent=1 // pred_check
      _
    $region131: #{egnn_forward.1} parent=1 // pred_check_branch
      %151 = sbr.rel (0) target = $region133
    $region132: #{egnn_forward.1} parent=1 // pred_region
      _
    $region133: #{egnn_forward.1} parent=1 // pred_fallthru
      _
    // Predicated region
    $region134: #{egnn_forward.1} parent=1 // pred_check
      _
    $region135: #{egnn_forward.1} parent=1 // pred_check_branch
      %153 = sbr.rel (0) target = $region137
    $region136: #{egnn_forward.1} parent=1 // pred_region
      _
    $region137: #{egnn_forward.1} parent=1 // pred_fallthru
      _
    // Predicated region
    $region138: #{egnn_forward.1} parent=1 // pred_check
      _
    $region139: #{egnn_forward.1} parent=1 // pred_check_branch
      %155 = sbr.rel (0) target = $region141
    $region140: #{egnn_forward.1} parent=1 // pred_region
      _
    $region141: #{egnn_forward.1} parent=1 // pred_fallthru
      _
    // Predicated region
    $region142: #{egnn_forward.1} parent=1 // pred_check
      _
    $region143: #{egnn_forward.1} parent=1 // pred_check_branch
      %157 = sbr.rel (0) target = $region145
    $region144: #{egnn_forward.1} parent=1 // pred_region
      _
    $region145: #{egnn_forward.1} parent=1 // pred_fallthru
      _
    // Predicated region
    $region146: #{egnn_forward.1} parent=1 // pred_check
      _
    $region147: #{egnn_forward.1} parent=1 // pred_check_branch
      %159 = sbr.rel (0) target = $region149
    $region148: #{egnn_forward.1} parent=1 // pred_region
      _
    $region149: #{egnn_forward.1} parent=1 // pred_fallthru
      _
    // Predicated region
    $region150: #{egnn_forward.1} parent=1 // pred_check
      _
    $region151: #{egnn_forward.1} parent=1 // pred_check_branch
      %161 = sbr.rel (0) target = $region153
    $region152: #{egnn_forward.1} parent=1 // pred_region
      _
    $region153: #{egnn_forward.1} parent=1 // pred_fallthru
      _
    // Predicated region
    $region154: #{egnn_forward.1} parent=1 // pred_check
      _
    $region155: #{egnn_forward.1} parent=1 // pred_check_branch
      %163 = sbr.rel (0) target = $region157
    $region156: #{egnn_forward.1} parent=1 // pred_region
      %s165 = ssub.s32 16, 16
      %166 = vsyncadd [#allocation9], %s165
      %s168 = sshll.u32 %s77, 4
      %s169 = int_to_ptr.vmem [resolvable:$true] %s168
      %171 = dma.vmem_to_smem %s169, 16, [#allocation7], [#allocation9]
    $region157: #{egnn_forward.1} parent=1 // pred_fallthru
      _
    // Predicated region
    $region158: #{egnn_forward.1} parent=1 // pred_check
      _
    $region159: #{egnn_forward.1} parent=1 // pred_check_branch
      %173 = sbr.rel (0) target = $region161
    $region160: #{egnn_forward.1} parent=1 // pred_region
      %174 = dma.done [#allocation9], 16
    $region161: #{egnn_forward.1} parent=1 // pred_fallthru
      _
    %175 = sfence
    %v177 = vld [vmem:[%s19] sm:$0xff]
    %v178 = vld [vmem:[%s19 + $0x8] sm:$0xff]
    %v179 = vld [vmem:[%s21] sm:$0x3]
    %v180 = vld [vmem:[%s15] sm:$0xff]
    %v181 = vld [vmem:[%s15 + $0x8] sm:$0xff]
    %v182 = vlaneseq
    %v183 = vand.u32 %v182, 127
    %v184 = vlaneseq
    %v185 = vshrl.u32 %v184, 7
    %v186 = vadd.s32 %v185, 8
    %v187 = vld [vmem:[%s7] sm:$0xff]
    %v188 = vld [vmem:[%s7 + $0x8] sm:$0xff]
    %v189 = vld [vmem:[%s7 + $0x10] sm:$0xff]
    %v190 = vld [vmem:[%s7 + $0x18] sm:$0xff]
    %191 = vset.pattern.permute.xlu0 0
    %192 = vperm.xlu0 %191, %v187
    %v193 = vpop.permute.xlu0 %192
    %194 = vset.pattern.permute.xlu0 0
    %195 = vperm.xlu0 %194, %v188
    %v196 = vpop.permute.xlu0 %195
    %197 = vset.pattern.permute.xlu0 0
    %198 = vperm.xlu0 %197, %v189
    %v199 = vpop.permute.xlu0 %198
    %200 = vset.pattern.permute.xlu0 0
    %201 = vperm.xlu0 %200, %v190
    %v202 = vpop.permute.xlu0 %201
    %vm203 = vcmp.eq.s32.totalorder %v183, %v193
    %vm204 = vcmp.eq.s32.totalorder %v183, %v196
    %vm205 = vcmp.eq.s32.totalorder %v183, %v199
    %vm206 = vcmp.eq.s32.totalorder %v183, %v202
    %v207 = vsel %vm203, 1.0, 0.0
    %v208 = vsel %vm204, 1.0, 0.0
    %v209 = vsel %vm205, 1.0, 0.0
    %v210 = vsel %vm206, 1.0, 0.0
    %v211 = vpack.c.bf16 %v208, %v207
    %v212 = vpack.c.bf16 %v210, %v209
    %v213 = vld [vmem:[%s11] sm:$0xff]
    %v214 = vld [vmem:[%s11 + $0x8] sm:$0xff]
    %v215 = vld [vmem:[%s11 + $0x10] sm:$0xff]
    %v216 = vld [vmem:[%s11 + $0x18] sm:$0xff]
    %217 = vset.pattern.permute.xlu0 0
    %218 = vperm.xlu0 %217, %v213
    %v219 = vpop.permute.xlu0 %218
    %220 = vset.pattern.permute.xlu0 0
    %221 = vperm.xlu0 %220, %v214
    %v222 = vpop.permute.xlu0 %221
    %223 = vset.pattern.permute.xlu0 0
    %224 = vperm.xlu0 %223, %v215
    %v225 = vpop.permute.xlu0 %224
    %226 = vset.pattern.permute.xlu0 0
    %227 = vperm.xlu0 %226, %v216
    %v228 = vpop.permute.xlu0 %227
    %vm229 = vcmp.eq.s32.totalorder %v183, %v219
    %vm230 = vcmp.eq.s32.totalorder %v183, %v222
    %vm231 = vcmp.eq.s32.totalorder %v183, %v225
    %vm232 = vcmp.eq.s32.totalorder %v183, %v228
    %v233 = vsel %vm229, 1.0, 0.0
    %v234 = vsel %vm230, 1.0, 0.0
    %v235 = vsel %vm231, 1.0, 0.0
    %v236 = vsel %vm232, 1.0, 0.0
    %v237 = vpack.c.bf16 %v234, %v233
    %v238 = vpack.c.bf16 %v236, %v235
    %v239 = vld [vmem:[%s17] sm:$0x1]
    %v240 = vlaneseq
    %v241 = vshrl.u32 %v240, 7
    %v242 = vsub.s32 0, %v241
    %v243 = vrot.slane %v239, %v242
    %vm244 = vcmp.eq.s32.totalorder %v185, %v243
    %v245 = vsel %vm244, 1.0, 0.0
    %v246 = vpack.c.bf16 %v245, %v245
    %247 = vset.pattern.permute.xlu0 0
    %248 = vperm.xlu0 %247, %v180
    %v249 = vpop.permute.xlu0 %248
    %250 = vset.pattern.permute.xlu0 0
    %251 = vperm.xlu0 %250, %v181
    %v252 = vpop.permute.xlu0 %251
    %vm253 = vcmp.eq.s32.totalorder %v183, %v249
    %vm254 = vcmp.eq.s32.totalorder %v183, %v252
    %v255 = vsel %vm253, 1.0, 0.0
    %v256 = vsel %vm254, 1.0, 0.0
    %v257 = vpack.c.bf16 %v256, %v255
    %vm258 = vcmask 326656
    %259 = vst.msk [vmem:[#allocation2] sm:$0xff] %vm258, 0.0
    %260 = vst.msk [vmem:[#allocation2 + $0x8] sm:$0xff] %vm258, 0.0
    %261 = vst.msk [vmem:[#allocation3] sm:$0xff] %vm258, 0
    %262 = vst.msk [vmem:[#allocation3 + $0x8] sm:$0xff] %vm258, 0
    %vm263 = vcmask 588800
    %264 = vst.msk [vmem:[#allocation4] sm:$0xff] %vm263, 0
    %265 = vst.msk [vmem:[#allocation4 + $0x8] sm:$0xff] %vm263, 0
    %vm266 = vcmask 581632
    %267 = vst.msk [vmem:[#allocation6] sm:$0x1] %vm266, 0
    %v268 = vld [vmem:[%s1] sm:$0xff]
    %v269 = vld [vmem:[%s1 + $0x8] sm:$0xff]
    %vm270 = vcmask 261120
    %271 = vst.msk [vmem:[#allocation2] sm:$0xff] %vm270, %v268
    %272 = vst.msk [vmem:[#allocation2 + $0x8] sm:$0xff] %vm270, %v269
    %v273 = vld [vmem:[%s3] sm:$0xff]
    %v274 = vld [vmem:[%s3 + $0x8] sm:$0xff]
    %277 = vrot.lane.b32.xlu0 %v273, 32
    %v278 = vpop.permute.xlu0 %277
    %279 = vrot.lane.b32.xlu0 %v274, 32
    %v280 = vpop.permute.xlu0 %279
    %vm283 = vcmask 285952
    %284 = vst.msk [vmem:[#allocation2] sm:$0xff] %vm283, %v278
    %285 = vst.msk [vmem:[#allocation2 + $0x8] sm:$0xff] %vm283, %v280
    %v286 = vld [vmem:[#allocation2] sm:$0xff]
    %v287 = vld [vmem:[#allocation2 + $0x8] sm:$0xff]
    %v288 = vpack.c.bf16 %v287, %v286
    %vm289 = vcmask 130048
    %v291 = vsel %vm289, %v211, 0
    %v294 = vsel %vm289, %v212, 0
    %296 = vmatprep.subr.bf16.mxu0 0
    %297 = vmatpush1.bf16.msra.mxu0 %v288
    %298 = vmatprep.subr.bf16.mxu0 0
    %299 = vmatpush1.bf16.msra.mxu0 0
    %300 = vmatprep.subr.bf16.mxu0 0
    %301 = vmatpush1.bf16.msra.mxu0 0
    %302 = vmatprep.subr.bf16.mxu0 0
    %303 = vmatpush1.bf16.msra.mxu0 0
    %304 = vmatprep.subr.bf16.mxu0 0
    %305 = vmatpush1.bf16.msra.mxu0 0
    %306 = vmatprep.subr.bf16.mxu0 0
    %307 = vmatpush1.bf16.msra.mxu0 0
    %308 = vmatprep.subr.bf16.mxu0 0
    %309 = vmatpush1.bf16.msra.mxu0 0
    %310 = vmatprep.subr.bf16.mxu0 0
    %311 = vmatpush1.bf16.msra.mxu0 0
    %312 = vmatprep.subr.bf16.mxu0 0
    %313 = vmatpush1.bf16.msra.mxu0 0
    %314 = vmatprep.subr.bf16.mxu0 0
    %315 = vmatpush1.bf16.msra.mxu0 0
    %316 = vmatprep.subr.bf16.mxu0 0
    %317 = vmatpush1.bf16.msra.mxu0 0
    %318 = vmatprep.subr.bf16.mxu0 0
    %319 = vmatpush1.bf16.msra.mxu0 0
    %320 = vmatprep.subr.bf16.mxu0 0
    %321 = vmatpush1.bf16.msra.mxu0 0
    %322 = vmatprep.subr.bf16.mxu0 0
    %323 = vmatpush1.bf16.msra.mxu0 0
    %324 = vmatprep.subr.bf16.mxu0 0
    %325 = vmatpush1.bf16.msra.mxu0 0
    %326 = vmatprep.subr.bf16.mxu0 0
    %327 = vmatpush1.bf16.msra.mxu0 0
    %328 = vmatprep.mubr.bf16.mxu0 0
    %329 = vmatmul.mubr.bf16.gmra.mrb[0].mxu0 %v291
    %v330 = vpop.f32.mrb[0].mxu0
    %v331 = vadd.f32 0.0, %v330
    %v332 = vpop.f32.mrb[0].mxu0
    %v333 = vpop.f32.mrb[0].mxu0
    %v334 = vadd.f32 0.0, %v333
    %v335 = vpop.f32.mrb[0].mxu0
    %336 = vmatprep.mubr.bf16.mxu0 0
    %337 = vmatmul.mubr.bf16.gmra.mrb[0].mxu0 %v294
    %v338 = vpop.f32.mrb[0].mxu0
    %v339 = vadd.f32 0.0, %v338
    %v340 = vpop.f32.mrb[0].mxu0
    %v341 = vpop.f32.mrb[0].mxu0
    %v342 = vadd.f32 0.0, %v341
    %v343 = vpop.f32.mrb[0].mxu0
    %344 = vdwg.mxu0
    %v346 = vsel %vm289, %v237, 0
    %v349 = vsel %vm289, %v238, 0
    %351 = vmatprep.subr.bf16.mxu0 0
    %352 = vmatpush1.bf16.msra.mxu0 %v288
    %353 = vmatprep.subr.bf16.mxu0 0
    %354 = vmatpush1.bf16.msra.mxu0 0
    %355 = vmatprep.subr.bf16.mxu0 0
    %356 = vmatpush1.bf16.msra.mxu0 0
    %357 = vmatprep.subr.bf16.mxu0 0
    %358 = vmatpush1.bf16.msra.mxu0 0
    %359 = vmatprep.subr.bf16.mxu0 0
    %360 = vmatpush1.bf16.msra.mxu0 0
    %361 = vmatprep.subr.bf16.mxu0 0
    %362 = vmatpush1.bf16.msra.mxu0 0
    %363 = vmatprep.subr.bf16.mxu0 0
    %364 = vmatpush1.bf16.msra.mxu0 0
    %365 = vmatprep.subr.bf16.mxu0 0
    %366 = vmatpush1.bf16.msra.mxu0 0
    %367 = vmatprep.subr.bf16.mxu0 0
    %368 = vmatpush1.bf16.msra.mxu0 0
    %369 = vmatprep.subr.bf16.mxu0 0
    %370 = vmatpush1.bf16.msra.mxu0 0
    %371 = vmatprep.subr.bf16.mxu0 0
    %372 = vmatpush1.bf16.msra.mxu0 0
    %373 = vmatprep.subr.bf16.mxu0 0
    %374 = vmatpush1.bf16.msra.mxu0 0
    %375 = vmatprep.subr.bf16.mxu0 0
    %376 = vmatpush1.bf16.msra.mxu0 0
    %377 = vmatprep.subr.bf16.mxu0 0
    %378 = vmatpush1.bf16.msra.mxu0 0
    %379 = vmatprep.subr.bf16.mxu0 0
    %380 = vmatpush1.bf16.msra.mxu0 0
    %381 = vmatprep.subr.bf16.mxu0 0
    %382 = vmatpush1.bf16.msra.mxu0 0
    %383 = vmatprep.mubr.bf16.mxu0 0
    %384 = vmatmul.mubr.bf16.gmra.mrb[0].mxu0 %v346
    %v385 = vpop.f32.mrb[0].mxu0
    %v386 = vadd.f32 0.0, %v385
    %v387 = vpop.f32.mrb[0].mxu0
    %v388 = vpop.f32.mrb[0].mxu0
    %v389 = vadd.f32 0.0, %v388
    %v390 = vpop.f32.mrb[0].mxu0
    %391 = vmatprep.mubr.bf16.mxu0 0
    %392 = vmatmul.mubr.bf16.gmra.mrb[0].mxu0 %v349
    %v393 = vpop.f32.mrb[0].mxu0
    %v394 = vadd.f32 0.0, %v393
    %v395 = vpop.f32.mrb[0].mxu0
    %v396 = vpop.f32.mrb[0].mxu0
    %v397 = vadd.f32 0.0, %v396
    %v398 = vpop.f32.mrb[0].mxu0
    %399 = vdwg.mxu0
    %v400 = vsub.f32 %v331, %v386
    %v401 = vsub.f32 %v334, %v389
    %v402 = vsub.f32 %v339, %v394
    %v403 = vsub.f32 %v342, %v397
    %v404 = vmul.f32 %v400, %v400
    %v405 = vmul.f32 %v401, %v401
    %v406 = vmul.f32 %v402, %v402
    %v407 = vmul.f32 %v403, %v403
    %412 = vrot.lane.b32.xlu0 %v404, 96
    %v413 = vpop.permute.xlu0 %412
    %414 = vrot.lane.b32.xlu0 %v405, 96
    %v415 = vpop.permute.xlu0 %414
    %416 = vrot.lane.b32.xlu0 %v406, 96
    %v417 = vpop.permute.xlu0 %416
    %418 = vrot.lane.b32.xlu0 %v407, 96
    %v419 = vpop.permute.xlu0 %418
    %vm424 = vcmask 23552
    %v425 = vsel %vm424, %v413, 0.0
    %426 = vadd.xlane.f32.xlu0 %v425
    %v427 = vpop.xlane.xlu0 %426
    %v428 = vsel %vm424, %v415, 0.0
    %429 = vadd.xlane.f32.xlu0 %v428
    %v430 = vpop.xlane.xlu0 %429
    %v431 = vsel %vm424, %v417, 0.0
    %432 = vadd.xlane.f32.xlu0 %v431
    %v433 = vpop.xlane.xlu0 %432
    %v434 = vsel %vm424, %v419, 0.0
    %435 = vadd.xlane.f32.xlu0 %v434
    %v436 = vpop.xlane.xlu0 %435
    %v437 = vpack.c.bf16 %v334, %v331
    %v438 = vpack.c.bf16 %v342, %v339
    %439 = vst.msk [vmem:[#allocation4] sm:$0xff] %vm270, %v437
    %440 = vst.msk [vmem:[#allocation4 + $0x8] sm:$0xff] %vm270, %v438
    %v441 = vpack.c.bf16 %v389, %v386
    %v442 = vpack.c.bf16 %v397, %v394
    %445 = vrot.lane.b32.xlu0 %v441, 32
    %v446 = vpop.permute.xlu0 %445
    %447 = vrot.lane.b32.xlu0 %v442, 32
    %v448 = vpop.permute.xlu0 %447
    %vm451 = vcmask 523520
    %452 = vst.msk [vmem:[#allocation4] sm:$0xff] %vm451, %v446
    %453 = vst.msk [vmem:[#allocation4 + $0x8] sm:$0xff] %vm451, %v448
    %v454 = vpack.c.bf16 %v430, %v427
    %v455 = vpack.c.bf16 %v436, %v433
    %vm456 = vcmask 531968
    %457 = vst.msk [vmem:[#allocation4] sm:$0xff] %vm456, %v454
    %458 = vst.msk [vmem:[#allocation4 + $0x8] sm:$0xff] %vm456, %v455
    %v459 = vld [vmem:[#allocation4] sm:$0xff]
    %v460 = vld [vmem:[#allocation4 + $0x8] sm:$0xff]
    %v461 = vld [vmem:[%s23] sm:$0xf]
    %v462 = vld [vmem:[%s23 + $0x4] sm:$0xf]
    %v463 = vld [vmem:[%s23 + $0x8] sm:$0xf]
    %v464 = vld [vmem:[%s23 + $0xc] sm:$0xf]
    %v465 = vld [vmem:[%s23 + $0x10] sm:$0xf]
    %v466 = vld [vmem:[%s23 + $0x14] sm:$0xf]
    %v467 = vld [vmem:[%s23 + $0x18] sm:$0xf]
    %v468 = vld [vmem:[%s23 + $0x1c] sm:$0xf]
    %v469 = vld [vmem:[%s23 + $0x20] sm:$0xf]
    %v470 = vld [vmem:[%s25] sm:$0x1]
    %v472 = vlaneseq
    %v473 = vshrl.u32 %v472, 7
    %v474 = vsub.s32 0, %v473
    %v475 = vrot.slane %v470, %v474
    %v486 = vunpack.c.l.b16 %v461
    %v487 = vunpack.c.l.b16 %v462
    %v488 = vunpack.c.l.b16 %v463
    %v489 = vunpack.c.l.b16 %v464
    %v490 = vunpack.c.l.b16 %v465
    %v491 = vunpack.c.l.b16 %v466
    %v492 = vunpack.c.l.b16 %v467
    %v493 = vunpack.c.l.b16 %v468
    %v494 = vunpack.c.l.b16 %v469
    %v495 = vpack.c.b16 %v487, %v486
    %v496 = vpack.c.b16 %v489, %v488
    %v497 = vpack.c.b16 %v491, %v490
    %v498 = vpack.c.b16 %v493, %v492
    %v499 = vpack.c.b16 %v494, %v494
    %v505 = vsel %vm263, %v459, 0
    %v508 = vsel %vm263, %v460, 0
    %vm510 = vcmask 1043456
    %v512 = vsel %vm510, %v499, 0
    %514 = vmatprep.subr.bf16.mxu0 0
    %515 = vmatpush1.bf16.msra.mxu0 %v495
    %516 = vmatprep.subr.bf16.mxu0 0
    %517 = vmatpush1.bf16.msra.mxu0 %v496
    %518 = vmatprep.subr.bf16.mxu0 0
    %519 = vmatpush1.bf16.msra.mxu0 %v497
    %520 = vmatprep.subr.bf16.mxu0 0
    %521 = vmatpush1.bf16.msra.mxu0 %v498
    %522 = vmatprep.subr.bf16.mxu0 0
    %523 = vmatpush1.bf16.msra.mxu0 %v512
    %524 = vmatprep.subr.bf16.mxu0 0
    %525 = vmatpush1.bf16.msra.mxu0 0
    %526 = vmatprep.subr.bf16.mxu0 0
    %527 = vmatpush1.bf16.msra.mxu0 0
    %528 = vmatprep.subr.bf16.mxu0 0
    %529 = vmatpush1.bf16.msra.mxu0 0
    %530 = vmatprep.subr.bf16.mxu0 0
    %531 = vmatpush1.bf16.msra.mxu0 0
    %532 = vmatprep.subr.bf16.mxu0 0
    %533 = vmatpush1.bf16.msra.mxu0 0
    %534 = vmatprep.subr.bf16.mxu0 0
    %535 = vmatpush1.bf16.msra.mxu0 0
    %536 = vmatprep.subr.bf16.mxu0 0
    %537 = vmatpush1.bf16.msra.mxu0 0
    %538 = vmatprep.subr.bf16.mxu0 0
    %539 = vmatpush1.bf16.msra.mxu0 0
    %540 = vmatprep.subr.bf16.mxu0 0
    %541 = vmatpush1.bf16.msra.mxu0 0
    %542 = vmatprep.subr.bf16.mxu0 0
    %543 = vmatpush1.bf16.msra.mxu0 0
    %544 = vmatprep.subr.bf16.mxu0 0
    %545 = vmatpush1.bf16.msra.mxu0 0
    %546 = vmatprep.mubr.bf16.mxu0 0
    %547 = vmatmul.mubr.bf16.gmra.mrb[0].mxu0 %v505
    %v548 = vpop.f32.mrb[0].mxu0
    %v549 = vadd.f32 %v475, %v548
    %v550 = vpop.f32.mrb[0].mxu0
    %v551 = vpop.f32.mrb[0].mxu0
    %v552 = vadd.f32 %v475, %v551
    %v553 = vpop.f32.mrb[0].mxu0
    %554 = vmatprep.mubr.bf16.mxu0 0
    %555 = vmatmul.mubr.bf16.gmra.mrb[0].mxu0 %v508
    %v556 = vpop.f32.mrb[0].mxu0
    %v557 = vadd.f32 %v475, %v556
    %v558 = vpop.f32.mrb[0].mxu0
    %v559 = vpop.f32.mrb[0].mxu0
    %v560 = vadd.f32 %v475, %v559
    %v561 = vpop.f32.mrb[0].mxu0
    %562 = vdwg.mxu0
    %v563 = vxor.u32 %v549, 2147483648
    %v564 = vxor.u32 %v552, 2147483648
    %v565 = vxor.u32 %v557, 2147483648
    %v566 = vxor.u32 %v560, 2147483648
    %v567 = vmul.f32 %v563, 1.442695
    %v568 = vpow.pop %v567
    %v569 = vmul.f32 %v564, 1.442695
    %v570 = vpow.pop %v569
    %v571 = vmul.f32 %v565, 1.442695
    %v572 = vpow.pop %v571
    %v573 = vmul.f32 %v566, 1.442695
    %v574 = vpow.pop %v573
    %v575 = vadd.f32 %v568, 1.0
    %v576 = vadd.f32 %v570, 1.0
    %v577 = vadd.f32 %v572, 1.0
    %v578 = vadd.f32 %v574, 1.0
    %v579 = vrcp.pop %v575
    %v580 = vmul.f32 1.0, %v579
    %v581 = vrcp.pop %v576
    %v582 = vmul.f32 1.0, %v581
    %v583 = vrcp.pop %v577
    %v584 = vmul.f32 1.0, %v583
    %v585 = vrcp.pop %v578
    %v586 = vmul.f32 1.0, %v585
    %v587 = vmul.f32 %v549, %v580
    %v588 = vmul.f32 %v552, %v582
    %v589 = vmul.f32 %v557, %v584
    %v590 = vmul.f32 %v560, %v586
    %v591 = vpack.c.bf16 %v588, %v587
    %v592 = vpack.c.bf16 %v590, %v589
    %v593 = vld [vmem:[%s27] sm:$0xf]
    %v594 = vld [vmem:[%s27 + $0x4] sm:$0xf]
    %v595 = vld [vmem:[%s27 + $0x8] sm:$0xf]
    %v596 = vld [vmem:[%s27 + $0xc] sm:$0xf]
    %v597 = vld [vmem:[%s29] sm:$0x1]
    %v599 = vlaneseq
    %v600 = vshrl.u32 %v599, 7
    %v601 = vsub.s32 0, %v600
    %v602 = vrot.slane %v597, %v601
    %v608 = vunpack.c.l.b16 %v593
    %v609 = vunpack.c.l.b16 %v594
    %v610 = vunpack.c.l.b16 %v595
    %v611 = vunpack.c.l.b16 %v596
    %v612 = vpack.c.b16 %v609, %v608
    %v613 = vpack.c.b16 %v611, %v610
    %v617 = vsel %vm270, %v591, 0
    %v620 = vsel %vm270, %v592, 0
    %622 = vmatprep.subr.bf16.mxu0 0
    %623 = vmatpush1.bf16.msra.mxu0 %v612
    %624 = vmatprep.subr.bf16.mxu0 0
    %625 = vmatpush1.bf16.msra.mxu0 %v613
    %626 = vmatprep.subr.bf16.mxu0 0
    %627 = vmatpush1.bf16.msra.mxu0 0
    %628 = vmatprep.subr.bf16.mxu0 0
    %629 = vmatpush1.bf16.msra.mxu0 0
    %630 = vmatprep.subr.bf16.mxu0 0
    %631 = vmatpush1.bf16.msra.mxu0 0
    %632 = vmatprep.subr.bf16.mxu0 0
    %633 = vmatpush1.bf16.msra.mxu0 0
    %634 = vmatprep.subr.bf16.mxu0 0
    %635 = vmatpush1.bf16.msra.mxu0 0
    %636 = vmatprep.subr.bf16.mxu0 0
    %637 = vmatpush1.bf16.msra.mxu0 0
    %638 = vmatprep.subr.bf16.mxu0 0
    %639 = vmatpush1.bf16.msra.mxu0 0
    %640 = vmatprep.subr.bf16.mxu0 0
    %641 = vmatpush1.bf16.msra.mxu0 0
    %642 = vmatprep.subr.bf16.mxu0 0
    %643 = vmatpush1.bf16.msra.mxu0 0
    %644 = vmatprep.subr.bf16.mxu0 0
    %645 = vmatpush1.bf16.msra.mxu0 0
    %646 = vmatprep.subr.bf16.mxu0 0
    %647 = vmatpush1.bf16.msra.mxu0 0
    %648 = vmatprep.subr.bf16.mxu0 0
    %649 = vmatpush1.bf16.msra.mxu0 0
    %650 = vmatprep.subr.bf16.mxu0 0
    %651 = vmatpush1.bf16.msra.mxu0 0
    %652 = vmatprep.subr.bf16.mxu0 0
    %653 = vmatpush1.bf16.msra.mxu0 0
    %654 = vmatprep.mubr.bf16.mxu0 0
    %655 = vmatmul.mubr.bf16.gmra.mrb[0].mxu0 %v617
    %v656 = vpop.f32.mrb[0].mxu0
    %v657 = vadd.f32 %v602, %v656
    %v658 = vpop.f32.mrb[0].mxu0
    %v659 = vpop.f32.mrb[0].mxu0
    %v660 = vadd.f32 %v602, %v659
    %v661 = vpop.f32.mrb[0].mxu0
    %662 = vmatprep.mubr.bf16.mxu0 0
    %663 = vmatmul.mubr.bf16.gmra.mrb[0].mxu0 %v620
    %v664 = vpop.f32.mrb[0].mxu0
    %v665 = vadd.f32 %v602, %v664
    %v666 = vpop.f32.mrb[0].mxu0
    %v667 = vpop.f32.mrb[0].mxu0
    %v668 = vadd.f32 %v602, %v667
    %v669 = vpop.f32.mrb[0].mxu0
    %670 = vdwg.mxu0
    %v671 = vxor.u32 %v657, 2147483648
    %v672 = vxor.u32 %v660, 2147483648
    %v673 = vxor.u32 %v665, 2147483648
    %v674 = vxor.u32 %v668, 2147483648
    %v675 = vmul.f32 %v671, 1.442695
    %v676 = vpow.pop %v675
    %v677 = vmul.f32 %v672, 1.442695
    %v678 = vpow.pop %v677
    %v679 = vmul.f32 %v673, 1.442695
    %v680 = vpow.pop %v679
    %v681 = vmul.f32 %v674, 1.442695
    %v682 = vpow.pop %v681
    %v683 = vadd.f32 %v676, 1.0
    %v684 = vadd.f32 %v678, 1.0
    %v685 = vadd.f32 %v680, 1.0
    %v686 = vadd.f32 %v682, 1.0
    %v687 = vrcp.pop %v683
    %v688 = vmul.f32 1.0, %v687
    %v689 = vrcp.pop %v684
    %v690 = vmul.f32 1.0, %v689
    %v691 = vrcp.pop %v685
    %v692 = vmul.f32 1.0, %v691
    %v693 = vrcp.pop %v686
    %v694 = vmul.f32 1.0, %v693
    %v695 = vmul.f32 %v657, %v688
    %v696 = vmul.f32 %v660, %v690
    %v697 = vmul.f32 %v665, %v692
    %v698 = vmul.f32 %v668, %v694
    %v699 = vpack.c.bf16 %v696, %v695
    %v700 = vpack.c.bf16 %v698, %v697
    %v701 = vld [vmem:[%s39] sm:$0xf]
    %v702 = vld [vmem:[%s39 + $0x4] sm:$0xf]
    %v703 = vld [vmem:[%s39 + $0x8] sm:$0xf]
    %v704 = vld [vmem:[%s39 + $0xc] sm:$0xf]
    %v705 = vld [vmem:[%s41] sm:$0x1]
    %v707 = vlaneseq
    %v708 = vshrl.u32 %v707, 7
    %v709 = vsub.s32 0, %v708
    %v710 = vrot.slane %v705, %v709
    %v716 = vunpack.c.l.b16 %v701
    %v717 = vunpack.c.l.b16 %v702
    %v718 = vunpack.c.l.b16 %v703
    %v719 = vunpack.c.l.b16 %v704
    %v720 = vpack.c.b16 %v717, %v716
    %v721 = vpack.c.b16 %v719, %v718
    %v725 = vsel %vm270, %v699, 0
    %v728 = vsel %vm270, %v700, 0
    %730 = vmatprep.subr.bf16.mxu0 0
    %731 = vmatpush1.bf16.msra.mxu0 %v720
    %732 = vmatprep.subr.bf16.mxu0 0
    %733 = vmatpush1.bf16.msra.mxu0 %v721
    %734 = vmatprep.subr.bf16.mxu0 0
    %735 = vmatpush1.bf16.msra.mxu0 0
    %736 = vmatprep.subr.bf16.mxu0 0
    %737 = vmatpush1.bf16.msra.mxu0 0
    %738 = vmatprep.subr.bf16.mxu0 0
    %739 = vmatpush1.bf16.msra.mxu0 0
    %740 = vmatprep.subr.bf16.mxu0 0
    %741 = vmatpush1.bf16.msra.mxu0 0
    %742 = vmatprep.subr.bf16.mxu0 0
    %743 = vmatpush1.bf16.msra.mxu0 0
    %744 = vmatprep.subr.bf16.mxu0 0
    %745 = vmatpush1.bf16.msra.mxu0 0
    %746 = vmatprep.subr.bf16.mxu0 0
    %747 = vmatpush1.bf16.msra.mxu0 0
    %748 = vmatprep.subr.bf16.mxu0 0
    %749 = vmatpush1.bf16.msra.mxu0 0
    %750 = vmatprep.subr.bf16.mxu0 0
    %751 = vmatpush1.bf16.msra.mxu0 0
    %752 = vmatprep.subr.bf16.mxu0 0
    %753 = vmatpush1.bf16.msra.mxu0 0
    %754 = vmatprep.subr.bf16.mxu0 0
    %755 = vmatpush1.bf16.msra.mxu0 0
    %756 = vmatprep.subr.bf16.mxu0 0
    %757 = vmatpush1.bf16.msra.mxu0 0
    %758 = vmatprep.subr.bf16.mxu0 0
    %759 = vmatpush1.bf16.msra.mxu0 0
    %760 = vmatprep.subr.bf16.mxu0 0
    %761 = vmatpush1.bf16.msra.mxu0 0
    %762 = vmatprep.mubr.bf16.mxu0 0
    %763 = vmatmul.mubr.bf16.gmra.mrb[0].mxu0 %v725
    %v764 = vpop.f32.mrb[0].mxu0
    %v765 = vadd.f32 %v710, %v764
    %v766 = vpop.f32.mrb[0].mxu0
    %v767 = vpop.f32.mrb[0].mxu0
    %v768 = vadd.f32 %v710, %v767
    %v769 = vpop.f32.mrb[0].mxu0
    %770 = vmatprep.mubr.bf16.mxu0 0
    %771 = vmatmul.mubr.bf16.gmra.mrb[0].mxu0 %v728
    %v772 = vpop.f32.mrb[0].mxu0
    %v773 = vadd.f32 %v710, %v772
    %v774 = vpop.f32.mrb[0].mxu0
    %v775 = vpop.f32.mrb[0].mxu0
    %v776 = vadd.f32 %v710, %v775
    %v777 = vpop.f32.mrb[0].mxu0
    %778 = vdwg.mxu0
    %v779 = vxor.u32 %v765, 2147483648
    %v780 = vxor.u32 %v768, 2147483648
    %v781 = vxor.u32 %v773, 2147483648
    %v782 = vxor.u32 %v776, 2147483648
    %v783 = vmul.f32 %v779, 1.442695
    %v784 = vpow.pop %v783
    %v785 = vmul.f32 %v780, 1.442695
    %v786 = vpow.pop %v785
    %v787 = vmul.f32 %v781, 1.442695
    %v788 = vpow.pop %v787
    %v789 = vmul.f32 %v782, 1.442695
    %v790 = vpow.pop %v789
    %v791 = vadd.f32 %v784, 1.0
    %v792 = vadd.f32 %v786, 1.0
    %v793 = vadd.f32 %v788, 1.0
    %v794 = vadd.f32 %v790, 1.0
    %v795 = vrcp.pop %v791
    %v796 = vmul.f32 1.0, %v795
    %v797 = vrcp.pop %v792
    %v798 = vmul.f32 1.0, %v797
    %v799 = vrcp.pop %v793
    %v800 = vmul.f32 1.0, %v799
    %v801 = vrcp.pop %v794
    %v802 = vmul.f32 1.0, %v801
    %v803 = vmul.f32 %v765, %v796
    %v804 = vmul.f32 %v768, %v798
    %v805 = vmul.f32 %v773, %v800
    %v806 = vmul.f32 %v776, %v802
    %v807 = vpack.c.bf16 %v804, %v803
    %v808 = vpack.c.bf16 %v806, %v805
    %v809 = vld [vmem:[%s43] sm:$0xf]
    %v810 = vld [vmem:[%s43 + $0x4] sm:$0xf]
    %v811 = vld [vmem:[%s43 + $0x8] sm:$0xf]
    %v812 = vld [vmem:[%s43 + $0xc] sm:$0xf]
    %v817 = vunpack.c.l.b16 %v809
    %v818 = vunpack.c.l.b16 %v810
    %v819 = vunpack.c.l.b16 %v811
    %v820 = vunpack.c.l.b16 %v812
    %v821 = vpack.c.b16 %v818, %v817
    %v822 = vpack.c.b16 %v820, %v819
    %v826 = vsel %vm270, %v807, 0
    %v829 = vsel %vm270, %v808, 0
    %831 = vmatprep.subr.bf16.mxu0 0
    %832 = vmatpush1.bf16.msra.mxu0 %v821
    %833 = vmatprep.subr.bf16.mxu0 0
    %834 = vmatpush1.bf16.msra.mxu0 %v822
    %835 = vmatprep.subr.bf16.mxu0 0
    %836 = vmatpush1.bf16.msra.mxu0 0
    %837 = vmatprep.subr.bf16.mxu0 0
    %838 = vmatpush1.bf16.msra.mxu0 0
    %839 = vmatprep.subr.bf16.mxu0 0
    %840 = vmatpush1.bf16.msra.mxu0 0
    %841 = vmatprep.subr.bf16.mxu0 0
    %842 = vmatpush1.bf16.msra.mxu0 0
    %843 = vmatprep.subr.bf16.mxu0 0
    %844 = vmatpush1.bf16.msra.mxu0 0
    %845 = vmatprep.subr.bf16.mxu0 0
    %846 = vmatpush1.bf16.msra.mxu0 0
    %847 = vmatprep.subr.bf16.mxu0 0
    %848 = vmatpush1.bf16.msra.mxu0 0
    %849 = vmatprep.subr.bf16.mxu0 0
    %850 = vmatpush1.bf16.msra.mxu0 0
    %851 = vmatprep.subr.bf16.mxu0 0
    %852 = vmatpush1.bf16.msra.mxu0 0
    %853 = vmatprep.subr.bf16.mxu0 0
    %854 = vmatpush1.bf16.msra.mxu0 0
    %855 = vmatprep.subr.bf16.mxu0 0
    %856 = vmatpush1.bf16.msra.mxu0 0
    %857 = vmatprep.subr.bf16.mxu0 0
    %858 = vmatpush1.bf16.msra.mxu0 0
    %859 = vmatprep.subr.bf16.mxu0 0
    %860 = vmatpush1.bf16.msra.mxu0 0
    %861 = vmatprep.subr.bf16.mxu0 0
    %862 = vmatpush1.bf16.msra.mxu0 0
    %863 = vmatprep.mubr.bf16.mxu0 0
    %864 = vmatmul.mubr.bf16.gmra.mrb[0].mxu0 %v826
    %v865 = vpop.f32.mrb[0].mxu0
    %v866 = vadd.f32 0.0, %v865
    %v867 = vpop.f32.mrb[0].mxu0
    %v868 = vpop.f32.mrb[0].mxu0
    %v869 = vadd.f32 0.0, %v868
    %v870 = vpop.f32.mrb[0].mxu0
    %871 = vmatprep.mubr.bf16.mxu0 0
    %872 = vmatmul.mubr.bf16.gmra.mrb[0].mxu0 %v829
    %v873 = vpop.f32.mrb[0].mxu0
    %v874 = vadd.f32 0.0, %v873
    %v875 = vpop.f32.mrb[0].mxu0
    %v876 = vpop.f32.mrb[0].mxu0
    %v877 = vadd.f32 0.0, %v876
    %v878 = vpop.f32.mrb[0].mxu0
    %879 = vdwg.mxu0
    %881 = vset.pattern.permute.xlu0 0
    %882 = vperm.xlu0 %881, %v866
    %v883 = vpop.permute.xlu0 %882
    %886 = vset.pattern.permute.xlu0 0
    %887 = vperm.xlu0 %886, %v869
    %v888 = vpop.permute.xlu0 %887
    %891 = vset.pattern.permute.xlu0 0
    %892 = vperm.xlu0 %891, %v874
    %v893 = vpop.permute.xlu0 %892
    %896 = vset.pattern.permute.xlu0 0
    %897 = vperm.xlu0 %896, %v877
    %v898 = vpop.permute.xlu0 %897
    %v900 = vmul.f32 %v400, %v883
    %v901 = vmul.f32 %v401, %v888
    %v902 = vmul.f32 %v402, %v893
    %v903 = vmul.f32 %v403, %v898
    %904 = vst.msk [vmem:[#allocation3] sm:$0xff] %vm270, %v699
    %905 = vst.msk [vmem:[#allocation3 + $0x8] sm:$0xff] %vm270, %v700
    %v906 = vpack.c.bf16 %v901, %v900
    %v907 = vpack.c.bf16 %v903, %v902
    %908 = vst.msk [vmem:[#allocation3] sm:$0xff] %vm283, %v906
    %909 = vst.msk [vmem:[#allocation3 + $0x8] sm:$0xff] %vm283, %v907
    %v910 = vld [vmem:[%s9] sm:$0x1]
    %v911 = vlaneseq
    %v912 = vshrl.u32 %v911, 7
    %v913 = vsub.s32 0, %v912
    %v914 = vrot.slane %v910, %v913
    %vm915 = vcmp.eq.s32.totalorder %v185, %v914
    %vm916 = vcmp.eq.s32.totalorder %v186, %v914
    %v917 = vsel %vm915, 1.0, 0.0
    %v918 = vsel %vm916, 1.0, 0.0
    %v919 = vpack.c.bf16 %v918, %v917
    %v920 = vld [vmem:[#allocation3] sm:$0xff]
    %v921 = vld [vmem:[#allocation3 + $0x8] sm:$0xff]
    %v923 = vsel %vm270, %v919, 0
    %925 = vmatprep.subr.bf16.mxu0 0
    %926 = vmatpush1.bf16.msra.mxu0 %v920
    %927 = vmatprep.subr.bf16.mxu0 0
    %928 = vmatpush1.bf16.msra.mxu0 %v921
    %929 = vmatprep.subr.bf16.mxu0 0
    %930 = vmatpush1.bf16.msra.mxu0 0
    %931 = vmatprep.subr.bf16.mxu0 0
    %932 = vmatpush1.bf16.msra.mxu0 0
    %933 = vmatprep.subr.bf16.mxu0 0
    %934 = vmatpush1.bf16.msra.mxu0 0
    %935 = vmatprep.subr.bf16.mxu0 0
    %936 = vmatpush1.bf16.msra.mxu0 0
    %937 = vmatprep.subr.bf16.mxu0 0
    %938 = vmatpush1.bf16.msra.mxu0 0
    %939 = vmatprep.subr.bf16.mxu0 0
    %940 = vmatpush1.bf16.msra.mxu0 0
    %941 = vmatprep.subr.bf16.mxu0 0
    %942 = vmatpush1.bf16.msra.mxu0 0
    %943 = vmatprep.subr.bf16.mxu0 0
    %944 = vmatpush1.bf16.msra.mxu0 0
    %945 = vmatprep.subr.bf16.mxu0 0
    %946 = vmatpush1.bf16.msra.mxu0 0
    %947 = vmatprep.subr.bf16.mxu0 0
    %948 = vmatpush1.bf16.msra.mxu0 0
    %949 = vmatprep.subr.bf16.mxu0 0
    %950 = vmatpush1.bf16.msra.mxu0 0
    %951 = vmatprep.subr.bf16.mxu0 0
    %952 = vmatpush1.bf16.msra.mxu0 0
    %953 = vmatprep.subr.bf16.mxu0 0
    %954 = vmatpush1.bf16.msra.mxu0 0
    %955 = vmatprep.subr.bf16.mxu0 0
    %956 = vmatpush1.bf16.msra.mxu0 0
    %957 = vmatprep.mubr.bf16.mxu0 0
    %958 = vmatmul.mubr.bf16.gmra.mrb[0].mxu0 %v923
    %v959 = vpop.f32.mrb[0].mxu0
    %v960 = vadd.f32 0.0, %v959
    %v961 = vpop.f32.mrb[0].mxu0
    %v962 = vpop.f32.mrb[0].mxu0
    %v963 = vadd.f32 0.0, %v962
    %v964 = vpop.f32.mrb[0].mxu0
    %965 = vdwg.mxu0
    %967 = vset.pattern.permute.xlu0 0
    %968 = vperm.xlu0 %967, %v177
    %v969 = vpop.permute.xlu0 %968
    %972 = vset.pattern.permute.xlu0 0
    %973 = vperm.xlu0 %972, %v178
    %v974 = vpop.permute.xlu0 %973
    %v976 = vmul.f32 %v960, %v969
    %v977 = vmul.f32 %v963, %v974
    %v978 = vadd.f32 %v286, %v976
    %v979 = vadd.f32 %v287, %v977
    %980 = vst.msk [vmem:[#allocation5] sm:$0xff] %vm270, %v288
    %v981 = vpack.c.bf16 %v963, %v960
    %983 = vrot.lane.b32.xlu0 %v981, 32
    %v984 = vpop.permute.xlu0 %983
    %986 = vst.msk [vmem:[#allocation5] sm:$0xff] %vm451, %v984
    %v987 = vld [vmem:[#allocation5] sm:$0xff]
    %v988 = vld [vmem:[%s31] sm:$0xf]
    %v989 = vld [vmem:[%s31 + $0x4] sm:$0xf]
    %v990 = vld [vmem:[%s31 + $0x8] sm:$0xf]
    %v991 = vld [vmem:[%s31 + $0xc] sm:$0xf]
    %v992 = vld [vmem:[%s31 + $0x10] sm:$0xf]
    %v993 = vld [vmem:[%s31 + $0x14] sm:$0xf]
    %v994 = vld [vmem:[%s31 + $0x18] sm:$0xf]
    %v995 = vld [vmem:[%s31 + $0x1c] sm:$0xf]
    %v996 = vld [vmem:[%s33] sm:$0x1]
    %v998 = vlaneseq
    %v999 = vshrl.u32 %v998, 7
    %v1000 = vsub.s32 0, %v999
    %v1001 = vrot.slane %v996, %v1000
    %v1011 = vunpack.c.l.b16 %v988
    %v1012 = vunpack.c.l.b16 %v989
    %v1013 = vunpack.c.l.b16 %v990
    %v1014 = vunpack.c.l.b16 %v991
    %v1015 = vunpack.c.l.b16 %v992
    %v1016 = vunpack.c.l.b16 %v993
    %v1017 = vunpack.c.l.b16 %v994
    %v1018 = vunpack.c.l.b16 %v995
    %v1019 = vpack.c.b16 %v1012, %v1011
    %v1020 = vpack.c.b16 %v1014, %v1013
    %v1021 = vpack.c.b16 %v1016, %v1015
    %v1022 = vpack.c.b16 %v1018, %v1017
    %vm1027 = vcmask 523264
    %v1029 = vsel %vm1027, %v987, 0
    %1031 = vmatprep.subr.bf16.mxu0 0
    %1032 = vmatpush1.bf16.msra.mxu0 %v1019
    %1033 = vmatprep.subr.bf16.mxu0 0
    %1034 = vmatpush1.bf16.msra.mxu0 %v1020
    %1035 = vmatprep.subr.bf16.mxu0 0
    %1036 = vmatpush1.bf16.msra.mxu0 %v1021
    %1037 = vmatprep.subr.bf16.mxu0 0
    %1038 = vmatpush1.bf16.msra.mxu0 %v1022
    %1039 = vmatprep.subr.bf16.mxu0 0
    %1040 = vmatpush1.bf16.msra.mxu0 0
    %1041 = vmatprep.subr.bf16.mxu0 0
    %1042 = vmatpush1.bf16.msra.mxu0 0
    %1043 = vmatprep.subr.bf16.mxu0 0
    %1044 = vmatpush1.bf16.msra.mxu0 0
    %1045 = vmatprep.subr.bf16.mxu0 0
    %1046 = vmatpush1.bf16.msra.mxu0 0
    %1047 = vmatprep.subr.bf16.mxu0 0
    %1048 = vmatpush1.bf16.msra.mxu0 0
    %1049 = vmatprep.subr.bf16.mxu0 0
    %1050 = vmatpush1.bf16.msra.mxu0 0
    %1051 = vmatprep.subr.bf16.mxu0 0
    %1052 = vmatpush1.bf16.msra.mxu0 0
    %1053 = vmatprep.subr.bf16.mxu0 0
    %1054 = vmatpush1.bf16.msra.mxu0 0
    %1055 = vmatprep.subr.bf16.mxu0 0
    %1056 = vmatpush1.bf16.msra.mxu0 0
    %1057 = vmatprep.subr.bf16.mxu0 0
    %1058 = vmatpush1.bf16.msra.mxu0 0
    %1059 = vmatprep.subr.bf16.mxu0 0
    %1060 = vmatpush1.bf16.msra.mxu0 0
    %1061 = vmatprep.subr.bf16.mxu0 0
    %1062 = vmatpush1.bf16.msra.mxu0 0
    %1063 = vmatprep.mubr.bf16.mxu0 0
    %1064 = vmatmul.mubr.bf16.gmra.mrb[0].mxu0 %v1029
    %v1065 = vpop.f32.mrb[0].mxu0
    %v1066 = vadd.f32 %v1001, %v1065
    %v1067 = vpop.f32.mrb[0].mxu0
    %v1068 = vpop.f32.mrb[0].mxu0
    %v1069 = vadd.f32 %v1001, %v1068
    %v1070 = vpop.f32.mrb[0].mxu0
    %1071 = vdwg.mxu0
    %v1072 = vxor.u32 %v1066, 2147483648
    %v1073 = vxor.u32 %v1069, 2147483648
    %v1074 = vmul.f32 %v1072, 1.442695
    %v1075 = vpow.pop %v1074
    %v1076 = vmul.f32 %v1073, 1.442695
    %v1077 = vpow.pop %v1076
    %v1078 = vadd.f32 %v1075, 1.0
    %v1079 = vadd.f32 %v1077, 1.0
    %v1080 = vrcp.pop %v1078
    %v1081 = vmul.f32 1.0, %v1080
    %v1082 = vrcp.pop %v1079
    %v1083 = vmul.f32 1.0, %v1082
    %v1084 = vmul.f32 %v1066, %v1081
    %v1085 = vmul.f32 %v1069, %v1083
    %v1086 = vpack.c.bf16 %v1085, %v1084
    %v1087 = vld [vmem:[%s35] sm:$0xf]
    %v1088 = vld [vmem:[%s35 + $0x4] sm:$0xf]
    %v1089 = vld [vmem:[%s35 + $0x8] sm:$0xf]
    %v1090 = vld [vmem:[%s35 + $0xc] sm:$0xf]
    %v1091 = vld [vmem:[%s37] sm:$0x1]
    %v1093 = vlaneseq
    %v1094 = vshrl.u32 %v1093, 7
    %v1095 = vsub.s32 0, %v1094
    %v1096 = vrot.slane %v1091, %v1095
    %v1102 = vunpack.c.l.b16 %v1087
    %v1103 = vunpack.c.l.b16 %v1088
    %v1104 = vunpack.c.l.b16 %v1089
    %v1105 = vunpack.c.l.b16 %v1090
    %v1106 = vpack.c.b16 %v1103, %v1102
    %v1107 = vpack.c.b16 %v1105, %v1104
    %v1111 = vsel %vm270, %v1086, 0
    %1113 = vmatprep.subr.bf16.mxu0 0
    %1114 = vmatpush1.bf16.msra.mxu0 %v1106
    %1115 = vmatprep.subr.bf16.mxu0 0
    %1116 = vmatpush1.bf16.msra.mxu0 %v1107
    %1117 = vmatprep.subr.bf16.mxu0 0
    %1118 = vmatpush1.bf16.msra.mxu0 0
    %1119 = vmatprep.subr.bf16.mxu0 0
    %1120 = vmatpush1.bf16.msra.mxu0 0
    %1121 = vmatprep.subr.bf16.mxu0 0
    %1122 = vmatpush1.bf16.msra.mxu0 0
    %1123 = vmatprep.subr.bf16.mxu0 0
    %1124 = vmatpush1.bf16.msra.mxu0 0
    %1125 = vmatprep.subr.bf16.mxu0 0
    %1126 = vmatpush1.bf16.msra.mxu0 0
    %1127 = vmatprep.subr.bf16.mxu0 0
    %1128 = vmatpush1.bf16.msra.mxu0 0
    %1129 = vmatprep.subr.bf16.mxu0 0
    %1130 = vmatpush1.bf16.msra.mxu0 0
    %1131 = vmatprep.subr.bf16.mxu0 0
    %1132 = vmatpush1.bf16.msra.mxu0 0
    %1133 = vmatprep.subr.bf16.mxu0 0
    %1134 = vmatpush1.bf16.msra.mxu0 0
    %1135 = vmatprep.subr.bf16.mxu0 0
    %1136 = vmatpush1.bf16.msra.mxu0 0
    %1137 = vmatprep.subr.bf16.mxu0 0
    %1138 = vmatpush1.bf16.msra.mxu0 0
    %1139 = vmatprep.subr.bf16.mxu0 0
    %1140 = vmatpush1.bf16.msra.mxu0 0
    %1141 = vmatprep.subr.bf16.mxu0 0
    %1142 = vmatpush1.bf16.msra.mxu0 0
    %1143 = vmatprep.subr.bf16.mxu0 0
    %1144 = vmatpush1.bf16.msra.mxu0 0
    %1145 = vmatprep.mubr.bf16.mxu0 0
    %1146 = vmatmul.mubr.bf16.gmra.mrb[0].mxu0 %v1111
    %v1147 = vpop.f32.mrb[0].mxu0
    %v1148 = vadd.f32 %v1096, %v1147
    %v1149 = vpop.f32.mrb[0].mxu0
    %v1150 = vpop.f32.mrb[0].mxu0
    %v1151 = vadd.f32 %v1096, %v1150
    %v1152 = vpop.f32.mrb[0].mxu0
    %1153 = vdwg.mxu0
    %vm1154 = vcmp.gt.f32.partialorder %v1148, 0.0
    %vm1155 = vcmp.gt.f32.partialorder %v1151, 0.0
    %v1156 = vmul.f32 %v1148, 1.442695
    %v1157 = vpow.pop %v1156
    %v1158 = vmul.f32 %v1151, 1.442695
    %v1159 = vpow.pop %v1158
    %v1160 = vsub.f32 %v1157, 1.0
    %v1161 = vsub.f32 %v1159, 1.0
    %v1162 = vsel %vm1154, %v1148, %v1160
    %v1163 = vsel %vm1155, %v1151, %v1161
    %v1164 = vld [vmem:[%s45] sm:$0x1]
    %v1165 = vld [vmem:[%s47] sm:$0x1]
    %v1166 = vsel %vm270, %v1162, 0.0
    %v1167 = vsel %vm270, %v1163, 0.0
    %v1168 = vadd.f32 %v1166, %v1167
    %v1169 = vrot.slane %v1168, 4
    %v1170 = vadd.f32 %v1168, %v1169
    %v1171 = vrot.slane %v1170, 2
    %v1172 = vadd.f32 %v1170, %v1171
    %v1173 = vrot.slane %v1172, 1
    %v1174 = vadd.f32 %v1172, %v1173
    %v1175 = vmul.f32 %v1174, 0.0625
    %v1176 = vsub.f32 %v1162, %v1175
    %v1177 = vsub.f32 %v1163, %v1175
    %v1178 = vmul.f32 %v1176, %v1176
    %v1179 = vmul.f32 %v1177, %v1177
    %v1180 = vsel %vm270, %v1178, 0.0
    %v1181 = vsel %vm270, %v1179, 0.0
    %v1182 = vadd.f32 %v1180, %v1181
    %v1183 = vrot.slane %v1182, 4
    %v1184 = vadd.f32 %v1182, %v1183
    %v1185 = vrot.slane %v1184, 2
    %v1186 = vadd.f32 %v1184, %v1185
    %v1187 = vrot.slane %v1186, 1
    %v1188 = vadd.f32 %v1186, %v1187
    %v1189 = vmul.f32 %v1188, 0.0625
    %v1190 = vadd.f32 %v1189, 1e-05
    %v1191 = vrsqrt.pop %v1190
    %v1192 = vmul.f32 %v1176, %v1191
    %v1193 = vmul.f32 %v1177, %v1191
    %v1195 = vlaneseq
    %v1196 = vshrl.u32 %v1195, 7
    %v1197 = vsub.s32 0, %v1196
    %v1198 = vrot.slane %v1164, %v1197
    %v1200 = vmul.f32 %v1192, %v1198
    %v1201 = vmul.f32 %v1193, %v1198
    %v1203 = vlaneseq
    %v1204 = vshrl.u32 %v1203, 7
    %v1205 = vsub.s32 0, %v1204
    %v1206 = vrot.slane %v1165, %v1205
    %v1208 = vadd.f32 %v1200, %v1206
    %v1209 = vadd.f32 %v1201, %v1206
    %v1210 = vpack.c.bf16 %v1209, %v1208
    %v1211 = vld [vmem:[%s49] sm:$0xf]
    %v1212 = vld [vmem:[%s49 + $0x4] sm:$0xf]
    %v1213 = vld [vmem:[%s49 + $0x8] sm:$0xf]
    %v1214 = vld [vmem:[%s49 + $0xc] sm:$0xf]
    %v1215 = vld [vmem:[%s51] sm:$0x1]
    %v1217 = vlaneseq
    %v1218 = vshrl.u32 %v1217, 7
    %v1219 = vsub.s32 0, %v1218
    %v1220 = vrot.slane %v1215, %v1219
    %v1226 = vunpack.c.l.b16 %v1211
    %v1227 = vunpack.c.l.b16 %v1212
    %v1228 = vunpack.c.l.b16 %v1213
    %v1229 = vunpack.c.l.b16 %v1214
    %v1230 = vpack.c.b16 %v1227, %v1226
    %v1231 = vpack.c.b16 %v1229, %v1228
    %v1235 = vsel %vm270, %v1210, 0
    %1237 = vmatprep.subr.bf16.mxu0 0
    %1238 = vmatpush1.bf16.msra.mxu0 %v1230
    %1239 = vmatprep.subr.bf16.mxu0 0
    %1240 = vmatpush1.bf16.msra.mxu0 %v1231
    %1241 = vmatprep.subr.bf16.mxu0 0
    %1242 = vmatpush1.bf16.msra.mxu0 0
    %1243 = vmatprep.subr.bf16.mxu0 0
    %1244 = vmatpush1.bf16.msra.mxu0 0
    %1245 = vmatprep.subr.bf16.mxu0 0
    %1246 = vmatpush1.bf16.msra.mxu0 0
    %1247 = vmatprep.subr.bf16.mxu0 0
    %1248 = vmatpush1.bf16.msra.mxu0 0
    %1249 = vmatprep.subr.bf16.mxu0 0
    %1250 = vmatpush1.bf16.msra.mxu0 0
    %1251 = vmatprep.subr.bf16.mxu0 0
    %1252 = vmatpush1.bf16.msra.mxu0 0
    %1253 = vmatprep.subr.bf16.mxu0 0
    %1254 = vmatpush1.bf16.msra.mxu0 0
    %1255 = vmatprep.subr.bf16.mxu0 0
    %1256 = vmatpush1.bf16.msra.mxu0 0
    %1257 = vmatprep.subr.bf16.mxu0 0
    %1258 = vmatpush1.bf16.msra.mxu0 0
    %1259 = vmatprep.subr.bf16.mxu0 0
    %1260 = vmatpush1.bf16.msra.mxu0 0
    %1261 = vmatprep.subr.bf16.mxu0 0
    %1262 = vmatpush1.bf16.msra.mxu0 0
    %1263 = vmatprep.subr.bf16.mxu0 0
    %1264 = vmatpush1.bf16.msra.mxu0 0
    %1265 = vmatprep.subr.bf16.mxu0 0
    %1266 = vmatpush1.bf16.msra.mxu0 0
    %1267 = vmatprep.subr.bf16.mxu0 0
    %1268 = vmatpush1.bf16.msra.mxu0 0
    %1269 = vmatprep.mubr.bf16.mxu0 0
    %1270 = vmatmul.mubr.bf16.gmra.mrb[0].mxu0 %v1235
    %v1271 = vpop.f32.mrb[0].mxu0
    %v1272 = vadd.f32 %v1220, %v1271
    %v1273 = vpop.f32.mrb[0].mxu0
    %v1274 = vpop.f32.mrb[0].mxu0
    %v1275 = vadd.f32 %v1220, %v1274
    %v1276 = vpop.f32.mrb[0].mxu0
    %1277 = vdwg.mxu0
    %vm1278 = vcmp.gt.f32.partialorder %v1272, 0.0
    %vm1279 = vcmp.gt.f32.partialorder %v1275, 0.0
    %v1280 = vmul.f32 %v1272, 1.442695
    %v1281 = vpow.pop %v1280
    %v1282 = vmul.f32 %v1275, 1.442695
    %v1283 = vpow.pop %v1282
    %v1284 = vsub.f32 %v1281, 1.0
    %v1285 = vsub.f32 %v1283, 1.0
    %v1286 = vsel %vm1278, %v1272, %v1284
    %v1287 = vsel %vm1279, %v1275, %v1285
    loop: start=0, step=1, limit=2
    $region162: #{egnn_forward.1} parent=1 // loop_pre_header
      _
    $region163: #{egnn_forward.1} parent=1 // loop_header
      %s1289 = sphi 0, %s1293
      %p1290 = scmp.ge.s32.totalorder %s1289, 2
      %v1294 = vphi 0.0, %v1322
    $region164: #{egnn_forward.1} parent=1 // loop_header_branch
      %1292 = sbr.rel (%p1290) target = $region168
    $region165: #{egnn_forward.1} parent=1 // loop_body
      %v1295 = vstv %s1289
      %vm1296 = vcmp.eq.s32.totalorder %v180, %v1295
      %vm1297 = vcmp.eq.s32.totalorder %v181, %v1295
      %v1298 = vsel %vm1296, 1, 0
      %v1299 = vsel %vm1297, 1, 0
      %1300 = vset.pattern.permute.xlu0 0
      %1301 = vperm.xlu0 %1300, %v1298
      %v1302 = vpop.permute.xlu0 %1301
      %1303 = vset.pattern.permute.xlu0 0
      %1304 = vperm.xlu0 %1303, %v1299
      %v1305 = vpop.permute.xlu0 %1304
      %vm1306 = vcmp.eq.s32.totalorder %v1302, 1
      %vm1307 = vcmp.eq.s32.totalorder %v1305, 1
      %v1308 = vsel %vm1306, %v1286, -3e+38
      %v1309 = vsel %vm1307, %v1287, -3e+38
      %v1310 = vsel %vm270, %v1308, -inf
      %v1311 = vsel %vm270, %v1309, -inf
      %v1312 = vmax.f32 %v1310, %v1311
      %v1313 = vrot.slane %v1312, 4
      %v1314 = vmax.f32 %v1312, %v1313
      %v1315 = vrot.slane %v1314, 2
      %v1316 = vmax.f32 %v1314, %v1315
      %v1317 = vrot.slane %v1316, 1
      %v1318 = vmax.f32 %v1316, %v1317
      %vm1319 = vcmp.eq.s32.totalorder %v185, %v1295
      %v1320 = vsel %vm1319, 1.0, 0.0
      %v1321 = vmul.f32 %v1320, %v1318
      %v1322 = vadd.f32 %v1294, %v1321
    $region166: #{egnn_forward.1} parent=1 // loop_footer
      %s1293 = sadd.s32 1, %s1289
    $region167: #{egnn_forward.1} parent=1 // loop_footer_branch
      %1288 = sbr.rel target = $region163
    $region168: #{egnn_forward.1} parent=1 // loop_exit
      _
    %v1323 = vpack.c.bf16 %v1287, %v1286
    %v1325 = vsel %vm289, %v246, 0
    %1327 = vmatprep.subr.bf16.mxu0 0
    %1328 = vmatpush1.bf16.msra.mxu0 %v1323
    %1329 = vmatprep.subr.bf16.mxu0 0
    %1330 = vmatpush1.bf16.msra.mxu0 0
    %1331 = vmatprep.subr.bf16.mxu0 0
    %1332 = vmatpush1.bf16.msra.mxu0 0
    %1333 = vmatprep.subr.bf16.mxu0 0
    %1334 = vmatpush1.bf16.msra.mxu0 0
    %1335 = vmatprep.subr.bf16.mxu0 0
    %1336 = vmatpush1.bf16.msra.mxu0 0
    %1337 = vmatprep.subr.bf16.mxu0 0
    %1338 = vmatpush1.bf16.msra.mxu0 0
    %1339 = vmatprep.subr.bf16.mxu0 0
    %1340 = vmatpush1.bf16.msra.mxu0 0
    %1341 = vmatprep.subr.bf16.mxu0 0
    %1342 = vmatpush1.bf16.msra.mxu0 0
    %1343 = vmatprep.subr.bf16.mxu0 0
    %1344 = vmatpush1.bf16.msra.mxu0 0
    %1345 = vmatprep.subr.bf16.mxu0 0
    %1346 = vmatpush1.bf16.msra.mxu0 0
    %1347 = vmatprep.subr.bf16.mxu0 0
    %1348 = vmatpush1.bf16.msra.mxu0 0
    %1349 = vmatprep.subr.bf16.mxu0 0
    %1350 = vmatpush1.bf16.msra.mxu0 0
    %1351 = vmatprep.subr.bf16.mxu0 0
    %1352 = vmatpush1.bf16.msra.mxu0 0
    %1353 = vmatprep.subr.bf16.mxu0 0
    %1354 = vmatpush1.bf16.msra.mxu0 0
    %1355 = vmatprep.subr.bf16.mxu0 0
    %1356 = vmatpush1.bf16.msra.mxu0 0
    %1357 = vmatprep.subr.bf16.mxu0 0
    %1358 = vmatpush1.bf16.msra.mxu0 0
    %1359 = vmatprep.mubr.bf16.mxu0 0
    %1360 = vmatmul.mubr.bf16.gmra.mrb[0].mxu0 %v1325
    %v1361 = vpop.f32.mrb[0].mxu0
    %v1362 = vadd.f32 0.0, %v1361
    %v1363 = vpop.f32.mrb[0].mxu0
    %v1364 = vpop.f32.mrb[0].mxu0
    %v1365 = vpop.f32.mrb[0].mxu0
    %1366 = vdwg.mxu0
    %1368 = vset.pattern.permute.xlu0 0
    %1369 = vperm.xlu0 %1368, %v179
    %v1370 = vpop.permute.xlu0 %1369
    %v1372 = vmul.f32 %v1362, %v1370
    %s1373 = sld [smem:[#allocation7]]
    %s1374 = sld [smem:[#allocation7 + $0x1]]
    %s1375 = sld [smem:[#allocation7 + $0x2]]
    %v1376 = vstv %s1373
    %v1377 = vmul.f32 %v1376, %v1294
    %v1378 = vstv %s1374
    %v1379 = vmul.f32 %v1378, %v1372
    %v1380 = vadd.f32 %v1377, %v1379
    %v1381 = vstv %s1375
    %v1382 = vadd.f32 %v1380, %v1381
    %vm1383 = vcmp.gt.f32.partialorder %v1382, 0.0
    %v1384 = vmul.f32 %v1382, 1.442695
    %v1385 = vpow.pop %v1384
    %v1386 = vsub.f32 %v1385, 1.0
    %v1387 = vsel %vm1383, %v1382, %v1386
    %v1388 = vpack.c.bf16 %v1387, %v1387
    %vm1389 = vcmask 15360
    %v1391 = vsel %vm1389, %v257, 0
    %vm1393 = vcmask 1040384
    %v1395 = vsel %vm1393, %v1388, 0
    %1397 = vmatprep.subr.bf16.mxu0 0
    %1398 = vmatpush1.bf16.msra.mxu0 %v1395
    %1399 = vmatprep.subr.bf16.mxu0 0
    %1400 = vmatpush1.bf16.msra.mxu0 0
    %1401 = vmatprep.subr.bf16.mxu0 0
    %1402 = vmatpush1.bf16.msra.mxu0 0
    %1403 = vmatprep.subr.bf16.mxu0 0
    %1404 = vmatpush1.bf16.msra.mxu0 0
    %1405 = vmatprep.subr.bf16.mxu0 0
    %1406 = vmatpush1.bf16.msra.mxu0 0
    %1407 = vmatprep.subr.bf16.mxu0 0
    %1408 = vmatpush1.bf16.msra.mxu0 0
    %1409 = vmatprep.subr.bf16.mxu0 0
    %1410 = vmatpush1.bf16.msra.mxu0 0
    %1411 = vmatprep.subr.bf16.mxu0 0
    %1412 = vmatpush1.bf16.msra.mxu0 0
    %1413 = vmatprep.subr.bf16.mxu0 0
    %1414 = vmatpush1.bf16.msra.mxu0 0
    %1415 = vmatprep.subr.bf16.mxu0 0
    %1416 = vmatpush1.bf16.msra.mxu0 0
    %1417 = vmatprep.subr.bf16.mxu0 0
    %1418 = vmatpush1.bf16.msra.mxu0 0
    %1419 = vmatprep.subr.bf16.mxu0 0
    %1420 = vmatpush1.bf16.msra.mxu0 0
    %1421 = vmatprep.subr.bf16.mxu0 0
    %1422 = vmatpush1.bf16.msra.mxu0 0
    %1423 = vmatprep.subr.bf16.mxu0 0
    %1424 = vmatpush1.bf16.msra.mxu0 0
    %1425 = vmatprep.subr.bf16.mxu0 0
    %1426 = vmatpush1.bf16.msra.mxu0 0
    %1427 = vmatprep.subr.bf16.mxu0 0
    %1428 = vmatpush1.bf16.msra.mxu0 0
    %1429 = vmatprep.mubr.bf16.mxu0 0
    %1430 = vmatmul.mubr.bf16.gmra.mrb[0].mxu0 %v1391
    %v1431 = vpop.f32.mrb[0].mxu0
    %v1432 = vadd.f32 0.0, %v1431
    %v1433 = vpop.f32.mrb[0].mxu0
    %v1434 = vpop.f32.mrb[0].mxu0
    %v1435 = vadd.f32 0.0, %v1434
    %v1436 = vpop.f32.mrb[0].mxu0
    %1437 = vdwg.mxu0
    %v1438 = vadd.f32 %v1208, %v1432
    %v1439 = vadd.f32 %v1209, %v1435
    %1440 = vst.msk [vmem:[#allocation2] sm:$0xff] %vm270, %v1438
    %1441 = vst.msk [vmem:[#allocation2 + $0x8] sm:$0xff] %vm270, %v1439
    %1442 = vst.msk [vmem:[#allocation2] sm:$0xff] %vm283, %v978
    %1443 = vst.msk [vmem:[#allocation2 + $0x8] sm:$0xff] %vm283, %v979
    %v1444 = vld [vmem:[#allocation2] sm:$0xff]
    %v1445 = vld [vmem:[#allocation2 + $0x8] sm:$0xff]
    %v1446 = vpack.c.bf16 %v1445, %v1444
    %1447 = vmatprep.subr.bf16.mxu0 0
    %1448 = vmatpush1.bf16.msra.mxu0 %v1446
    %1449 = vmatprep.subr.bf16.mxu0 0
    %1450 = vmatpush1.bf16.msra.mxu0 0
    %1451 = vmatprep.subr.bf16.mxu0 0
    %1452 = vmatpush1.bf16.msra.mxu0 0
    %1453 = vmatprep.subr.bf16.mxu0 0
    %1454 = vmatpush1.bf16.msra.mxu0 0
    %1455 = vmatprep.subr.bf16.mxu0 0
    %1456 = vmatpush1.bf16.msra.mxu0 0
    %1457 = vmatprep.subr.bf16.mxu0 0
    %1458 = vmatpush1.bf16.msra.mxu0 0
    %1459 = vmatprep.subr.bf16.mxu0 0
    %1460 = vmatpush1.bf16.msra.mxu0 0
    %1461 = vmatprep.subr.bf16.mxu0 0
    %1462 = vmatpush1.bf16.msra.mxu0 0
    %1463 = vmatprep.subr.bf16.mxu0 0
    %1464 = vmatpush1.bf16.msra.mxu0 0
    %1465 = vmatprep.subr.bf16.mxu0 0
    %1466 = vmatpush1.bf16.msra.mxu0 0
    %1467 = vmatprep.subr.bf16.mxu0 0
    %1468 = vmatpush1.bf16.msra.mxu0 0
    %1469 = vmatprep.subr.bf16.mxu0 0
    %1470 = vmatpush1.bf16.msra.mxu0 0
    %1471 = vmatprep.subr.bf16.mxu0 0
    %1472 = vmatpush1.bf16.msra.mxu0 0
    %1473 = vmatprep.subr.bf16.mxu0 0
    %1474 = vmatpush1.bf16.msra.mxu0 0
    %1475 = vmatprep.subr.bf16.mxu0 0
    %1476 = vmatpush1.bf16.msra.mxu0 0
    %1477 = vmatprep.subr.bf16.mxu0 0
    %1478 = vmatpush1.bf16.msra.mxu0 0
    %1479 = vmatprep.mubr.bf16.mxu0 0
    %1480 = vmatmul.mubr.bf16.gmra.mrb[0].mxu0 %v291
    %v1481 = vpop.f32.mrb[0].mxu0
    %v1482 = vadd.f32 0.0, %v1481
    %v1483 = vpop.f32.mrb[0].mxu0
    %v1484 = vpop.f32.mrb[0].mxu0
    %v1485 = vadd.f32 0.0, %v1484
    %v1486 = vpop.f32.mrb[0].mxu0
    %1487 = vmatprep.mubr.bf16.mxu0 0
    %1488 = vmatmul.mubr.bf16.gmra.mrb[0].mxu0 %v294
    %v1489 = vpop.f32.mrb[0].mxu0
    %v1490 = vadd.f32 0.0, %v1489
    %v1491 = vpop.f32.mrb[0].mxu0
    %v1492 = vpop.f32.mrb[0].mxu0
    %v1493 = vadd.f32 0.0, %v1492
    %v1494 = vpop.f32.mrb[0].mxu0
    %1495 = vdwg.mxu0
    %1496 = vmatprep.subr.bf16.mxu0 0
    %1497 = vmatpush1.bf16.msra.mxu0 %v1446
    %1498 = vmatprep.subr.bf16.mxu0 0
    %1499 = vmatpush1.bf16.msra.mxu0 0
    %1500 = vmatprep.subr.bf16.mxu0 0
    %1501 = vmatpush1.bf16.msra.mxu0 0
    %1502 = vmatprep.subr.bf16.mxu0 0
    %1503 = vmatpush1.bf16.msra.mxu0 0
    %1504 = vmatprep.subr.bf16.mxu0 0
    %1505 = vmatpush1.bf16.msra.mxu0 0
    %1506 = vmatprep.subr.bf16.mxu0 0
    %1507 = vmatpush1.bf16.msra.mxu0 0
    %1508 = vmatprep.subr.bf16.mxu0 0
    %1509 = vmatpush1.bf16.msra.mxu0 0
    %1510 = vmatprep.subr.bf16.mxu0 0
    %1511 = vmatpush1.bf16.msra.mxu0 0
    %1512 = vmatprep.subr.bf16.mxu0 0
    %1513 = vmatpush1.bf16.msra.mxu0 0
    %1514 = vmatprep.subr.bf16.mxu0 0
    %1515 = vmatpush1.bf16.msra.mxu0 0
    %1516 = vmatprep.subr.bf16.mxu0 0
    %1517 = vmatpush1.bf16.msra.mxu0 0
    %1518 = vmatprep.subr.bf16.mxu0 0
    %1519 = vmatpush1.bf16.msra.mxu0 0
    %1520 = vmatprep.subr.bf16.mxu0 0
    %1521 = vmatpush1.bf16.msra.mxu0 0
    %1522 = vmatprep.subr.bf16.mxu0 0
    %1523 = vmatpush1.bf16.msra.mxu0 0
    %1524 = vmatprep.subr.bf16.mxu0 0
    %1525 = vmatpush1.bf16.msra.mxu0 0
    %1526 = vmatprep.subr.bf16.mxu0 0
    %1527 = vmatpush1.bf16.msra.mxu0 0
    %1528 = vmatprep.mubr.bf16.mxu0 0
    %1529 = vmatmul.mubr.bf16.gmra.mrb[0].mxu0 %v346
    %v1530 = vpop.f32.mrb[0].mxu0
    %v1531 = vadd.f32 0.0, %v1530
    %v1532 = vpop.f32.mrb[0].mxu0
    %v1533 = vpop.f32.mrb[0].mxu0
    %v1534 = vadd.f32 0.0, %v1533
    %v1535 = vpop.f32.mrb[0].mxu0
    %1536 = vmatprep.mubr.bf16.mxu0 0
    %1537 = vmatmul.mubr.bf16.gmra.mrb[0].mxu0 %v349
    %v1538 = vpop.f32.mrb[0].mxu0
    %v1539 = vadd.f32 0.0, %v1538
    %v1540 = vpop.f32.mrb[0].mxu0
    %v1541 = vpop.f32.mrb[0].mxu0
    %v1542 = vadd.f32 0.0, %v1541
    %v1543 = vpop.f32.mrb[0].mxu0
    %1544 = vdwg.mxu0
    %v1545 = vsub.f32 %v1482, %v1531
    %v1546 = vsub.f32 %v1485, %v1534
    %v1547 = vsub.f32 %v1490, %v1539
    %v1548 = vsub.f32 %v1493, %v1542
    %v1549 = vmul.f32 %v1545, %v1545
    %v1550 = vmul.f32 %v1546, %v1546
    %v1551 = vmul.f32 %v1547, %v1547
    %v1552 = vmul.f32 %v1548, %v1548
    %1557 = vrot.lane.b32.xlu0 %v1549, 96
    %v1558 = vpop.permute.xlu0 %1557
    %1559 = vrot.lane.b32.xlu0 %v1550, 96
    %v1560 = vpop.permute.xlu0 %1559
    %1561 = vrot.lane.b32.xlu0 %v1551, 96
    %v1562 = vpop.permute.xlu0 %1561
    %1563 = vrot.lane.b32.xlu0 %v1552, 96
    %v1564 = vpop.permute.xlu0 %1563
    %v1569 = vsel %vm424, %v1558, 0.0
    %1570 = vadd.xlane.f32.xlu0 %v1569
    %v1571 = vpop.xlane.xlu0 %1570
    %v1572 = vsel %vm424, %v1560, 0.0
    %1573 = vadd.xlane.f32.xlu0 %v1572
    %v1574 = vpop.xlane.xlu0 %1573
    %v1575 = vsel %vm424, %v1562, 0.0
    %1576 = vadd.xlane.f32.xlu0 %v1575
    %v1577 = vpop.xlane.xlu0 %1576
    %v1578 = vsel %vm424, %v1564, 0.0
    %1579 = vadd.xlane.f32.xlu0 %v1578
    %v1580 = vpop.xlane.xlu0 %1579
    %v1581 = vpack.c.bf16 %v1485, %v1482
    %v1582 = vpack.c.bf16 %v1493, %v1490
    %1583 = vst.msk [vmem:[#allocation4] sm:$0xff] %vm270, %v1581
    %1584 = vst.msk [vmem:[#allocation4 + $0x8] sm:$0xff] %vm270, %v1582
    %v1585 = vpack.c.bf16 %v1534, %v1531
    %v1586 = vpack.c.bf16 %v1542, %v1539
    %1589 = vrot.lane.b32.xlu0 %v1585, 32
    %v1590 = vpop.permute.xlu0 %1589
    %1591 = vrot.lane.b32.xlu0 %v1586, 32
    %v1592 = vpop.permute.xlu0 %1591
    %1595 = vst.msk [vmem:[#allocation4] sm:$0xff] %vm451, %v1590
    %1596 = vst.msk [vmem:[#allocation4 + $0x8] sm:$0xff] %vm451, %v1592
    %v1597 = vpack.c.bf16 %v1574, %v1571
    %v1598 = vpack.c.bf16 %v1580, %v1577
    %1599 = vst.msk [vmem:[#allocation4] sm:$0xff] %vm456, %v1597
    %1600 = vst.msk [vmem:[#allocation4 + $0x8] sm:$0xff] %vm456, %v1598
    %v1601 = vld [vmem:[#allocation4] sm:$0xff]
    %v1602 = vld [vmem:[#allocation4 + $0x8] sm:$0xff]
    %s1603 = scalar_lea.vmem %s23, 36
    %v1604 = vld [vmem:[%s1603] sm:$0xf]
    %v1605 = vld [vmem:[%s1603 + $0x4] sm:$0xf]
    %v1606 = vld [vmem:[%s1603 + $0x8] sm:$0xf]
    %v1607 = vld [vmem:[%s1603 + $0xc] sm:$0xf]
    %v1608 = vld [vmem:[%s1603 + $0x10] sm:$0xf]
    %v1609 = vld [vmem:[%s1603 + $0x14] sm:$0xf]
    %v1610 = vld [vmem:[%s1603 + $0x18] sm:$0xf]
    %v1611 = vld [vmem:[%s1603 + $0x1c] sm:$0xf]
    %v1612 = vld [vmem:[%s1603 + $0x20] sm:$0xf]
    %s1613 = scalar_lea.vmem %s25, 1
    %v1614 = vld [vmem:[%s1613] sm:$0x1]
    %v1616 = vlaneseq
    %v1617 = vshrl.u32 %v1616, 7
    %v1618 = vsub.s32 0, %v1617
    %v1619 = vrot.slane %v1614, %v1618
    %v1630 = vunpack.c.l.b16 %v1604
    %v1631 = vunpack.c.l.b16 %v1605
    %v1632 = vunpack.c.l.b16 %v1606
    %v1633 = vunpack.c.l.b16 %v1607
    %v1634 = vunpack.c.l.b16 %v1608
    %v1635 = vunpack.c.l.b16 %v1609
    %v1636 = vunpack.c.l.b16 %v1610
    %v1637 = vunpack.c.l.b16 %v1611
    %v1638 = vunpack.c.l.b16 %v1612
    %v1639 = vpack.c.b16 %v1631, %v1630
    %v1640 = vpack.c.b16 %v1633, %v1632
    %v1641 = vpack.c.b16 %v1635, %v1634
    %v1642 = vpack.c.b16 %v1637, %v1636
    %v1643 = vpack.c.b16 %v1638, %v1638
    %v1649 = vsel %vm263, %v1601, 0
    %v1652 = vsel %vm263, %v1602, 0
    %v1655 = vsel %vm510, %v1643, 0
    %1657 = vmatprep.subr.bf16.mxu0 0
    %1658 = vmatpush1.bf16.msra.mxu0 %v1639
    %1659 = vmatprep.subr.bf16.mxu0 0
    %1660 = vmatpush1.bf16.msra.mxu0 %v1640
    %1661 = vmatprep.subr.bf16.mxu0 0
    %1662 = vmatpush1.bf16.msra.mxu0 %v1641
    %1663 = vmatprep.subr.bf16.mxu0 0
    %1664 = vmatpush1.bf16.msra.mxu0 %v1642
    %1665 = vmatprep.subr.bf16.mxu0 0
    %1666 = vmatpush1.bf16.msra.mxu0 %v1655
    %1667 = vmatprep.subr.bf16.mxu0 0
    %1668 = vmatpush1.bf16.msra.mxu0 0
    %1669 = vmatprep.subr.bf16.mxu0 0
    %1670 = vmatpush1.bf16.msra.mxu0 0
    %1671 = vmatprep.subr.bf16.mxu0 0
    %1672 = vmatpush1.bf16.msra.mxu0 0
    %1673 = vmatprep.subr.bf16.mxu0 0
    %1674 = vmatpush1.bf16.msra.mxu0 0
    %1675 = vmatprep.subr.bf16.mxu0 0
    %1676 = vmatpush1.bf16.msra.mxu0 0
    %1677 = vmatprep.subr.bf16.mxu0 0
    %1678 = vmatpush1.bf16.msra.mxu0 0
    %1679 = vmatprep.subr.bf16.mxu0 0
    %1680 = vmatpush1.bf16.msra.mxu0 0
    %1681 = vmatprep.subr.bf16.mxu0 0
    %1682 = vmatpush1.bf16.msra.mxu0 0
    %1683 = vmatprep.subr.bf16.mxu0 0
    %1684 = vmatpush1.bf16.msra.mxu0 0
    %1685 = vmatprep.subr.bf16.mxu0 0
    %1686 = vmatpush1.bf16.msra.mxu0 0
    %1687 = vmatprep.subr.bf16.mxu0 0
    %1688 = vmatpush1.bf16.msra.mxu0 0
    %1689 = vmatprep.mubr.bf16.mxu0 0
    %1690 = vmatmul.mubr.bf16.gmra.mrb[0].mxu0 %v1649
    %v1691 = vpop.f32.mrb[0].mxu0
    %v1692 = vadd.f32 %v1619, %v1691
    %v1693 = vpop.f32.mrb[0].mxu0
    %v1694 = vpop.f32.mrb[0].mxu0
    %v1695 = vadd.f32 %v1619, %v1694
    %v1696 = vpop.f32.mrb[0].mxu0
    %1697 = vmatprep.mubr.bf16.mxu0 0
    %1698 = vmatmul.mubr.bf16.gmra.mrb[0].mxu0 %v1652
    %v1699 = vpop.f32.mrb[0].mxu0
    %v1700 = vadd.f32 %v1619, %v1699
    %v1701 = vpop.f32.mrb[0].mxu0
    %v1702 = vpop.f32.mrb[0].mxu0
    %v1703 = vadd.f32 %v1619, %v1702
    %v1704 = vpop.f32.mrb[0].mxu0
    %1705 = vdwg.mxu0
    %v1706 = vxor.u32 %v1692, 2147483648
    %v1707 = vxor.u32 %v1695, 2147483648
    %v1708 = vxor.u32 %v1700, 2147483648
    %v1709 = vxor.u32 %v1703, 2147483648
    %v1710 = vmul.f32 %v1706, 1.442695
    %v1711 = vpow.pop %v1710
    %v1712 = vmul.f32 %v1707, 1.442695
    %v1713 = vpow.pop %v1712
    %v1714 = vmul.f32 %v1708, 1.442695
    %v1715 = vpow.pop %v1714
    %v1716 = vmul.f32 %v1709, 1.442695
    %v1717 = vpow.pop %v1716
    %v1718 = vadd.f32 %v1711, 1.0
    %v1719 = vadd.f32 %v1713, 1.0
    %v1720 = vadd.f32 %v1715, 1.0
    %v1721 = vadd.f32 %v1717, 1.0
    %v1722 = vrcp.pop %v1718
    %v1723 = vmul.f32 1.0, %v1722
    %v1724 = vrcp.pop %v1719
    %v1725 = vmul.f32 1.0, %v1724
    %v1726 = vrcp.pop %v1720
    %v1727 = vmul.f32 1.0, %v1726
    %v1728 = vrcp.pop %v1721
    %v1729 = vmul.f32 1.0, %v1728
    %v1730 = vmul.f32 %v1692, %v1723
    %v1731 = vmul.f32 %v1695, %v1725
    %v1732 = vmul.f32 %v1700, %v1727
    %v1733 = vmul.f32 %v1703, %v1729
    %v1734 = vpack.c.bf16 %v1731, %v1730
    %v1735 = vpack.c.bf16 %v1733, %v1732
    %s1736 = scalar_lea.vmem %s27, 16
    %v1737 = vld [vmem:[%s1736] sm:$0xf]
    %v1738 = vld [vmem:[%s1736 + $0x4] sm:$0xf]
    %v1739 = vld [vmem:[%s1736 + $0x8] sm:$0xf]
    %v1740 = vld [vmem:[%s1736 + $0xc] sm:$0xf]
    %s1741 = scalar_lea.vmem %s29, 1
    %v1742 = vld [vmem:[%s1741] sm:$0x1]
    %v1744 = vlaneseq
    %v1745 = vshrl.u32 %v1744, 7
    %v1746 = vsub.s32 0, %v1745
    %v1747 = vrot.slane %v1742, %v1746
    %v1753 = vunpack.c.l.b16 %v1737
    %v1754 = vunpack.c.l.b16 %v1738
    %v1755 = vunpack.c.l.b16 %v1739
    %v1756 = vunpack.c.l.b16 %v1740
    %v1757 = vpack.c.b16 %v1754, %v1753
    %v1758 = vpack.c.b16 %v1756, %v1755
    %v1762 = vsel %vm270, %v1734, 0
    %v1765 = vsel %vm270, %v1735, 0
    %1767 = vmatprep.subr.bf16.mxu0 0
    %1768 = vmatpush1.bf16.msra.mxu0 %v1757
    %1769 = vmatprep.subr.bf16.mxu0 0
    %1770 = vmatpush1.bf16.msra.mxu0 %v1758
    %1771 = vmatprep.subr.bf16.mxu0 0
    %1772 = vmatpush1.bf16.msra.mxu0 0
    %1773 = vmatprep.subr.bf16.mxu0 0
    %1774 = vmatpush1.bf16.msra.mxu0 0
    %1775 = vmatprep.subr.bf16.mxu0 0
    %1776 = vmatpush1.bf16.msra.mxu0 0
    %1777 = vmatprep.subr.bf16.mxu0 0
    %1778 = vmatpush1.bf16.msra.mxu0 0
    %1779 = vmatprep.subr.bf16.mxu0 0
    %1780 = vmatpush1.bf16.msra.mxu0 0
    %1781 = vmatprep.subr.bf16.mxu0 0
    %1782 = vmatpush1.bf16.msra.mxu0 0
    %1783 = vmatprep.subr.bf16.mxu0 0
    %1784 = vmatpush1.bf16.msra.mxu0 0
    %1785 = vmatprep.subr.bf16.mxu0 0
    %1786 = vmatpush1.bf16.msra.mxu0 0
    %1787 = vmatprep.subr.bf16.mxu0 0
    %1788 = vmatpush1.bf16.msra.mxu0 0
    %1789 = vmatprep.subr.bf16.mxu0 0
    %1790 = vmatpush1.bf16.msra.mxu0 0
    %1791 = vmatprep.subr.bf16.mxu0 0
    %1792 = vmatpush1.bf16.msra.mxu0 0
    %1793 = vmatprep.subr.bf16.mxu0 0
    %1794 = vmatpush1.bf16.msra.mxu0 0
    %1795 = vmatprep.subr.bf16.mxu0 0
    %1796 = vmatpush1.bf16.msra.mxu0 0
    %1797 = vmatprep.subr.bf16.mxu0 0
    %1798 = vmatpush1.bf16.msra.mxu0 0
    %1799 = vmatprep.mubr.bf16.mxu0 0
    %1800 = vmatmul.mubr.bf16.gmra.mrb[0].mxu0 %v1762
    %v1801 = vpop.f32.mrb[0].mxu0
    %v1802 = vadd.f32 %v1747, %v1801
    %v1803 = vpop.f32.mrb[0].mxu0
    %v1804 = vpop.f32.mrb[0].mxu0
    %v1805 = vadd.f32 %v1747, %v1804
    %v1806 = vpop.f32.mrb[0].mxu0
    %1807 = vmatprep.mubr.bf16.mxu0 0
    %1808 = vmatmul.mubr.bf16.gmra.mrb[0].mxu0 %v1765
    %v1809 = vpop.f32.mrb[0].mxu0
    %v1810 = vadd.f32 %v1747, %v1809
    %v1811 = vpop.f32.mrb[0].mxu0
    %v1812 = vpop.f32.mrb[0].mxu0
    %v1813 = vadd.f32 %v1747, %v1812
    %v1814 = vpop.f32.mrb[0].mxu0
    %1815 = vdwg.mxu0
    %v1816 = vxor.u32 %v1802, 2147483648
    %v1817 = vxor.u32 %v1805, 2147483648
    %v1818 = vxor.u32 %v1810, 2147483648
    %v1819 = vxor.u32 %v1813, 2147483648
    %v1820 = vmul.f32 %v1816, 1.442695
    %v1821 = vpow.pop %v1820
    %v1822 = vmul.f32 %v1817, 1.442695
    %v1823 = vpow.pop %v1822
    %v1824 = vmul.f32 %v1818, 1.442695
    %v1825 = vpow.pop %v1824
    %v1826 = vmul.f32 %v1819, 1.442695
    %v1827 = vpow.pop %v1826
    %v1828 = vadd.f32 %v1821, 1.0
    %v1829 = vadd.f32 %v1823, 1.0
    %v1830 = vadd.f32 %v1825, 1.0
    %v1831 = vadd.f32 %v1827, 1.0
    %v1832 = vrcp.pop %v1828
    %v1833 = vmul.f32 1.0, %v1832
    %v1834 = vrcp.pop %v1829
    %v1835 = vmul.f32 1.0, %v1834
    %v1836 = vrcp.pop %v1830
    %v1837 = vmul.f32 1.0, %v1836
    %v1838 = vrcp.pop %v1831
    %v1839 = vmul.f32 1.0, %v1838
    %v1840 = vmul.f32 %v1802, %v1833
    %v1841 = vmul.f32 %v1805, %v1835
    %v1842 = vmul.f32 %v1810, %v1837
    %v1843 = vmul.f32 %v1813, %v1839
    %v1844 = vpack.c.bf16 %v1841, %v1840
    %v1845 = vpack.c.bf16 %v1843, %v1842
    %s1846 = scalar_lea.vmem %s39, 16
    %v1847 = vld [vmem:[%s1846] sm:$0xf]
    %v1848 = vld [vmem:[%s1846 + $0x4] sm:$0xf]
    %v1849 = vld [vmem:[%s1846 + $0x8] sm:$0xf]
    %v1850 = vld [vmem:[%s1846 + $0xc] sm:$0xf]
    %s1851 = scalar_lea.vmem %s41, 1
    %v1852 = vld [vmem:[%s1851] sm:$0x1]
    %v1854 = vlaneseq
    %v1855 = vshrl.u32 %v1854, 7
    %v1856 = vsub.s32 0, %v1855
    %v1857 = vrot.slane %v1852, %v1856
    %v1863 = vunpack.c.l.b16 %v1847
    %v1864 = vunpack.c.l.b16 %v1848
    %v1865 = vunpack.c.l.b16 %v1849
    %v1866 = vunpack.c.l.b16 %v1850
    %v1867 = vpack.c.b16 %v1864, %v1863
    %v1868 = vpack.c.b16 %v1866, %v1865
    %v1872 = vsel %vm270, %v1844, 0
    %v1875 = vsel %vm270, %v1845, 0
    %1877 = vmatprep.subr.bf16.mxu0 0
    %1878 = vmatpush1.bf16.msra.mxu0 %v1867
    %1879 = vmatprep.subr.bf16.mxu0 0
    %1880 = vmatpush1.bf16.msra.mxu0 %v1868
    %1881 = vmatprep.subr.bf16.mxu0 0
    %1882 = vmatpush1.bf16.msra.mxu0 0
    %1883 = vmatprep.subr.bf16.mxu0 0
    %1884 = vmatpush1.bf16.msra.mxu0 0
    %1885 = vmatprep.subr.bf16.mxu0 0
    %1886 = vmatpush1.bf16.msra.mxu0 0
    %1887 = vmatprep.subr.bf16.mxu0 0
    %1888 = vmatpush1.bf16.msra.mxu0 0
    %1889 = vmatprep.subr.bf16.mxu0 0
    %1890 = vmatpush1.bf16.msra.mxu0 0
    %1891 = vmatprep.subr.bf16.mxu0 0
    %1892 = vmatpush1.bf16.msra.mxu0 0
    %1893 = vmatprep.subr.bf16.mxu0 0
    %1894 = vmatpush1.bf16.msra.mxu0 0
    %1895 = vmatprep.subr.bf16.mxu0 0
    %1896 = vmatpush1.bf16.msra.mxu0 0
    %1897 = vmatprep.subr.bf16.mxu0 0
    %1898 = vmatpush1.bf16.msra.mxu0 0
    %1899 = vmatprep.subr.bf16.mxu0 0
    %1900 = vmatpush1.bf16.msra.mxu0 0
    %1901 = vmatprep.subr.bf16.mxu0 0
    %1902 = vmatpush1.bf16.msra.mxu0 0
    %1903 = vmatprep.subr.bf16.mxu0 0
    %1904 = vmatpush1.bf16.msra.mxu0 0
    %1905 = vmatprep.subr.bf16.mxu0 0
    %1906 = vmatpush1.bf16.msra.mxu0 0
    %1907 = vmatprep.subr.bf16.mxu0 0
    %1908 = vmatpush1.bf16.msra.mxu0 0
    %1909 = vmatprep.mubr.bf16.mxu0 0
    %1910 = vmatmul.mubr.bf16.gmra.mrb[0].mxu0 %v1872
    %v1911 = vpop.f32.mrb[0].mxu0
    %v1912 = vadd.f32 %v1857, %v1911
    %v1913 = vpop.f32.mrb[0].mxu0
    %v1914 = vpop.f32.mrb[0].mxu0
    %v1915 = vadd.f32 %v1857, %v1914
    %v1916 = vpop.f32.mrb[0].mxu0
    %1917 = vmatprep.mubr.bf16.mxu0 0
    %1918 = vmatmul.mubr.bf16.gmra.mrb[0].mxu0 %v1875
    %v1919 = vpop.f32.mrb[0].mxu0
    %v1920 = vadd.f32 %v1857, %v1919
    %v1921 = vpop.f32.mrb[0].mxu0
    %v1922 = vpop.f32.mrb[0].mxu0
    %v1923 = vadd.f32 %v1857, %v1922
    %v1924 = vpop.f32.mrb[0].mxu0
    %1925 = vdwg.mxu0
    %v1926 = vxor.u32 %v1912, 2147483648
    %v1927 = vxor.u32 %v1915, 2147483648
    %v1928 = vxor.u32 %v1920, 2147483648
    %v1929 = vxor.u32 %v1923, 2147483648
    %v1930 = vmul.f32 %v1926, 1.442695
    %v1931 = vpow.pop %v1930
    %v1932 = vmul.f32 %v1927, 1.442695
    %v1933 = vpow.pop %v1932
    %v1934 = vmul.f32 %v1928, 1.442695
    %v1935 = vpow.pop %v1934
    %v1936 = vmul.f32 %v1929, 1.442695
    %v1937 = vpow.pop %v1936
    %v1938 = vadd.f32 %v1931, 1.0
    %v1939 = vadd.f32 %v1933, 1.0
    %v1940 = vadd.f32 %v1935, 1.0
    %v1941 = vadd.f32 %v1937, 1.0
    %v1942 = vrcp.pop %v1938
    %v1943 = vmul.f32 1.0, %v1942
    %v1944 = vrcp.pop %v1939
    %v1945 = vmul.f32 1.0, %v1944
    %v1946 = vrcp.pop %v1940
    %v1947 = vmul.f32 1.0, %v1946
    %v1948 = vrcp.pop %v1941
    %v1949 = vmul.f32 1.0, %v1948
    %v1950 = vmul.f32 %v1912, %v1943
    %v1951 = vmul.f32 %v1915, %v1945
    %v1952 = vmul.f32 %v1920, %v1947
    %v1953 = vmul.f32 %v1923, %v1949
    %v1954 = vpack.c.bf16 %v1951, %v1950
    %v1955 = vpack.c.bf16 %v1953, %v1952
    %s1956 = scalar_lea.vmem %s43, 16
    %v1957 = vld [vmem:[%s1956] sm:$0xf]
    %v1958 = vld [vmem:[%s1956 + $0x4] sm:$0xf]
    %v1959 = vld [vmem:[%s1956 + $0x8] sm:$0xf]
    %v1960 = vld [vmem:[%s1956 + $0xc] sm:$0xf]
    %v1965 = vunpack.c.l.b16 %v1957
    %v1966 = vunpack.c.l.b16 %v1958
    %v1967 = vunpack.c.l.b16 %v1959
    %v1968 = vunpack.c.l.b16 %v1960
    %v1969 = vpack.c.b16 %v1966, %v1965
    %v1970 = vpack.c.b16 %v1968, %v1967
    %v1974 = vsel %vm270, %v1954, 0
    %v1977 = vsel %vm270, %v1955, 0
    %1979 = vmatprep.subr.bf16.mxu0 0
    %1980 = vmatpush1.bf16.msra.mxu0 %v1969
    %1981 = vmatprep.subr.bf16.mxu0 0
    %1982 = vmatpush1.bf16.msra.mxu0 %v1970
    %1983 = vmatprep.subr.bf16.mxu0 0
    %1984 = vmatpush1.bf16.msra.mxu0 0
    %1985 = vmatprep.subr.bf16.mxu0 0
    %1986 = vmatpush1.bf16.msra.mxu0 0
    %1987 = vmatprep.subr.bf16.mxu0 0
    %1988 = vmatpush1.bf16.msra.mxu0 0
    %1989 = vmatprep.subr.bf16.mxu0 0
    %1990 = vmatpush1.bf16.msra.mxu0 0
    %1991 = vmatprep.subr.bf16.mxu0 0
    %1992 = vmatpush1.bf16.msra.mxu0 0
    %1993 = vmatprep.subr.bf16.mxu0 0
    %1994 = vmatpush1.bf16.msra.mxu0 0
    %1995 = vmatprep.subr.bf16.mxu0 0
    %1996 = vmatpush1.bf16.msra.mxu0 0
    %1997 = vmatprep.subr.bf16.mxu0 0
    %1998 = vmatpush1.bf16.msra.mxu0 0
    %1999 = vmatprep.subr.bf16.mxu0 0
    %2000 = vmatpush1.bf16.msra.mxu0 0
    %2001 = vmatprep.subr.bf16.mxu0 0
    %2002 = vmatpush1.bf16.msra.mxu0 0
    %2003 = vmatprep.subr.bf16.mxu0 0
    %2004 = vmatpush1.bf16.msra.mxu0 0
    %2005 = vmatprep.subr.bf16.mxu0 0
    %2006 = vmatpush1.bf16.msra.mxu0 0
    %2007 = vmatprep.subr.bf16.mxu0 0
    %2008 = vmatpush1.bf16.msra.mxu0 0
    %2009 = vmatprep.subr.bf16.mxu0 0
    %2010 = vmatpush1.bf16.msra.mxu0 0
    %2011 = vmatprep.mubr.bf16.mxu0 0
    %2012 = vmatmul.mubr.bf16.gmra.mrb[0].mxu0 %v1974
    %v2013 = vpop.f32.mrb[0].mxu0
    %v2014 = vadd.f32 0.0, %v2013
    %v2015 = vpop.f32.mrb[0].mxu0
    %v2016 = vpop.f32.mrb[0].mxu0
    %v2017 = vadd.f32 0.0, %v2016
    %v2018 = vpop.f32.mrb[0].mxu0
    %2019 = vmatprep.mubr.bf16.mxu0 0
    %2020 = vmatmul.mubr.bf16.gmra.mrb[0].mxu0 %v1977
    %v2021 = vpop.f32.mrb[0].mxu0
    %v2022 = vadd.f32 0.0, %v2021
    %v2023 = vpop.f32.mrb[0].mxu0
    %v2024 = vpop.f32.mrb[0].mxu0
    %v2025 = vadd.f32 0.0, %v2024
    %v2026 = vpop.f32.mrb[0].mxu0
    %2027 = vdwg.mxu0
    %2029 = vset.pattern.permute.xlu0 0
    %2030 = vperm.xlu0 %2029, %v2014
    %v2031 = vpop.permute.xlu0 %2030
    %2034 = vset.pattern.permute.xlu0 0
    %2035 = vperm.xlu0 %2034, %v2017
    %v2036 = vpop.permute.xlu0 %2035
    %2039 = vset.pattern.permute.xlu0 0
    %2040 = vperm.xlu0 %2039, %v2022
    %v2041 = vpop.permute.xlu0 %2040
    %2044 = vset.pattern.permute.xlu0 0
    %2045 = vperm.xlu0 %2044, %v2025
    %v2046 = vpop.permute.xlu0 %2045
    %v2048 = vmul.f32 %v1545, %v2031
    %v2049 = vmul.f32 %v1546, %v2036
    %v2050 = vmul.f32 %v1547, %v2041
    %v2051 = vmul.f32 %v1548, %v2046
    %2052 = vst.msk [vmem:[#allocation3] sm:$0xff] %vm270, %v1844
    %2053 = vst.msk [vmem:[#allocation3 + $0x8] sm:$0xff] %vm270, %v1845
    %v2054 = vpack.c.bf16 %v2049, %v2048
    %v2055 = vpack.c.bf16 %v2051, %v2050
    %2056 = vst.msk [vmem:[#allocation3] sm:$0xff] %vm283, %v2054
    %2057 = vst.msk [vmem:[#allocation3 + $0x8] sm:$0xff] %vm283, %v2055
    %v2058 = vld [vmem:[%s9] sm:$0x1]
    %v2059 = vlaneseq
    %v2060 = vshrl.u32 %v2059, 7
    %v2061 = vsub.s32 0, %v2060
    %v2062 = vrot.slane %v2058, %v2061
    %vm2063 = vcmp.eq.s32.totalorder %v185, %v2062
    %vm2064 = vcmp.eq.s32.totalorder %v186, %v2062
    %v2065 = vsel %vm2063, 1.0, 0.0
    %v2066 = vsel %vm2064, 1.0, 0.0
    %v2067 = vpack.c.bf16 %v2066, %v2065
    %v2068 = vld [vmem:[#allocation3] sm:$0xff]
    %v2069 = vld [vmem:[#allocation3 + $0x8] sm:$0xff]
    %v2071 = vsel %vm270, %v2067, 0
    %2073 = vmatprep.subr.bf16.mxu0 0
    %2074 = vmatpush1.bf16.msra.mxu0 %v2068
    %2075 = vmatprep.subr.bf16.mxu0 0
    %2076 = vmatpush1.bf16.msra.mxu0 %v2069
    %2077 = vmatprep.subr.bf16.mxu0 0
    %2078 = vmatpush1.bf16.msra.mxu0 0
    %2079 = vmatprep.subr.bf16.mxu0 0
    %2080 = vmatpush1.bf16.msra.mxu0 0
    %2081 = vmatprep.subr.bf16.mxu0 0
    %2082 = vmatpush1.bf16.msra.mxu0 0
    %2083 = vmatprep.subr.bf16.mxu0 0
    %2084 = vmatpush1.bf16.msra.mxu0 0
    %2085 = vmatprep.subr.bf16.mxu0 0
    %2086 = vmatpush1.bf16.msra.mxu0 0
    %2087 = vmatprep.subr.bf16.mxu0 0
    %2088 = vmatpush1.bf16.msra.mxu0 0
    %2089 = vmatprep.subr.bf16.mxu0 0
    %2090 = vmatpush1.bf16.msra.mxu0 0
    %2091 = vmatprep.subr.bf16.mxu0 0
    %2092 = vmatpush1.bf16.msra.mxu0 0
    %2093 = vmatprep.subr.bf16.mxu0 0
    %2094 = vmatpush1.bf16.msra.mxu0 0
    %2095 = vmatprep.subr.bf16.mxu0 0
    %2096 = vmatpush1.bf16.msra.mxu0 0
    %2097 = vmatprep.subr.bf16.mxu0 0
    %2098 = vmatpush1.bf16.msra.mxu0 0
    %2099 = vmatprep.subr.bf16.mxu0 0
    %2100 = vmatpush1.bf16.msra.mxu0 0
    %2101 = vmatprep.subr.bf16.mxu0 0
    %2102 = vmatpush1.bf16.msra.mxu0 0
    %2103 = vmatprep.subr.bf16.mxu0 0
    %2104 = vmatpush1.bf16.msra.mxu0 0
    %2105 = vmatprep.mubr.bf16.mxu0 0
    %2106 = vmatmul.mubr.bf16.gmra.mrb[0].mxu0 %v2071
    %v2107 = vpop.f32.mrb[0].mxu0
    %v2108 = vadd.f32 0.0, %v2107
    %v2109 = vpop.f32.mrb[0].mxu0
    %v2110 = vpop.f32.mrb[0].mxu0
    %v2111 = vadd.f32 0.0, %v2110
    %v2112 = vpop.f32.mrb[0].mxu0
    %2113 = vdwg.mxu0
    %v2114 = vmul.f32 %v2108, %v969
    %v2115 = vmul.f32 %v2111, %v974
    %v2116 = vadd.f32 %v1444, %v2114
    %v2117 = vadd.f32 %v1445, %v2115
    %2118 = vst.msk [vmem:[#allocation5] sm:$0xff] %vm270, %v1446
    %v2119 = vpack.c.bf16 %v2111, %v2108
    %2121 = vrot.lane.b32.xlu0 %v2119, 32
    %v2122 = vpop.permute.xlu0 %2121
    %2124 = vst.msk [vmem:[#allocation5] sm:$0xff] %vm451, %v2122
    %v2125 = vld [vmem:[#allocation5] sm:$0xff]
    %s2126 = scalar_lea.vmem %s31, 32
    %v2127 = vld [vmem:[%s2126] sm:$0xf]
    %v2128 = vld [vmem:[%s2126 + $0x4] sm:$0xf]
    %v2129 = vld [vmem:[%s2126 + $0x8] sm:$0xf]
    %v2130 = vld [vmem:[%s2126 + $0xc] sm:$0xf]
    %v2131 = vld [vmem:[%s2126 + $0x10] sm:$0xf]
    %v2132 = vld [vmem:[%s2126 + $0x14] sm:$0xf]
    %v2133 = vld [vmem:[%s2126 + $0x18] sm:$0xf]
    %v2134 = vld [vmem:[%s2126 + $0x1c] sm:$0xf]
    %s2135 = scalar_lea.vmem %s33, 1
    %v2136 = vld [vmem:[%s2135] sm:$0x1]
    %v2138 = vlaneseq
    %v2139 = vshrl.u32 %v2138, 7
    %v2140 = vsub.s32 0, %v2139
    %v2141 = vrot.slane %v2136, %v2140
    %v2151 = vunpack.c.l.b16 %v2127
    %v2152 = vunpack.c.l.b16 %v2128
    %v2153 = vunpack.c.l.b16 %v2129
    %v2154 = vunpack.c.l.b16 %v2130
    %v2155 = vunpack.c.l.b16 %v2131
    %v2156 = vunpack.c.l.b16 %v2132
    %v2157 = vunpack.c.l.b16 %v2133
    %v2158 = vunpack.c.l.b16 %v2134
    %v2159 = vpack.c.b16 %v2152, %v2151
    %v2160 = vpack.c.b16 %v2154, %v2153
    %v2161 = vpack.c.b16 %v2156, %v2155
    %v2162 = vpack.c.b16 %v2158, %v2157
    %v2168 = vsel %vm1027, %v2125, 0
    %2170 = vmatprep.subr.bf16.mxu0 0
    %2171 = vmatpush1.bf16.msra.mxu0 %v2159
    %2172 = vmatprep.subr.bf16.mxu0 0
    %2173 = vmatpush1.bf16.msra.mxu0 %v2160
    %2174 = vmatprep.subr.bf16.mxu0 0
    %2175 = vmatpush1.bf16.msra.mxu0 %v2161
    %2176 = vmatprep.subr.bf16.mxu0 0
    %2177 = vmatpush1.bf16.msra.mxu0 %v2162
    %2178 = vmatprep.subr.bf16.mxu0 0
    %2179 = vmatpush1.bf16.msra.mxu0 0
    %2180 = vmatprep.subr.bf16.mxu0 0
    %2181 = vmatpush1.bf16.msra.mxu0 0
    %2182 = vmatprep.subr.bf16.mxu0 0
    %2183 = vmatpush1.bf16.msra.mxu0 0
    %2184 = vmatprep.subr.bf16.mxu0 0
    %2185 = vmatpush1.bf16.msra.mxu0 0
    %2186 = vmatprep.subr.bf16.mxu0 0
    %2187 = vmatpush1.bf16.msra.mxu0 0
    %2188 = vmatprep.subr.bf16.mxu0 0
    %2189 = vmatpush1.bf16.msra.mxu0 0
    %2190 = vmatprep.subr.bf16.mxu0 0
    %2191 = vmatpush1.bf16.msra.mxu0 0
    %2192 = vmatprep.subr.bf16.mxu0 0
    %2193 = vmatpush1.bf16.msra.mxu0 0
    %2194 = vmatprep.subr.bf16.mxu0 0
    %2195 = vmatpush1.bf16.msra.mxu0 0
    %2196 = vmatprep.subr.bf16.mxu0 0
    %2197 = vmatpush1.bf16.msra.mxu0 0
    %2198 = vmatprep.subr.bf16.mxu0 0
    %2199 = vmatpush1.bf16.msra.mxu0 0
    %2200 = vmatprep.subr.bf16.mxu0 0
    %2201 = vmatpush1.bf16.msra.mxu0 0
    %2202 = vmatprep.mubr.bf16.mxu0 0
    %2203 = vmatmul.mubr.bf16.gmra.mrb[0].mxu0 %v2168
    %v2204 = vpop.f32.mrb[0].mxu0
    %v2205 = vadd.f32 %v2141, %v2204
    %v2206 = vpop.f32.mrb[0].mxu0
    %v2207 = vpop.f32.mrb[0].mxu0
    %v2208 = vadd.f32 %v2141, %v2207
    %v2209 = vpop.f32.mrb[0].mxu0
    %2210 = vdwg.mxu0
    %v2211 = vxor.u32 %v2205, 2147483648
    %v2212 = vxor.u32 %v2208, 2147483648
    %v2213 = vmul.f32 %v2211, 1.442695
    %v2214 = vpow.pop %v2213
    %v2215 = vmul.f32 %v2212, 1.442695
    %v2216 = vpow.pop %v2215
    %v2217 = vadd.f32 %v2214, 1.0
    %v2218 = vadd.f32 %v2216, 1.0
    %v2219 = vrcp.pop %v2217
    %v2220 = vmul.f32 1.0, %v2219
    %v2221 = vrcp.pop %v2218
    %v2222 = vmul.f32 1.0, %v2221
    %v2223 = vmul.f32 %v2205, %v2220
    %v2224 = vmul.f32 %v2208, %v2222
    %v2225 = vpack.c.bf16 %v2224, %v2223
    %s2226 = scalar_lea.vmem %s35, 16
    %v2227 = vld [vmem:[%s2226] sm:$0xf]
    %v2228 = vld [vmem:[%s2226 + $0x4] sm:$0xf]
    %v2229 = vld [vmem:[%s2226 + $0x8] sm:$0xf]
    %v2230 = vld [vmem:[%s2226 + $0xc] sm:$0xf]
    %s2231 = scalar_lea.vmem %s37, 1
    %v2232 = vld [vmem:[%s2231] sm:$0x1]
    %v2234 = vlaneseq
    %v2235 = vshrl.u32 %v2234, 7
    %v2236 = vsub.s32 0, %v2235
    %v2237 = vrot.slane %v2232, %v2236
    %v2243 = vunpack.c.l.b16 %v2227
    %v2244 = vunpack.c.l.b16 %v2228
    %v2245 = vunpack.c.l.b16 %v2229
    %v2246 = vunpack.c.l.b16 %v2230
    %v2247 = vpack.c.b16 %v2244, %v2243
    %v2248 = vpack.c.b16 %v2246, %v2245
    %v2252 = vsel %vm270, %v2225, 0
    %2254 = vmatprep.subr.bf16.mxu0 0
    %2255 = vmatpush1.bf16.msra.mxu0 %v2247
    %2256 = vmatprep.subr.bf16.mxu0 0
    %2257 = vmatpush1.bf16.msra.mxu0 %v2248
    %2258 = vmatprep.subr.bf16.mxu0 0
    %2259 = vmatpush1.bf16.msra.mxu0 0
    %2260 = vmatprep.subr.bf16.mxu0 0
    %2261 = vmatpush1.bf16.msra.mxu0 0
    %2262 = vmatprep.subr.bf16.mxu0 0
    %2263 = vmatpush1.bf16.msra.mxu0 0
    %2264 = vmatprep.subr.bf16.mxu0 0
    %2265 = vmatpush1.bf16.msra.mxu0 0
    %2266 = vmatprep.subr.bf16.mxu0 0
    %2267 = vmatpush1.bf16.msra.mxu0 0
    %2268 = vmatprep.subr.bf16.mxu0 0
    %2269 = vmatpush1.bf16.msra.mxu0 0
    %2270 = vmatprep.subr.bf16.mxu0 0
    %2271 = vmatpush1.bf16.msra.mxu0 0
    %2272 = vmatprep.subr.bf16.mxu0 0
    %2273 = vmatpush1.bf16.msra.mxu0 0
    %2274 = vmatprep.subr.bf16.mxu0 0
    %2275 = vmatpush1.bf16.msra.mxu0 0
    %2276 = vmatprep.subr.bf16.mxu0 0
    %2277 = vmatpush1.bf16.msra.mxu0 0
    %2278 = vmatprep.subr.bf16.mxu0 0
    %2279 = vmatpush1.bf16.msra.mxu0 0
    %2280 = vmatprep.subr.bf16.mxu0 0
    %2281 = vmatpush1.bf16.msra.mxu0 0
    %2282 = vmatprep.subr.bf16.mxu0 0
    %2283 = vmatpush1.bf16.msra.mxu0 0
    %2284 = vmatprep.subr.bf16.mxu0 0
    %2285 = vmatpush1.bf16.msra.mxu0 0
    %2286 = vmatprep.mubr.bf16.mxu0 0
    %2287 = vmatmul.mubr.bf16.gmra.mrb[0].mxu0 %v2252
    %v2288 = vpop.f32.mrb[0].mxu0
    %v2289 = vadd.f32 %v2237, %v2288
    %v2290 = vpop.f32.mrb[0].mxu0
    %v2291 = vpop.f32.mrb[0].mxu0
    %v2292 = vadd.f32 %v2237, %v2291
    %v2293 = vpop.f32.mrb[0].mxu0
    %2294 = vdwg.mxu0
    %v2295 = vadd.f32 %v1444, %v2289
    %v2296 = vadd.f32 %v1445, %v2292
    %vm2297 = vcmp.gt.f32.partialorder %v2295, 0.0
    %vm2298 = vcmp.gt.f32.partialorder %v2296, 0.0
    %v2299 = vmul.f32 %v2295, 1.442695
    %v2300 = vpow.pop %v2299
    %v2301 = vmul.f32 %v2296, 1.442695
    %v2302 = vpow.pop %v2301
    %v2303 = vsub.f32 %v2300, 1.0
    %v2304 = vsub.f32 %v2302, 1.0
    %v2305 = vsel %vm2297, %v2295, %v2303
    %v2306 = vsel %vm2298, %v2296, %v2304
    %s2307 = scalar_lea.vmem %s45, 1
    %v2308 = vld [vmem:[%s2307] sm:$0x1]
    %s2309 = scalar_lea.vmem %s47, 1
    %v2310 = vld [vmem:[%s2309] sm:$0x1]
    %v2311 = vsel %vm270, %v2305, 0.0
    %v2312 = vsel %vm270, %v2306, 0.0
    %v2313 = vadd.f32 %v2311, %v2312
    %v2314 = vrot.slane %v2313, 4
    %v2315 = vadd.f32 %v2313, %v2314
    %v2316 = vrot.slane %v2315, 2
    %v2317 = vadd.f32 %v2315, %v2316
    %v2318 = vrot.slane %v2317, 1
    %v2319 = vadd.f32 %v2317, %v2318
    %v2320 = vmul.f32 %v2319, 0.0625
    %v2321 = vsub.f32 %v2305, %v2320
    %v2322 = vsub.f32 %v2306, %v2320
    %v2323 = vmul.f32 %v2321, %v2321
    %v2324 = vmul.f32 %v2322, %v2322
    %v2325 = vsel %vm270, %v2323, 0.0
    %v2326 = vsel %vm270, %v2324, 0.0
    %v2327 = vadd.f32 %v2325, %v2326
    %v2328 = vrot.slane %v2327, 4
    %v2329 = vadd.f32 %v2327, %v2328
    %v2330 = vrot.slane %v2329, 2
    %v2331 = vadd.f32 %v2329, %v2330
    %v2332 = vrot.slane %v2331, 1
    %v2333 = vadd.f32 %v2331, %v2332
    %v2334 = vmul.f32 %v2333, 0.0625
    %v2335 = vadd.f32 %v2334, 1e-05
    %v2336 = vrsqrt.pop %v2335
    %v2337 = vmul.f32 %v2321, %v2336
    %v2338 = vmul.f32 %v2322, %v2336
    %v2340 = vlaneseq
    %v2341 = vshrl.u32 %v2340, 7
    %v2342 = vsub.s32 0, %v2341
    %v2343 = vrot.slane %v2308, %v2342
    %v2345 = vmul.f32 %v2337, %v2343
    %v2346 = vmul.f32 %v2338, %v2343
    %v2348 = vlaneseq
    %v2349 = vshrl.u32 %v2348, 7
    %v2350 = vsub.s32 0, %v2349
    %v2351 = vrot.slane %v2310, %v2350
    %v2353 = vadd.f32 %v2345, %v2351
    %v2354 = vadd.f32 %v2346, %v2351
    %v2355 = vpack.c.bf16 %v2354, %v2353
    %s2356 = scalar_lea.vmem %s49, 16
    %v2357 = vld [vmem:[%s2356] sm:$0xf]
    %v2358 = vld [vmem:[%s2356 + $0x4] sm:$0xf]
    %v2359 = vld [vmem:[%s2356 + $0x8] sm:$0xf]
    %v2360 = vld [vmem:[%s2356 + $0xc] sm:$0xf]
    %s2361 = scalar_lea.vmem %s51, 1
    %v2362 = vld [vmem:[%s2361] sm:$0x1]
    %v2364 = vlaneseq
    %v2365 = vshrl.u32 %v2364, 7
    %v2366 = vsub.s32 0, %v2365
    %v2367 = vrot.slane %v2362, %v2366
    %v2373 = vunpack.c.l.b16 %v2357
    %v2374 = vunpack.c.l.b16 %v2358
    %v2375 = vunpack.c.l.b16 %v2359
    %v2376 = vunpack.c.l.b16 %v2360
    %v2377 = vpack.c.b16 %v2374, %v2373
    %v2378 = vpack.c.b16 %v2376, %v2375
    %v2382 = vsel %vm270, %v2355, 0
    %2384 = vmatprep.subr.bf16.mxu0 0
    %2385 = vmatpush1.bf16.msra.mxu0 %v2377
    %2386 = vmatprep.subr.bf16.mxu0 0
    %2387 = vmatpush1.bf16.msra.mxu0 %v2378
    %2388 = vmatprep.subr.bf16.mxu0 0
    %2389 = vmatpush1.bf16.msra.mxu0 0
    %2390 = vmatprep.subr.bf16.mxu0 0
    %2391 = vmatpush1.bf16.msra.mxu0 0
    %2392 = vmatprep.subr.bf16.mxu0 0
    %2393 = vmatpush1.bf16.msra.mxu0 0
    %2394 = vmatprep.subr.bf16.mxu0 0
    %2395 = vmatpush1.bf16.msra.mxu0 0
    %2396 = vmatprep.subr.bf16.mxu0 0
    %2397 = vmatpush1.bf16.msra.mxu0 0
    %2398 = vmatprep.subr.bf16.mxu0 0
    %2399 = vmatpush1.bf16.msra.mxu0 0
    %2400 = vmatprep.subr.bf16.mxu0 0
    %2401 = vmatpush1.bf16.msra.mxu0 0
    %2402 = vmatprep.subr.bf16.mxu0 0
    %2403 = vmatpush1.bf16.msra.mxu0 0
    %2404 = vmatprep.subr.bf16.mxu0 0
    %2405 = vmatpush1.bf16.msra.mxu0 0
    %2406 = vmatprep.subr.bf16.mxu0 0
    %2407 = vmatpush1.bf16.msra.mxu0 0
    %2408 = vmatprep.subr.bf16.mxu0 0
    %2409 = vmatpush1.bf16.msra.mxu0 0
    %2410 = vmatprep.subr.bf16.mxu0 0
    %2411 = vmatpush1.bf16.msra.mxu0 0
    %2412 = vmatprep.subr.bf16.mxu0 0
    %2413 = vmatpush1.bf16.msra.mxu0 0
    %2414 = vmatprep.subr.bf16.mxu0 0
    %2415 = vmatpush1.bf16.msra.mxu0 0
    %2416 = vmatprep.mubr.bf16.mxu0 0
    %2417 = vmatmul.mubr.bf16.gmra.mrb[0].mxu0 %v2382
    %v2418 = vpop.f32.mrb[0].mxu0
    %v2419 = vadd.f32 %v2367, %v2418
    %v2420 = vpop.f32.mrb[0].mxu0
    %v2421 = vpop.f32.mrb[0].mxu0
    %v2422 = vadd.f32 %v2367, %v2421
    %v2423 = vpop.f32.mrb[0].mxu0
    %2424 = vdwg.mxu0
    %vm2425 = vcmp.gt.f32.partialorder %v2419, 0.0
    %vm2426 = vcmp.gt.f32.partialorder %v2422, 0.0
    %v2427 = vmul.f32 %v2419, 1.442695
    %v2428 = vpow.pop %v2427
    %v2429 = vmul.f32 %v2422, 1.442695
    %v2430 = vpow.pop %v2429
    %v2431 = vsub.f32 %v2428, 1.0
    %v2432 = vsub.f32 %v2430, 1.0
    %v2433 = vsel %vm2425, %v2419, %v2431
    %v2434 = vsel %vm2426, %v2422, %v2432
    loop: start=0, step=1, limit=2
    $region169: #{egnn_forward.1} parent=1 // loop_pre_header
      _
    $region170: #{egnn_forward.1} parent=1 // loop_header
      %s2436 = sphi 0, %s2440
      %p2437 = scmp.ge.s32.totalorder %s2436, 2
      %v2441 = vphi 0.0, %v2469
    $region171: #{egnn_forward.1} parent=1 // loop_header_branch
      %2439 = sbr.rel (%p2437) target = $region175
    $region172: #{egnn_forward.1} parent=1 // loop_body
      %v2442 = vstv %s2436
      %vm2443 = vcmp.eq.s32.totalorder %v180, %v2442
      %vm2444 = vcmp.eq.s32.totalorder %v181, %v2442
      %v2445 = vsel %vm2443, 1, 0
      %v2446 = vsel %vm2444, 1, 0
      %2447 = vset.pattern.permute.xlu0 0
      %2448 = vperm.xlu0 %2447, %v2445
      %v2449 = vpop.permute.xlu0 %2448
      %2450 = vset.pattern.permute.xlu0 0
      %2451 = vperm.xlu0 %2450, %v2446
      %v2452 = vpop.permute.xlu0 %2451
      %vm2453 = vcmp.eq.s32.totalorder %v2449, 1
      %vm2454 = vcmp.eq.s32.totalorder %v2452, 1
      %v2455 = vsel %vm2453, %v2433, -3e+38
      %v2456 = vsel %vm2454, %v2434, -3e+38
      %v2457 = vsel %vm270, %v2455, -inf
      %v2458 = vsel %vm270, %v2456, -inf
      %v2459 = vmax.f32 %v2457, %v2458
      %v2460 = vrot.slane %v2459, 4
      %v2461 = vmax.f32 %v2459, %v2460
      %v2462 = vrot.slane %v2461, 2
      %v2463 = vmax.f32 %v2461, %v2462
      %v2464 = vrot.slane %v2463, 1
      %v2465 = vmax.f32 %v2463, %v2464
      %vm2466 = vcmp.eq.s32.totalorder %v185, %v2442
      %v2467 = vsel %vm2466, 1.0, 0.0
      %v2468 = vmul.f32 %v2467, %v2465
      %v2469 = vadd.f32 %v2441, %v2468
    $region173: #{egnn_forward.1} parent=1 // loop_footer
      %s2440 = sadd.s32 1, %s2436
    $region174: #{egnn_forward.1} parent=1 // loop_footer_branch
      %2435 = sbr.rel target = $region170
    $region175: #{egnn_forward.1} parent=1 // loop_exit
      _
    %v2470 = vpack.c.bf16 %v2434, %v2433
    %2471 = vmatprep.subr.bf16.mxu0 0
    %2472 = vmatpush1.bf16.msra.mxu0 %v2470
    %2473 = vmatprep.subr.bf16.mxu0 0
    %2474 = vmatpush1.bf16.msra.mxu0 0
    %2475 = vmatprep.subr.bf16.mxu0 0
    %2476 = vmatpush1.bf16.msra.mxu0 0
    %2477 = vmatprep.subr.bf16.mxu0 0
    %2478 = vmatpush1.bf16.msra.mxu0 0
    %2479 = vmatprep.subr.bf16.mxu0 0
    %2480 = vmatpush1.bf16.msra.mxu0 0
    %2481 = vmatprep.subr.bf16.mxu0 0
    %2482 = vmatpush1.bf16.msra.mxu0 0
    %2483 = vmatprep.subr.bf16.mxu0 0
    %2484 = vmatpush1.bf16.msra.mxu0 0
    %2485 = vmatprep.subr.bf16.mxu0 0
    %2486 = vmatpush1.bf16.msra.mxu0 0
    %2487 = vmatprep.subr.bf16.mxu0 0
    %2488 = vmatpush1.bf16.msra.mxu0 0
    %2489 = vmatprep.subr.bf16.mxu0 0
    %2490 = vmatpush1.bf16.msra.mxu0 0
    %2491 = vmatprep.subr.bf16.mxu0 0
    %2492 = vmatpush1.bf16.msra.mxu0 0
    %2493 = vmatprep.subr.bf16.mxu0 0
    %2494 = vmatpush1.bf16.msra.mxu0 0
    %2495 = vmatprep.subr.bf16.mxu0 0
    %2496 = vmatpush1.bf16.msra.mxu0 0
    %2497 = vmatprep.subr.bf16.mxu0 0
    %2498 = vmatpush1.bf16.msra.mxu0 0
    %2499 = vmatprep.subr.bf16.mxu0 0
    %2500 = vmatpush1.bf16.msra.mxu0 0
    %2501 = vmatprep.subr.bf16.mxu0 0
    %2502 = vmatpush1.bf16.msra.mxu0 0
    %2503 = vmatprep.mubr.bf16.mxu0 0
    %2504 = vmatmul.mubr.bf16.gmra.mrb[0].mxu0 %v1325
    %v2505 = vpop.f32.mrb[0].mxu0
    %v2506 = vadd.f32 0.0, %v2505
    %v2507 = vpop.f32.mrb[0].mxu0
    %v2508 = vpop.f32.mrb[0].mxu0
    %v2509 = vpop.f32.mrb[0].mxu0
    %2510 = vdwg.mxu0
    %v2511 = vmul.f32 %v2506, %v1370
    %s2512 = sld [smem:[#allocation7 + $0x3]]
    %s2513 = sld [smem:[#allocation7 + $0x4]]
    %s2514 = sld [smem:[#allocation7 + $0x5]]
    %v2515 = vstv %s2512
    %v2516 = vmul.f32 %v2515, %v2441
    %v2517 = vstv %s2513
    %v2518 = vmul.f32 %v2517, %v2511
    %v2519 = vadd.f32 %v2516, %v2518
    %v2520 = vstv %s2514
    %v2521 = vadd.f32 %v2519, %v2520
    %vm2522 = vcmp.gt.f32.partialorder %v2521, 0.0
    %v2523 = vmul.f32 %v2521, 1.442695
    %v2524 = vpow.pop %v2523
    %v2525 = vsub.f32 %v2524, 1.0
    %v2526 = vsel %vm2522, %v2521, %v2525
    %v2527 = vpack.c.bf16 %v2526, %v2526
    %v2529 = vsel %vm1393, %v2527, 0
    %2531 = vmatprep.subr.bf16.mxu0 0
    %2532 = vmatpush1.bf16.msra.mxu0 %v2529
    %2533 = vmatprep.subr.bf16.mxu0 0
    %2534 = vmatpush1.bf16.msra.mxu0 0
    %2535 = vmatprep.subr.bf16.mxu0 0
    %2536 = vmatpush1.bf16.msra.mxu0 0
    %2537 = vmatprep.subr.bf16.mxu0 0
    %2538 = vmatpush1.bf16.msra.mxu0 0
    %2539 = vmatprep.subr.bf16.mxu0 0
    %2540 = vmatpush1.bf16.msra.mxu0 0
    %2541 = vmatprep.subr.bf16.mxu0 0
    %2542 = vmatpush1.bf16.msra.mxu0 0
    %2543 = vmatprep.subr.bf16.mxu0 0
    %2544 = vmatpush1.bf16.msra.mxu0 0
    %2545 = vmatprep.subr.bf16.mxu0 0
    %2546 = vmatpush1.bf16.msra.mxu0 0
    %2547 = vmatprep.subr.bf16.mxu0 0
    %2548 = vmatpush1.bf16.msra.mxu0 0
    %2549 = vmatprep.subr.bf16.mxu0 0
    %2550 = vmatpush1.bf16.msra.mxu0 0
    %2551 = vmatprep.subr.bf16.mxu0 0
    %2552 = vmatpush1.bf16.msra.mxu0 0
    %2553 = vmatprep.subr.bf16.mxu0 0
    %2554 = vmatpush1.bf16.msra.mxu0 0
    %2555 = vmatprep.subr.bf16.mxu0 0
    %2556 = vmatpush1.bf16.msra.mxu0 0
    %2557 = vmatprep.subr.bf16.mxu0 0
    %2558 = vmatpush1.bf16.msra.mxu0 0
    %2559 = vmatprep.subr.bf16.mxu0 0
    %2560 = vmatpush1.bf16.msra.mxu0 0
    %2561 = vmatprep.subr.bf16.mxu0 0
    %2562 = vmatpush1.bf16.msra.mxu0 0
    %2563 = vmatprep.mubr.bf16.mxu0 0
    %2564 = vmatmul.mubr.bf16.gmra.mrb[0].mxu0 %v1391
    %v2565 = vpop.f32.mrb[0].mxu0
    %v2566 = vadd.f32 0.0, %v2565
    %v2567 = vpop.f32.mrb[0].mxu0
    %v2568 = vpop.f32.mrb[0].mxu0
    %v2569 = vadd.f32 0.0, %v2568
    %v2570 = vpop.f32.mrb[0].mxu0
    %2571 = vdwg.mxu0
    %v2572 = vadd.f32 %v2353, %v2566
    %v2573 = vadd.f32 %v2354, %v2569
    %2574 = vst.msk [vmem:[#allocation2] sm:$0xff] %vm270, %v2572
    %2575 = vst.msk [vmem:[#allocation2 + $0x8] sm:$0xff] %vm270, %v2573
    %2576 = vst.msk [vmem:[#allocation2] sm:$0xff] %vm283, %v2116
    %2577 = vst.msk [vmem:[#allocation2 + $0x8] sm:$0xff] %vm283, %v2117
    %v2578 = vld [vmem:[%s13] sm:$0x1]
    %v2579 = vlaneseq
    %v2580 = vshrl.u32 %v2579, 7
    %v2581 = vsub.s32 0, %v2580
    %v2582 = vrot.slane %v2578, %v2581
    %vm2583 = vcmp.eq.s32.totalorder %v185, %v2582
    %vm2584 = vcmp.eq.s32.totalorder %v186, %v2582
    %v2585 = vsel %vm2583, 1.0, 0.0
    %v2586 = vsel %vm2584, 1.0, 0.0
    %v2587 = vpack.c.bf16 %v2586, %v2585
    %v2589 = vsel %vm270, %v2587, 0
    %2591 = vmatprep.subr.bf16.mxu0 0
    %2592 = vmatpush1.bf16.msra.mxu0 %v211
    %2593 = vmatprep.subr.bf16.mxu0 0
    %2594 = vmatpush1.bf16.msra.mxu0 %v212
    %2595 = vmatprep.subr.bf16.mxu0 0
    %2596 = vmatpush1.bf16.msra.mxu0 0
    %2597 = vmatprep.subr.bf16.mxu0 0
    %2598 = vmatpush1.bf16.msra.mxu0 0
    %2599 = vmatprep.subr.bf16.mxu0 0
    %2600 = vmatpush1.bf16.msra.mxu0 0
    %2601 = vmatprep.subr.bf16.mxu0 0
    %2602 = vmatpush1.bf16.msra.mxu0 0
    %2603 = vmatprep.subr.bf16.mxu0 0
    %2604 = vmatpush1.bf16.msra.mxu0 0
    %2605 = vmatprep.subr.bf16.mxu0 0
    %2606 = vmatpush1.bf16.msra.mxu0 0
    %2607 = vmatprep.subr.bf16.mxu0 0
    %2608 = vmatpush1.bf16.msra.mxu0 0
    %2609 = vmatprep.subr.bf16.mxu0 0
    %2610 = vmatpush1.bf16.msra.mxu0 0
    %2611 = vmatprep.subr.bf16.mxu0 0
    %2612 = vmatpush1.bf16.msra.mxu0 0
    %2613 = vmatprep.subr.bf16.mxu0 0
    %2614 = vmatpush1.bf16.msra.mxu0 0
    %2615 = vmatprep.subr.bf16.mxu0 0
    %2616 = vmatpush1.bf16.msra.mxu0 0
    %2617 = vmatprep.subr.bf16.mxu0 0
    %2618 = vmatpush1.bf16.msra.mxu0 0
    %2619 = vmatprep.subr.bf16.mxu0 0
    %2620 = vmatpush1.bf16.msra.mxu0 0
    %2621 = vmatprep.subr.bf16.mxu0 0
    %2622 = vmatpush1.bf16.msra.mxu0 0
    %2623 = vmatprep.mubr.bf16.mxu0 0
    %2624 = vmatmul.mubr.bf16.gmra.mrb[0].mxu0 %v2589
    %v2625 = vpop.f32.mrb[0].mxu0
    %v2626 = vadd.f32 0.0, %v2625
    %v2627 = vpop.f32.mrb[0].mxu0
    %v2628 = vpop.f32.mrb[0].mxu0
    %v2629 = vadd.f32 0.0, %v2628
    %v2630 = vpop.f32.mrb[0].mxu0
    %2631 = vdwg.mxu0
    %v2632 = vpack.c.bf16 %v2629, %v2626
    %v2633 = vld [vmem:[#allocation2] sm:$0xff]
    %v2634 = vld [vmem:[#allocation2 + $0x8] sm:$0xff]
    %v2635 = vpack.c.bf16 %v2634, %v2633
    %v2637 = vsel %vm289, %v2632, 0
    %2639 = vmatprep.subr.bf16.mxu0 0
    %2640 = vmatpush1.bf16.msra.mxu0 %v2635
    %2641 = vmatprep.subr.bf16.mxu0 0
    %2642 = vmatpush1.bf16.msra.mxu0 0
    %2643 = vmatprep.subr.bf16.mxu0 0
    %2644 = vmatpush1.bf16.msra.mxu0 0
    %2645 = vmatprep.subr.bf16.mxu0 0
    %2646 = vmatpush1.bf16.msra.mxu0 0
    %2647 = vmatprep.subr.bf16.mxu0 0
    %2648 = vmatpush1.bf16.msra.mxu0 0
    %2649 = vmatprep.subr.bf16.mxu0 0
    %2650 = vmatpush1.bf16.msra.mxu0 0
    %2651 = vmatprep.subr.bf16.mxu0 0
    %2652 = vmatpush1.bf16.msra.mxu0 0
    %2653 = vmatprep.subr.bf16.mxu0 0
    %2654 = vmatpush1.bf16.msra.mxu0 0
    %2655 = vmatprep.subr.bf16.mxu0 0
    %2656 = vmatpush1.bf16.msra.mxu0 0
    %2657 = vmatprep.subr.bf16.mxu0 0
    %2658 = vmatpush1.bf16.msra.mxu0 0
    %2659 = vmatprep.subr.bf16.mxu0 0
    %2660 = vmatpush1.bf16.msra.mxu0 0
    %2661 = vmatprep.subr.bf16.mxu0 0
    %2662 = vmatpush1.bf16.msra.mxu0 0
    %2663 = vmatprep.subr.bf16.mxu0 0
    %2664 = vmatpush1.bf16.msra.mxu0 0
    %2665 = vmatprep.subr.bf16.mxu0 0
    %2666 = vmatpush1.bf16.msra.mxu0 0
    %2667 = vmatprep.subr.bf16.mxu0 0
    %2668 = vmatpush1.bf16.msra.mxu0 0
    %2669 = vmatprep.subr.bf16.mxu0 0
    %2670 = vmatpush1.bf16.msra.mxu0 0
    %2671 = vmatprep.mubr.bf16.mxu0 0
    %2672 = vmatmul.mubr.bf16.gmra.mrb[0].mxu0 %v2637
    %v2673 = vpop.f32.mrb[0].mxu0
    %v2674 = vadd.f32 0.0, %v2673
    %v2675 = vpop.f32.mrb[0].mxu0
    %v2676 = vpop.f32.mrb[0].mxu0
    %v2677 = vadd.f32 0.0, %v2676
    %v2678 = vpop.f32.mrb[0].mxu0
    %2679 = vdwg.mxu0
    %v2680 = vadd.f32 %v2633, %v2674
    %v2681 = vadd.f32 %v2634, %v2677
    %v2682 = vpack.c.bf16 %v2681, %v2680
    %v2683 = vld [vmem:[%s53] sm:$0xf]
    %v2684 = vld [vmem:[%s53 + $0x4] sm:$0xf]
    %v2685 = vld [vmem:[%s53 + $0x8] sm:$0xf]
    %v2686 = vld [vmem:[%s53 + $0xc] sm:$0xf]
    %v2687 = vld [vmem:[%s55] sm:$0x1]
    %v2689 = vlaneseq
    %v2690 = vshrl.u32 %v2689, 7
    %v2691 = vsub.s32 0, %v2690
    %v2692 = vrot.slane %v2687, %v2691
    %v2698 = vunpack.c.l.b16 %v2683
    %v2699 = vunpack.c.l.b16 %v2684
    %v2700 = vunpack.c.l.b16 %v2685
    %v2701 = vunpack.c.l.b16 %v2686
    %v2702 = vpack.c.b16 %v2699, %v2698
    %v2703 = vpack.c.b16 %v2701, %v2700
    %v2707 = vsel %vm270, %v2682, 0
    %2709 = vmatprep.subr.bf16.mxu0 0
    %2710 = vmatpush1.bf16.msra.mxu0 %v2702
    %2711 = vmatprep.subr.bf16.mxu0 0
    %2712 = vmatpush1.bf16.msra.mxu0 %v2703
    %2713 = vmatprep.subr.bf16.mxu0 0
    %2714 = vmatpush1.bf16.msra.mxu0 0
    %2715 = vmatprep.subr.bf16.mxu0 0
    %2716 = vmatpush1.bf16.msra.mxu0 0
    %2717 = vmatprep.subr.bf16.mxu0 0
    %2718 = vmatpush1.bf16.msra.mxu0 0
    %2719 = vmatprep.subr.bf16.mxu0 0
    %2720 = vmatpush1.bf16.msra.mxu0 0
    %2721 = vmatprep.subr.bf16.mxu0 0
    %2722 = vmatpush1.bf16.msra.mxu0 0
    %2723 = vmatprep.subr.bf16.mxu0 0
    %2724 = vmatpush1.bf16.msra.mxu0 0
    %2725 = vmatprep.subr.bf16.mxu0 0
    %2726 = vmatpush1.bf16.msra.mxu0 0
    %2727 = vmatprep.subr.bf16.mxu0 0
    %2728 = vmatpush1.bf16.msra.mxu0 0
    %2729 = vmatprep.subr.bf16.mxu0 0
    %2730 = vmatpush1.bf16.msra.mxu0 0
    %2731 = vmatprep.subr.bf16.mxu0 0
    %2732 = vmatpush1.bf16.msra.mxu0 0
    %2733 = vmatprep.subr.bf16.mxu0 0
    %2734 = vmatpush1.bf16.msra.mxu0 0
    %2735 = vmatprep.subr.bf16.mxu0 0
    %2736 = vmatpush1.bf16.msra.mxu0 0
    %2737 = vmatprep.subr.bf16.mxu0 0
    %2738 = vmatpush1.bf16.msra.mxu0 0
    %2739 = vmatprep.subr.bf16.mxu0 0
    %2740 = vmatpush1.bf16.msra.mxu0 0
    %2741 = vmatprep.mubr.bf16.mxu0 0
    %2742 = vmatmul.mubr.bf16.gmra.mrb[0].mxu0 %v2707
    %v2743 = vpop.f32.mrb[0].mxu0
    %v2744 = vadd.f32 %v2692, %v2743
    %v2745 = vpop.f32.mrb[0].mxu0
    %v2746 = vpop.f32.mrb[0].mxu0
    %v2747 = vadd.f32 %v2692, %v2746
    %v2748 = vpop.f32.mrb[0].mxu0
    %2749 = vdwg.mxu0
    %v2750 = vld [vmem:[%s57] sm:$0x1]
    %v2751 = vld [vmem:[%s59] sm:$0x1]
    %v2752 = vsel %vm270, %v2744, 0.0
    %v2753 = vsel %vm270, %v2747, 0.0
    %v2754 = vadd.f32 %v2752, %v2753
    %v2755 = vrot.slane %v2754, 4
    %v2756 = vadd.f32 %v2754, %v2755
    %v2757 = vrot.slane %v2756, 2
    %v2758 = vadd.f32 %v2756, %v2757
    %v2759 = vrot.slane %v2758, 1
    %v2760 = vadd.f32 %v2758, %v2759
    %v2761 = vmul.f32 %v2760, 0.0625
    %v2762 = vsub.f32 %v2744, %v2761
    %v2763 = vsub.f32 %v2747, %v2761
    %v2764 = vmul.f32 %v2762, %v2762
    %v2765 = vmul.f32 %v2763, %v2763
    %v2766 = vsel %vm270, %v2764, 0.0
    %v2767 = vsel %vm270, %v2765, 0.0
    %v2768 = vadd.f32 %v2766, %v2767
    %v2769 = vrot.slane %v2768, 4
    %v2770 = vadd.f32 %v2768, %v2769
    %v2771 = vrot.slane %v2770, 2
    %v2772 = vadd.f32 %v2770, %v2771
    %v2773 = vrot.slane %v2772, 1
    %v2774 = vadd.f32 %v2772, %v2773
    %v2775 = vmul.f32 %v2774, 0.0625
    %v2776 = vadd.f32 %v2775, 1e-05
    %v2777 = vrsqrt.pop %v2776
    %v2778 = vmul.f32 %v2762, %v2777
    %v2779 = vmul.f32 %v2763, %v2777
    %v2781 = vlaneseq
    %v2782 = vshrl.u32 %v2781, 7
    %v2783 = vsub.s32 0, %v2782
    %v2784 = vrot.slane %v2750, %v2783
    %v2786 = vmul.f32 %v2778, %v2784
    %v2787 = vmul.f32 %v2779, %v2784
    %v2789 = vlaneseq
    %v2790 = vshrl.u32 %v2789, 7
    %v2791 = vsub.s32 0, %v2790
    %v2792 = vrot.slane %v2751, %v2791
    %v2794 = vadd.f32 %v2786, %v2792
    %v2795 = vadd.f32 %v2787, %v2792
    %v2796 = vmax.f32 %v2794, 0.0
    %v2797 = vmax.f32 %v2795, 0.0
    %v2798 = vpack.c.bf16 %v2797, %v2796
    %v2799 = vld [vmem:[%s61] sm:$0xf]
    %v2800 = vld [vmem:[%s61 + $0x4] sm:$0xf]
    %v2801 = vld [vmem:[%s61 + $0x8] sm:$0xf]
    %v2802 = vld [vmem:[%s61 + $0xc] sm:$0xf]
    %v2803 = vld [vmem:[%s63] sm:$0x1]
    %v2805 = vlaneseq
    %v2806 = vshrl.u32 %v2805, 7
    %v2807 = vsub.s32 0, %v2806
    %v2808 = vrot.slane %v2803, %v2807
    %v2814 = vunpack.c.l.b16 %v2799
    %v2815 = vunpack.c.l.b16 %v2800
    %v2816 = vunpack.c.l.b16 %v2801
    %v2817 = vunpack.c.l.b16 %v2802
    %v2818 = vpack.c.b16 %v2815, %v2814
    %v2819 = vpack.c.b16 %v2817, %v2816
    %v2823 = vsel %vm270, %v2798, 0
    %2825 = vmatprep.subr.bf16.mxu0 0
    %2826 = vmatpush1.bf16.msra.mxu0 %v2818
    %2827 = vmatprep.subr.bf16.mxu0 0
    %2828 = vmatpush1.bf16.msra.mxu0 %v2819
    %2829 = vmatprep.subr.bf16.mxu0 0
    %2830 = vmatpush1.bf16.msra.mxu0 0
    %2831 = vmatprep.subr.bf16.mxu0 0
    %2832 = vmatpush1.bf16.msra.mxu0 0
    %2833 = vmatprep.subr.bf16.mxu0 0
    %2834 = vmatpush1.bf16.msra.mxu0 0
    %2835 = vmatprep.subr.bf16.mxu0 0
    %2836 = vmatpush1.bf16.msra.mxu0 0
    %2837 = vmatprep.subr.bf16.mxu0 0
    %2838 = vmatpush1.bf16.msra.mxu0 0
    %2839 = vmatprep.subr.bf16.mxu0 0
    %2840 = vmatpush1.bf16.msra.mxu0 0
    %2841 = vmatprep.subr.bf16.mxu0 0
    %2842 = vmatpush1.bf16.msra.mxu0 0
    %2843 = vmatprep.subr.bf16.mxu0 0
    %2844 = vmatpush1.bf16.msra.mxu0 0
    %2845 = vmatprep.subr.bf16.mxu0 0
    %2846 = vmatpush1.bf16.msra.mxu0 0
    %2847 = vmatprep.subr.bf16.mxu0 0
    %2848 = vmatpush1.bf16.msra.mxu0 0
    %2849 = vmatprep.subr.bf16.mxu0 0
    %2850 = vmatpush1.bf16.msra.mxu0 0
    %2851 = vmatprep.subr.bf16.mxu0 0
    %2852 = vmatpush1.bf16.msra.mxu0 0
    %2853 = vmatprep.subr.bf16.mxu0 0
    %2854 = vmatpush1.bf16.msra.mxu0 0
    %2855 = vmatprep.subr.bf16.mxu0 0
    %2856 = vmatpush1.bf16.msra.mxu0 0
    %2857 = vmatprep.mubr.bf16.mxu0 0
    %2858 = vmatmul.mubr.bf16.gmra.mrb[0].mxu0 %v2823
    %v2859 = vpop.f32.mrb[0].mxu0
    %v2860 = vadd.f32 %v2808, %v2859
    %v2861 = vpop.f32.mrb[0].mxu0
    %v2862 = vpop.f32.mrb[0].mxu0
    %v2863 = vadd.f32 %v2808, %v2862
    %v2864 = vpop.f32.mrb[0].mxu0
    %2865 = vdwg.mxu0
    %vm2866 = vcmp.gt.f32.partialorder %v2860, 0.0
    %vm2867 = vcmp.gt.f32.partialorder %v2863, 0.0
    %v2868 = vmul.f32 %v2860, 1.442695
    %v2869 = vpow.pop %v2868
    %v2870 = vmul.f32 %v2863, 1.442695
    %v2871 = vpow.pop %v2870
    %v2872 = vsub.f32 %v2869, 1.0
    %v2873 = vsub.f32 %v2871, 1.0
    %v2874 = vmul.f32 %v2872, 0.1
    %v2875 = vmul.f32 %v2873, 0.1
    %v2876 = vsel %vm2866, %v2860, %v2874
    %v2877 = vsel %vm2867, %v2863, %v2875
    %v2878 = vpack.c.bf16 %v2877, %v2876
    %2879 = vmatprep.subr.bf16.mxu0 0
    %2880 = vmatpush1.bf16.msra.mxu0 %v2878
    %2881 = vmatprep.subr.bf16.mxu0 0
    %2882 = vmatpush1.bf16.msra.mxu0 0
    %2883 = vmatprep.subr.bf16.mxu0 0
    %2884 = vmatpush1.bf16.msra.mxu0 0
    %2885 = vmatprep.subr.bf16.mxu0 0
    %2886 = vmatpush1.bf16.msra.mxu0 0
    %2887 = vmatprep.subr.bf16.mxu0 0
    %2888 = vmatpush1.bf16.msra.mxu0 0
    %2889 = vmatprep.subr.bf16.mxu0 0
    %2890 = vmatpush1.bf16.msra.mxu0 0
    %2891 = vmatprep.subr.bf16.mxu0 0
    %2892 = vmatpush1.bf16.msra.mxu0 0
    %2893 = vmatprep.subr.bf16.mxu0 0
    %2894 = vmatpush1.bf16.msra.mxu0 0
    %2895 = vmatprep.subr.bf16.mxu0 0
    %2896 = vmatpush1.bf16.msra.mxu0 0
    %2897 = vmatprep.subr.bf16.mxu0 0
    %2898 = vmatpush1.bf16.msra.mxu0 0
    %2899 = vmatprep.subr.bf16.mxu0 0
    %2900 = vmatpush1.bf16.msra.mxu0 0
    %2901 = vmatprep.subr.bf16.mxu0 0
    %2902 = vmatpush1.bf16.msra.mxu0 0
    %2903 = vmatprep.subr.bf16.mxu0 0
    %2904 = vmatpush1.bf16.msra.mxu0 0
    %2905 = vmatprep.subr.bf16.mxu0 0
    %2906 = vmatpush1.bf16.msra.mxu0 0
    %2907 = vmatprep.subr.bf16.mxu0 0
    %2908 = vmatpush1.bf16.msra.mxu0 0
    %2909 = vmatprep.subr.bf16.mxu0 0
    %2910 = vmatpush1.bf16.msra.mxu0 0
    %2911 = vmatprep.mubr.bf16.mxu0 0
    %2912 = vmatmul.mubr.bf16.gmra.mrb[0].mxu0 %v2637
    %v2913 = vpop.f32.mrb[0].mxu0
    %v2914 = vadd.f32 0.0, %v2913
    %v2915 = vpop.f32.mrb[0].mxu0
    %v2916 = vpop.f32.mrb[0].mxu0
    %v2917 = vadd.f32 0.0, %v2916
    %v2918 = vpop.f32.mrb[0].mxu0
    %2919 = vdwg.mxu0
    %v2920 = vadd.f32 %v2876, %v2914
    %v2921 = vadd.f32 %v2877, %v2917
    %v2922 = vpack.c.bf16 %v2921, %v2920
    %s2923 = scalar_lea.vmem %s53, 16
    %v2924 = vld [vmem:[%s2923] sm:$0xf]
    %v2925 = vld [vmem:[%s2923 + $0x4] sm:$0xf]
    %v2926 = vld [vmem:[%s2923 + $0x8] sm:$0xf]
    %v2927 = vld [vmem:[%s2923 + $0xc] sm:$0xf]
    %s2928 = scalar_lea.vmem %s55, 1
    %v2929 = vld [vmem:[%s2928] sm:$0x1]
    %v2931 = vlaneseq
    %v2932 = vshrl.u32 %v2931, 7
    %v2933 = vsub.s32 0, %v2932
    %v2934 = vrot.slane %v2929, %v2933
    %v2940 = vunpack.c.l.b16 %v2924
    %v2941 = vunpack.c.l.b16 %v2925
    %v2942 = vunpack.c.l.b16 %v2926
    %v2943 = vunpack.c.l.b16 %v2927
    %v2944 = vpack.c.b16 %v2941, %v2940
    %v2945 = vpack.c.b16 %v2943, %v2942
    %v2949 = vsel %vm270, %v2922, 0
    %2951 = vmatprep.subr.bf16.mxu0 0
    %2952 = vmatpush1.bf16.msra.mxu0 %v2944
    %2953 = vmatprep.subr.bf16.mxu0 0
    %2954 = vmatpush1.bf16.msra.mxu0 %v2945
    %2955 = vmatprep.subr.bf16.mxu0 0
    %2956 = vmatpush1.bf16.msra.mxu0 0
    %2957 = vmatprep.subr.bf16.mxu0 0
    %2958 = vmatpush1.bf16.msra.mxu0 0
    %2959 = vmatprep.subr.bf16.mxu0 0
    %2960 = vmatpush1.bf16.msra.mxu0 0
    %2961 = vmatprep.subr.bf16.mxu0 0
    %2962 = vmatpush1.bf16.msra.mxu0 0
    %2963 = vmatprep.subr.bf16.mxu0 0
    %2964 = vmatpush1.bf16.msra.mxu0 0
    %2965 = vmatprep.subr.bf16.mxu0 0
    %2966 = vmatpush1.bf16.msra.mxu0 0
    %2967 = vmatprep.subr.bf16.mxu0 0
    %2968 = vmatpush1.bf16.msra.mxu0 0
    %2969 = vmatprep.subr.bf16.mxu0 0
    %2970 = vmatpush1.bf16.msra.mxu0 0
    %2971 = vmatprep.subr.bf16.mxu0 0
    %2972 = vmatpush1.bf16.msra.mxu0 0
    %2973 = vmatprep.subr.bf16.mxu0 0
    %2974 = vmatpush1.bf16.msra.mxu0 0
    %2975 = vmatprep.subr.bf16.mxu0 0
    %2976 = vmatpush1.bf16.msra.mxu0 0
    %2977 = vmatprep.subr.bf16.mxu0 0
    %2978 = vmatpush1.bf16.msra.mxu0 0
    %2979 = vmatprep.subr.bf16.mxu0 0
    %2980 = vmatpush1.bf16.msra.mxu0 0
    %2981 = vmatprep.subr.bf16.mxu0 0
    %2982 = vmatpush1.bf16.msra.mxu0 0
    %2983 = vmatprep.mubr.bf16.mxu0 0
    %2984 = vmatmul.mubr.bf16.gmra.mrb[0].mxu0 %v2949
    %v2985 = vpop.f32.mrb[0].mxu0
    %v2986 = vadd.f32 %v2934, %v2985
    %v2987 = vpop.f32.mrb[0].mxu0
    %v2988 = vpop.f32.mrb[0].mxu0
    %v2989 = vadd.f32 %v2934, %v2988
    %v2990 = vpop.f32.mrb[0].mxu0
    %2991 = vdwg.mxu0
    %s2992 = scalar_lea.vmem %s57, 1
    %v2993 = vld [vmem:[%s2992] sm:$0x1]
    %s2994 = scalar_lea.vmem %s59, 1
    %v2995 = vld [vmem:[%s2994] sm:$0x1]
    %v2996 = vsel %vm270, %v2986, 0.0
    %v2997 = vsel %vm270, %v2989, 0.0
    %v2998 = vadd.f32 %v2996, %v2997
    %v2999 = vrot.slane %v2998, 4
    %v3000 = vadd.f32 %v2998, %v2999
    %v3001 = vrot.slane %v3000, 2
    %v3002 = vadd.f32 %v3000, %v3001
    %v3003 = vrot.slane %v3002, 1
    %v3004 = vadd.f32 %v3002, %v3003
    %v3005 = vmul.f32 %v3004, 0.0625
    %v3006 = vsub.f32 %v2986, %v3005
    %v3007 = vsub.f32 %v2989, %v3005
    %v3008 = vmul.f32 %v3006, %v3006
    %v3009 = vmul.f32 %v3007, %v3007
    %v3010 = vsel %vm270, %v3008, 0.0
    %v3011 = vsel %vm270, %v3009, 0.0
    %v3012 = vadd.f32 %v3010, %v3011
    %v3013 = vrot.slane %v3012, 4
    %v3014 = vadd.f32 %v3012, %v3013
    %v3015 = vrot.slane %v3014, 2
    %v3016 = vadd.f32 %v3014, %v3015
    %v3017 = vrot.slane %v3016, 1
    %v3018 = vadd.f32 %v3016, %v3017
    %v3019 = vmul.f32 %v3018, 0.0625
    %v3020 = vadd.f32 %v3019, 1e-05
    %v3021 = vrsqrt.pop %v3020
    %v3022 = vmul.f32 %v3006, %v3021
    %v3023 = vmul.f32 %v3007, %v3021
    %v3025 = vlaneseq
    %v3026 = vshrl.u32 %v3025, 7
    %v3027 = vsub.s32 0, %v3026
    %v3028 = vrot.slane %v2993, %v3027
    %v3030 = vmul.f32 %v3022, %v3028
    %v3031 = vmul.f32 %v3023, %v3028
    %v3033 = vlaneseq
    %v3034 = vshrl.u32 %v3033, 7
    %v3035 = vsub.s32 0, %v3034
    %v3036 = vrot.slane %v2995, %v3035
    %v3038 = vadd.f32 %v3030, %v3036
    %v3039 = vadd.f32 %v3031, %v3036
    %v3040 = vmax.f32 %v3038, 0.0
    %v3041 = vmax.f32 %v3039, 0.0
    %v3042 = vpack.c.bf16 %v3041, %v3040
    %s3043 = scalar_lea.vmem %s61, 16
    %v3044 = vld [vmem:[%s3043] sm:$0xf]
    %v3045 = vld [vmem:[%s3043 + $0x4] sm:$0xf]
    %v3046 = vld [vmem:[%s3043 + $0x8] sm:$0xf]
    %v3047 = vld [vmem:[%s3043 + $0xc] sm:$0xf]
    %s3048 = scalar_lea.vmem %s63, 1
    %v3049 = vld [vmem:[%s3048] sm:$0x1]
    %v3051 = vlaneseq
    %v3052 = vshrl.u32 %v3051, 7
    %v3053 = vsub.s32 0, %v3052
    %v3054 = vrot.slane %v3049, %v3053
    %v3060 = vunpack.c.l.b16 %v3044
    %v3061 = vunpack.c.l.b16 %v3045
    %v3062 = vunpack.c.l.b16 %v3046
    %v3063 = vunpack.c.l.b16 %v3047
    %v3064 = vpack.c.b16 %v3061, %v3060
    %v3065 = vpack.c.b16 %v3063, %v3062
    %v3069 = vsel %vm270, %v3042, 0
    %3071 = vmatprep.subr.bf16.mxu0 0
    %3072 = vmatpush1.bf16.msra.mxu0 %v3064
    %3073 = vmatprep.subr.bf16.mxu0 0
    %3074 = vmatpush1.bf16.msra.mxu0 %v3065
    %3075 = vmatprep.subr.bf16.mxu0 0
    %3076 = vmatpush1.bf16.msra.mxu0 0
    %3077 = vmatprep.subr.bf16.mxu0 0
    %3078 = vmatpush1.bf16.msra.mxu0 0
    %3079 = vmatprep.subr.bf16.mxu0 0
    %3080 = vmatpush1.bf16.msra.mxu0 0
    %3081 = vmatprep.subr.bf16.mxu0 0
    %3082 = vmatpush1.bf16.msra.mxu0 0
    %3083 = vmatprep.subr.bf16.mxu0 0
    %3084 = vmatpush1.bf16.msra.mxu0 0
    %3085 = vmatprep.subr.bf16.mxu0 0
    %3086 = vmatpush1.bf16.msra.mxu0 0
    %3087 = vmatprep.subr.bf16.mxu0 0
    %3088 = vmatpush1.bf16.msra.mxu0 0
    %3089 = vmatprep.subr.bf16.mxu0 0
    %3090 = vmatpush1.bf16.msra.mxu0 0
    %3091 = vmatprep.subr.bf16.mxu0 0
    %3092 = vmatpush1.bf16.msra.mxu0 0
    %3093 = vmatprep.subr.bf16.mxu0 0
    %3094 = vmatpush1.bf16.msra.mxu0 0
    %3095 = vmatprep.subr.bf16.mxu0 0
    %3096 = vmatpush1.bf16.msra.mxu0 0
    %3097 = vmatprep.subr.bf16.mxu0 0
    %3098 = vmatpush1.bf16.msra.mxu0 0
    %3099 = vmatprep.subr.bf16.mxu0 0
    %3100 = vmatpush1.bf16.msra.mxu0 0
    %3101 = vmatprep.subr.bf16.mxu0 0
    %3102 = vmatpush1.bf16.msra.mxu0 0
    %3103 = vmatprep.mubr.bf16.mxu0 0
    %3104 = vmatmul.mubr.bf16.gmra.mrb[0].mxu0 %v3069
    %v3105 = vpop.f32.mrb[0].mxu0
    %v3106 = vadd.f32 %v3054, %v3105
    %v3107 = vpop.f32.mrb[0].mxu0
    %v3108 = vpop.f32.mrb[0].mxu0
    %v3109 = vadd.f32 %v3054, %v3108
    %v3110 = vpop.f32.mrb[0].mxu0
    %3111 = vdwg.mxu0
    %vm3112 = vcmp.gt.f32.partialorder %v3106, 0.0
    %vm3113 = vcmp.gt.f32.partialorder %v3109, 0.0
    %v3114 = vmul.f32 %v3106, 1.442695
    %v3115 = vpow.pop %v3114
    %v3116 = vmul.f32 %v3109, 1.442695
    %v3117 = vpow.pop %v3116
    %v3118 = vsub.f32 %v3115, 1.0
    %v3119 = vsub.f32 %v3117, 1.0
    %v3120 = vmul.f32 %v3118, 0.1
    %v3121 = vmul.f32 %v3119, 0.1
    %v3122 = vsel %vm3112, %v3106, %v3120
    %v3123 = vsel %vm3113, %v3109, %v3121
    %v3124 = vpack.c.bf16 %v3123, %v3122
    %3125 = vmatprep.subr.bf16.mxu0 0
    %3126 = vmatpush1.bf16.msra.mxu0 %v3124
    %3127 = vmatprep.subr.bf16.mxu0 0
    %3128 = vmatpush1.bf16.msra.mxu0 0
    %3129 = vmatprep.subr.bf16.mxu0 0
    %3130 = vmatpush1.bf16.msra.mxu0 0
    %3131 = vmatprep.subr.bf16.mxu0 0
    %3132 = vmatpush1.bf16.msra.mxu0 0
    %3133 = vmatprep.subr.bf16.mxu0 0
    %3134 = vmatpush1.bf16.msra.mxu0 0
    %3135 = vmatprep.subr.bf16.mxu0 0
    %3136 = vmatpush1.bf16.msra.mxu0 0
    %3137 = vmatprep.subr.bf16.mxu0 0
    %3138 = vmatpush1.bf16.msra.mxu0 0
    %3139 = vmatprep.subr.bf16.mxu0 0
    %3140 = vmatpush1.bf16.msra.mxu0 0
    %3141 = vmatprep.subr.bf16.mxu0 0
    %3142 = vmatpush1.bf16.msra.mxu0 0
    %3143 = vmatprep.subr.bf16.mxu0 0
    %3144 = vmatpush1.bf16.msra.mxu0 0
    %3145 = vmatprep.subr.bf16.mxu0 0
    %3146 = vmatpush1.bf16.msra.mxu0 0
    %3147 = vmatprep.subr.bf16.mxu0 0
    %3148 = vmatpush1.bf16.msra.mxu0 0
    %3149 = vmatprep.subr.bf16.mxu0 0
    %3150 = vmatpush1.bf16.msra.mxu0 0
    %3151 = vmatprep.subr.bf16.mxu0 0
    %3152 = vmatpush1.bf16.msra.mxu0 0
    %3153 = vmatprep.subr.bf16.mxu0 0
    %3154 = vmatpush1.bf16.msra.mxu0 0
    %3155 = vmatprep.subr.bf16.mxu0 0
    %3156 = vmatpush1.bf16.msra.mxu0 0
    %3157 = vmatprep.mubr.bf16.mxu0 0
    %3158 = vmatmul.mubr.bf16.gmra.mrb[0].mxu0 %v1325
    %v3159 = vpop.f32.mrb[0].mxu0
    %v3160 = vadd.f32 0.0, %v3159
    %v3161 = vpop.f32.mrb[0].mxu0
    %v3162 = vpop.f32.mrb[0].mxu0
    %v3163 = vpop.f32.mrb[0].mxu0
    %3164 = vdwg.mxu0
    %v3165 = vmul.f32 %v3160, %v1370
    loop: start=0, step=1, limit=2
    $region176: #{egnn_forward.1} parent=1 // loop_pre_header
      _
    $region177: #{egnn_forward.1} parent=1 // loop_header
      %s3167 = sphi 0, %s3171
      %p3168 = scmp.ge.s32.totalorder %s3167, 2
      %v3172 = vphi 0.0, %v3200
    $region178: #{egnn_forward.1} parent=1 // loop_header_branch
      %3170 = sbr.rel (%p3168) target = $region182
    $region179: #{egnn_forward.1} parent=1 // loop_body
      %v3173 = vstv %s3167
      %vm3174 = vcmp.eq.s32.totalorder %v180, %v3173
      %vm3175 = vcmp.eq.s32.totalorder %v181, %v3173
      %v3176 = vsel %vm3174, 1, 0
      %v3177 = vsel %vm3175, 1, 0
      %3178 = vset.pattern.permute.xlu0 0
      %3179 = vperm.xlu0 %3178, %v3176
      %v3180 = vpop.permute.xlu0 %3179
      %3181 = vset.pattern.permute.xlu0 0
      %3182 = vperm.xlu0 %3181, %v3177
      %v3183 = vpop.permute.xlu0 %3182
      %vm3184 = vcmp.eq.s32.totalorder %v3180, 1
      %vm3185 = vcmp.eq.s32.totalorder %v3183, 1
      %v3186 = vsel %vm3184, %v3122, -3e+38
      %v3187 = vsel %vm3185, %v3123, -3e+38
      %v3188 = vsel %vm270, %v3186, -inf
      %v3189 = vsel %vm270, %v3187, -inf
      %v3190 = vmax.f32 %v3188, %v3189
      %v3191 = vrot.slane %v3190, 4
      %v3192 = vmax.f32 %v3190, %v3191
      %v3193 = vrot.slane %v3192, 2
      %v3194 = vmax.f32 %v3192, %v3193
      %v3195 = vrot.slane %v3194, 1
      %v3196 = vmax.f32 %v3194, %v3195
      %vm3197 = vcmp.eq.s32.totalorder %v185, %v3173
      %v3198 = vsel %vm3197, 1.0, 0.0
      %v3199 = vmul.f32 %v3198, %v3196
      %v3200 = vadd.f32 %v3172, %v3199
    $region180: #{egnn_forward.1} parent=1 // loop_footer
      %s3171 = sadd.s32 1, %s3167
    $region181: #{egnn_forward.1} parent=1 // loop_footer_branch
      %3166 = sbr.rel target = $region177
    $region182: #{egnn_forward.1} parent=1 // loop_exit
      _
    %v3201 = vpack.c.bf16 %v3165, %v3165
    %vm3202 = vcmask 253952
    %3203 = vst.msk [vmem:[#allocation6] sm:$0x1] %vm3202, %v3201
    %v3204 = vpack.c.bf16 %v3172, %v3172
    %v3207 = vunpack.c.l.s4 1966171168
    %v3208 = vunpack.c.0.s8 %v3207
    %v3209 = vlaneseq
    %v3210 = vshrl.u32 %v3209, 7
    %v3211 = vsub.s32 %v3208, %v3210
    %v3212 = vrot.slane %v3204, %v3211
    %v3214 = vunpack.c.l.s4 1966171168
    %v3215 = vunpack.c.0.s8 %v3214
    %v3216 = vlaneseq
    %v3217 = vshrl.u32 %v3216, 7
    %v3218 = vsub.s32 %v3215, %v3217
    %v3219 = vrot.slane %v3212, %v3218
    %3220 = vrot.lane.b32.xlu0 %v3219, 32
    %v3221 = vpop.permute.xlu0 %3220
    %vm3223 = vcmask 516352
    %3224 = vst.msk [vmem:[#allocation6] sm:$0x1] %vm3223, %v3221
    %v3225 = vld [vmem:[%s5] sm:$0x3]
    %v3226 = vpack.c.bf16 %v3225, %v3225
    %v3229 = vunpack.c.l.s4 1966171168
    %v3230 = vunpack.c.0.s8 %v3229
    %v3231 = vlaneseq
    %v3232 = vshrl.u32 %v3231, 7
    %v3233 = vsub.s32 %v3230, %v3232
    %v3234 = vrot.slane %v3226, %v3233
    %v3236 = vunpack.c.l.s4 1966171168
    %v3237 = vunpack.c.0.s8 %v3236
    %v3238 = vlaneseq
    %v3239 = vshrl.u32 %v3238, 7
    %v3240 = vsub.s32 %v3237, %v3239
    %v3241 = vrot.slane %v3234, %v3240
    %3242 = vrot.lane.b32.xlu0 %v3241, 64
    %v3243 = vpop.permute.xlu0 %3242
    %vm3245 = vcmask 549376
    %3246 = vst.msk [vmem:[#allocation6] sm:$0x1] %vm3245, %v3243
    %v3247 = vld [vmem:[#allocation6] sm:$0x1]
    %v3248 = vld [vmem:[%s65] sm:$0xf]
    %v3249 = vld [vmem:[%s65 + $0x4] sm:$0xf]
    %v3250 = vld [vmem:[%s65 + $0x8] sm:$0xf]
    %v3251 = vld [vmem:[%s65 + $0xc] sm:$0xf]
    %v3252 = vld [vmem:[%s65 + $0x10] sm:$0xf]
    %v3253 = vld [vmem:[%s65 + $0x14] sm:$0xf]
    %v3254 = vld [vmem:[%s65 + $0x18] sm:$0xf]
    %v3255 = vld [vmem:[%s65 + $0x1c] sm:$0xf]
    %v3256 = vld [vmem:[%s65 + $0x20] sm:$0xf]
    %v3257 = vld [vmem:[%s67] sm:$0x1]
    %v3259 = vlaneseq
    %v3260 = vshrl.u32 %v3259, 7
    %v3261 = vsub.s32 0, %v3260
    %v3262 = vrot.slane %v3257, %v3261
    %v3273 = vunpack.c.l.b16 %v3248
    %v3274 = vunpack.c.l.b16 %v3249
    %v3275 = vunpack.c.l.b16 %v3250
    %v3276 = vunpack.c.l.b16 %v3251
    %v3277 = vunpack.c.l.b16 %v3252
    %v3278 = vunpack.c.l.b16 %v3253
    %v3279 = vunpack.c.l.b16 %v3254
    %v3280 = vunpack.c.l.b16 %v3255
    %v3281 = vunpack.c.l.b16 %v3256
    %v3282 = vpack.c.b16 %v3274, %v3273
    %v3283 = vpack.c.b16 %v3276, %v3275
    %v3284 = vpack.c.b16 %v3278, %v3277
    %v3285 = vpack.c.b16 %v3280, %v3279
    %v3286 = vpack.c.b16 %v3281, %v3281
    %v3292 = vsel %vm263, %v3247, 0
    %v3295 = vsel %vm510, %v3286, 0
    %3297 = vmatprep.subr.bf16.mxu0 0
    %3298 = vmatpush1.bf16.msra.mxu0 %v3282
    %3299 = vmatprep.subr.bf16.mxu0 0
    %3300 = vmatpush1.bf16.msra.mxu0 %v3283
    %3301 = vmatprep.subr.bf16.mxu0 0
    %3302 = vmatpush1.bf16.msra.mxu0 %v3284
    %3303 = vmatprep.subr.bf16.mxu0 0
    %3304 = vmatpush1.bf16.msra.mxu0 %v3285
    %3305 = vmatprep.subr.bf16.mxu0 0
    %3306 = vmatpush1.bf16.msra.mxu0 %v3295
    %3307 = vmatprep.subr.bf16.mxu0 0
    %3308 = vmatpush1.bf16.msra.mxu0 0
    %3309 = vmatprep.subr.bf16.mxu0 0
    %3310 = vmatpush1.bf16.msra.mxu0 0
    %3311 = vmatprep.subr.bf16.mxu0 0
    %3312 = vmatpush1.bf16.msra.mxu0 0
    %3313 = vmatprep.subr.bf16.mxu0 0
    %3314 = vmatpush1.bf16.msra.mxu0 0
    %3315 = vmatprep.subr.bf16.mxu0 0
    %3316 = vmatpush1.bf16.msra.mxu0 0
    %3317 = vmatprep.subr.bf16.mxu0 0
    %3318 = vmatpush1.bf16.msra.mxu0 0
    %3319 = vmatprep.subr.bf16.mxu0 0
    %3320 = vmatpush1.bf16.msra.mxu0 0
    %3321 = vmatprep.subr.bf16.mxu0 0
    %3322 = vmatpush1.bf16.msra.mxu0 0
    %3323 = vmatprep.subr.bf16.mxu0 0
    %3324 = vmatpush1.bf16.msra.mxu0 0
    %3325 = vmatprep.subr.bf16.mxu0 0
    %3326 = vmatpush1.bf16.msra.mxu0 0
    %3327 = vmatprep.subr.bf16.mxu0 0
    %3328 = vmatpush1.bf16.msra.mxu0 0
    %3329 = vmatprep.mubr.bf16.mxu0 0
    %3330 = vmatmul.mubr.bf16.gmra.mrb[0].mxu0 %v3292
    %v3331 = vpop.f32.mrb[0].mxu0
    %v3332 = vadd.f32 %v3262, %v3331
    %v3333 = vpop.f32.mrb[0].mxu0
    %v3334 = vpop.f32.mrb[0].mxu0
    %v3335 = vpop.f32.mrb[0].mxu0
    %3336 = vdwg.mxu0
    %vm3337 = vcmp.gt.f32.partialorder %v3332, 0.0
    %v3338 = vmul.f32 %v3332, 1.442695
    %v3339 = vpow.pop %v3338
    %v3340 = vsub.f32 %v3339, 1.0
    %v3341 = vmul.f32 %v3340, 0.1
    %v3342 = vsel %vm3337, %v3332, %v3341
    %v3343 = vld [vmem:[%s69] sm:$0x1]
    %v3344 = vld [vmem:[%s71] sm:$0x1]
    %vm3345 = vcmask 254976
    %v3346 = vsel %vm3345, %v3342, 0.0
    %v3347 = vrot.slane %v3346, 4
    %v3348 = vadd.f32 %v3346, %v3347
    %v3349 = vrot.slane %v3348, 2
    %v3350 = vadd.f32 %v3348, %v3349
    %v3351 = vrot.slane %v3350, 1
    %v3352 = vadd.f32 %v3350, %v3351
    %v3353 = vmul.f32 %v3352, 0.5
    %v3354 = vsub.f32 %v3342, %v3353
    %v3355 = vmul.f32 %v3354, %v3354
    %v3356 = vsel %vm3345, %v3355, 0.0
    %v3357 = vrot.slane %v3356, 4
    %v3358 = vadd.f32 %v3356, %v3357
    %v3359 = vrot.slane %v3358, 2
    %v3360 = vadd.f32 %v3358, %v3359
    %v3361 = vrot.slane %v3360, 1
    %v3362 = vadd.f32 %v3360, %v3361
    %v3363 = vmul.f32 %v3362, 0.5
    %v3364 = vadd.f32 %v3363, 1e-05
    %v3365 = vrsqrt.pop %v3364
    %v3366 = vmul.f32 %v3354, %v3365
    %v3368 = vlaneseq
    %v3369 = vshrl.u32 %v3368, 7
    %v3370 = vsub.s32 0, %v3369
    %v3371 = vrot.slane %v3343, %v3370
    %v3373 = vmul.f32 %v3366, %v3371
    %v3375 = vlaneseq
    %v3376 = vshrl.u32 %v3375, 7
    %v3377 = vsub.s32 0, %v3376
    %v3378 = vrot.slane %v3344, %v3377
    %v3380 = vadd.f32 %v3373, %v3378
    %v3381 = vpack.c.bf16 %v3380, %v3380
    %v3382 = vld [vmem:[%s73] sm:$0xf]
    %v3383 = vld [vmem:[%s73 + $0x4] sm:$0xf]
    %v3384 = vld [vmem:[%s73 + $0x8] sm:$0xf]
    %v3385 = vld [vmem:[%s73 + $0xc] sm:$0xf]
    %v3386 = vld [vmem:[%s75] sm:$0x1]
    %v3388 = vlaneseq
    %v3389 = vshrl.u32 %v3388, 7
    %v3390 = vsub.s32 0, %v3389
    %v3391 = vrot.slane %v3386, %v3390
    %v3397 = vunpack.c.l.b16 %v3382
    %v3398 = vunpack.c.l.b16 %v3383
    %v3399 = vunpack.c.l.b16 %v3384
    %v3400 = vunpack.c.l.b16 %v3385
    %v3401 = vpack.c.b16 %v3398, %v3397
    %v3402 = vpack.c.b16 %v3400, %v3399
    %v3406 = vsel %vm270, %v3381, 0
    %3408 = vmatprep.subr.bf16.mxu0 0
    %3409 = vmatpush1.bf16.msra.mxu0 %v3401
    %3410 = vmatprep.subr.bf16.mxu0 0
    %3411 = vmatpush1.bf16.msra.mxu0 %v3402
    %3412 = vmatprep.subr.bf16.mxu0 0
    %3413 = vmatpush1.bf16.msra.mxu0 0
    %3414 = vmatprep.subr.bf16.mxu0 0
    %3415 = vmatpush1.bf16.msra.mxu0 0
    %3416 = vmatprep.subr.bf16.mxu0 0
    %3417 = vmatpush1.bf16.msra.mxu0 0
    %3418 = vmatprep.subr.bf16.mxu0 0
    %3419 = vmatpush1.bf16.msra.mxu0 0
    %3420 = vmatprep.subr.bf16.mxu0 0
    %3421 = vmatpush1.bf16.msra.mxu0 0
    %3422 = vmatprep.subr.bf16.mxu0 0
    %3423 = vmatpush1.bf16.msra.mxu0 0
    %3424 = vmatprep.subr.bf16.mxu0 0
    %3425 = vmatpush1.bf16.msra.mxu0 0
    %3426 = vmatprep.subr.bf16.mxu0 0
    %3427 = vmatpush1.bf16.msra.mxu0 0
    %3428 = vmatprep.subr.bf16.mxu0 0
    %3429 = vmatpush1.bf16.msra.mxu0 0
    %3430 = vmatprep.subr.bf16.mxu0 0
    %3431 = vmatpush1.bf16.msra.mxu0 0
    %3432 = vmatprep.subr.bf16.mxu0 0
    %3433 = vmatpush1.bf16.msra.mxu0 0
    %3434 = vmatprep.subr.bf16.mxu0 0
    %3435 = vmatpush1.bf16.msra.mxu0 0
    %3436 = vmatprep.subr.bf16.mxu0 0
    %3437 = vmatpush1.bf16.msra.mxu0 0
    %3438 = vmatprep.subr.bf16.mxu0 0
    %3439 = vmatpush1.bf16.msra.mxu0 0
    %3440 = vmatprep.mubr.bf16.mxu0 0
    %3441 = vmatmul.mubr.bf16.gmra.mrb[0].mxu0 %v3406
    %v3442 = vpop.f32.mrb[0].mxu0
    %v3443 = vadd.f32 %v3391, %v3442
    %v3444 = vpop.f32.mrb[0].mxu0
    %v3445 = vpop.f32.mrb[0].mxu0
    %v3446 = vpop.f32.mrb[0].mxu0
    %3447 = vdwg.mxu0
    %vm3448 = vcmask 1041408
    %v3449 = vsel %vm3448, %v3443, -inf
    %3450 = vmax.xlane.f32.xlu0 %v3449
    %v3451 = vpop.xlane.xlu0 %3450
    %v3452 = vsub.f32 %v3443, %v3451
    %v3453 = vmax.f32 %v3452, -80.0
    %v3454 = vmul.f32 %v3453, 1.442695
    %v3455 = vpow.pop %v3454
    %v3456 = vsel %vm3448, %v3455, 0.0
    %3457 = vadd.xlane.f32.xlu0 %v3456
    %v3458 = vpop.xlane.xlu0 %3457
    %v3459 = vrcp.pop %v3458
    %v3460 = vmul.f32 %v3455, %v3459
    %3461 = vst [vmem:[#allocation10] sm:$0x3] %v3460
    // Predicated region
    $region183: #{egnn_forward.1} parent=1 // pred_check
      _
    $region184: #{egnn_forward.1} parent=1 // pred_check_branch
      %3463 = sbr.rel (0) target = $region186
    $region185: #{egnn_forward.1} parent=1 // pred_region
      %s3465 = ssub.s32 32, 32
      %3466 = vsyncadd [#allocation8], %s3465
      %s3468 = sshll.u32 [#allocation10], 4
      %s3469 = int_to_ptr.vmem [resolvable:$true] %s3468
      %3471 = dma.vmem_to_hbm [thread:$0]  %s3469, 32, %s79, [#allocation8]
    $region186: #{egnn_forward.1} parent=1 // pred_fallthru
      _
    // Predicated region
    $region187: #{egnn_forward.1} parent=1 // pred_check
      _
    $region188: #{egnn_forward.1} parent=1 // pred_check_branch
      %3473 = sbr.rel (0) target = $region190
    $region189: #{egnn_forward.1} parent=1 // pred_region
      %3474 = dma.done [#allocation8], 32
    $region190: #{egnn_forward.1} parent=1 // pred_fallthru
      _
    %3475 = vsyncpa [#allocation8], 1
    %3476 = vsyncpa [#allocation9], 1

</llo_original>
